<compile_context>
chip_gen: v5e
topology: v5e:2x2
jax: 0.10.0
libtpu: 0.0.40
codegen_flags: <defaults>
</compile_context>

<pallas_src>
import functools

import jax
import jax.numpy as jnp
from jax.experimental import pallas as pl
from jax.experimental.pallas import tpu as pltpu  # noqa: F401  (TPU backend context)


# ----------------------------------------------------------------------------
# One-time prep: fold a KHxKW stride-s pad-p conv into a dense matrix M so that
#     x_flat @ M == conv(x) flattened per-sample as (h_out, w_out, out_ch).
# Row layout of x_flat is torch-NCHW ("chw") or (h, w, c)-minor ("hwc").
# ----------------------------------------------------------------------------
def _conv_as_matmul(weight, H, W, stride, pad, in_layout):
    OC, IC, KH, KW = weight.shape
    OH = (H + 2 * pad - KH) // stride + 1
    OW = (W + 2 * pad - KW) // stride + 1
    c = jnp.arange(IC).reshape(IC, 1, 1, 1, 1, 1)
    h = jnp.arange(H).reshape(1, H, 1, 1, 1, 1)
    x_w = jnp.arange(W).reshape(1, 1, W, 1, 1, 1)
    i = jnp.arange(OH).reshape(1, 1, 1, OH, 1, 1)
    j = jnp.arange(OW).reshape(1, 1, 1, 1, OW, 1)
    o = jnp.arange(OC).reshape(1, 1, 1, 1, 1, OC)
    kh = h - stride * i + pad
    kw = x_w - stride * j + pad
    valid = (kh >= 0) & (kh < KH) & (kw >= 0) & (kw < KW)
    wt = jnp.transpose(weight, (1, 2, 3, 0))                    # (IC, KH, KW, OC)
    m6 = wt[c, jnp.clip(kh, 0, KH - 1), jnp.clip(kw, 0, KW - 1), o]
    m6 = jnp.where(valid, m6, 0.0)                              # (IC,H,W,OH,OW,OC)
    if in_layout == "hwc":
        m6 = jnp.transpose(m6, (1, 2, 0, 3, 4, 5))              # rows = (h, w, c)
    return m6.reshape(-1, OH * OW * OC), OH, OW


# ----------------------------------------------------------------------------
# im2col helper (used only by the pure-JAX reference).
# ----------------------------------------------------------------------------
def _im2col(x, kh, kw, stride, pad):
    B, C, H, W = x.shape
    xp = jnp.pad(x, ((0, 0), (0, 0), (pad, pad), (pad, pad)))
    OH = (H + 2 * pad - kh) // stride + 1
    OW = (W + 2 * pad - kw) // stride + 1
    cols = []
    for i in range(kh):
        for j in range(kw):
            cols.append(xp[:, :, i:i + stride * OH:stride, j:j + stride * OW:stride])
    cols = jnp.stack(cols, axis=0).reshape(kh, kw, B, C, OH, OW)
    cols = cols.transpose(2, 4, 5, 3, 0, 1)            # (B, OH, OW, C, kh, kw)
    return cols.reshape(B * OH * OW, C * kh * kw), OH, OW


# ----------------------------------------------------------------------------
# Single fused forward kernel: 5 lane-dense matmuls, no scratch, no loops.
# ----------------------------------------------------------------------------
def _fused_kernel(x_ref, w1_ref, b1_ref, w2_ref, b2_ref, wfc_ref, bfc_ref,
                  wh1_ref, bh1_ref, wh2_ref, bh2_ref, out_ref,
                  *, mode, sig_col):
    f32, bf16 = jnp.float32, jnp.bfloat16

    x = x_ref[...].astype(bf16)                                        # (B, C*H*W)

    # conv1 (folded to one matmul), bias + ReLU in f32
    a1 = jnp.dot(x, w1_ref[...], preferred_element_type=f32)           # (B, 1024)
    a1 = jnp.maximum(a1 + b1_ref[...], 0.0).astype(bf16)

    # conv2 (folded to one matmul), bias + ReLU
    a2 = jnp.dot(a1, w2_ref[...], preferred_element_type=f32)          # (B, 512)
    a2 = jnp.maximum(a2 + b2_ref[...], 0.0).astype(bf16)

    # backbone FC
    feats = jnp.dot(a2, wfc_ref[...], preferred_element_type=f32) + bfc_ref[...]
    feats = jnp.maximum(feats, 0.0).astype(bf16)                       # (B, 256)

    # heads: concatenated stage-1 weights, zero-padded lane-dense stage-2
    h = jnp.dot(feats, wh1_ref[...], preferred_element_type=f32) + bh1_ref[...]
    h = jnp.maximum(h, 0.0).astype(bf16)
    y = jnp.dot(h, wh2_ref[...], preferred_element_type=f32) + bh2_ref[...]
    if mode == "eval":                       # sigmoid only on the stop column
        col = jax.lax.broadcasted_iota(jnp.int32, y.shape, 1)
        y = jnp.where(col == sig_col, jax.nn.sigmoid(y), y)
    elif mode == "stop":                     # whole (padded) row -> sigmoid
        y = jax.nn.sigmoid(y)
    out_ref[...] = y.astype(out_ref.dtype)   # single unmasked (B, 128) store


def _fused_call(xf, prep, cfg, mode):
    wh1, bh1, wh2, bh2 = prep["heads"][mode]
    args = (xf, prep["w1"], prep["b1"], prep["w2"], prep["b2"],
            prep["wfc"], prep["bfc"], wh1, bh1, wh2, bh2)
    batch = xf.shape[0]
    kernel = functools.partial(_fused_kernel, mode=mode, sig_col=cfg["n_out"])
    return pl.pallas_call(
        kernel,
        out_shape=jax.ShapeDtypeStruct((batch, 128), jnp.float32),
        in_specs=[pl.BlockSpec(a.shape, lambda: (0, 0)) for a in args],
        out_specs=pl.BlockSpec((batch, 128), lambda: (0, 0)),
    )(*args)


# ----------------------------------------------------------------------------
# Module forward (branching on training / train_stop is Python-static).
# ----------------------------------------------------------------------------
def stop_aux_baseline_cnn(x, prep, cfg, training=False, train_stop=None):
    B = x.shape[0]
    assert tuple(x.shape[1:]) == tuple(cfg["in_shape"]), "prep built for another input shape"
    xf = x.reshape(B, -1)                      # torch NCHW flatten (free view)

    if training:
        if train_stop is False:
            y = _fused_call(xf, prep, cfg, "reach")
            return y[:, :cfg["n_out"] + cfg["n_aux"]]
        if train_stop is True:
            y = _fused_call(xf, prep, cfg, "stop")
            return y[:, :1]
        return None   # matches the PyTorch module when training and train_stop is None
    y = _fused_call(xf, prep, cfg, "eval")
    return y[:, :cfg["n_out"]], y[:, cfg["n_out"]:cfg["n_out"] + 1]


def make_forward(cfg, training=False, train_stop=None):
    """cfg / training / train_stop are Python-static (closure-captured)."""
    def fwd(x, prep):
        return stop_aux_baseline_cnn(x, prep, cfg, training=training,
                                     train_stop=train_stop)
    return jax.jit(fwd)


# ----------------------------------------------------------------------------
# One-time parameter preparation (conv folding, permutations, concatenations,
# zero-padding, casts).
# ----------------------------------------------------------------------------
def prepare_params(p, input_hw=(16, 16)):
    bf16, f32 = jnp.bfloat16, jnp.float32
    H, W = input_hw
    in_ch = int(p["conv1_w"].shape[1])
    oc2 = int(p["conv2_w"].shape[0])
    n_out = int(p["out_w"].shape[0])
    n_aux = int(p["aux_w"].shape[0])
    n_reach = int(p["reach_w"].shape[0])
    n_stop = int(p["stop1_w"].shape[0])
    assert n_out + 1 <= 128 and n_out + n_aux <= 128

    # conv1 folded: rows follow the torch NCHW flatten of the raw input.
    w1, oh1, ow1 = _conv_as_matmul(p["conv1_w"], H, W, 2, 1, "chw")
    b1 = jnp.tile(p["conv1_b"], oh1 * ow1).reshape(1, -1)              # (1, 1024)
    # conv2 folded: rows follow conv1's (h, w, c)-minor column layout.
    w2, oh2, ow2 = _conv_as_matmul(p["conv2_w"], oh1, ow1, 2, 1, "hwc")
    b2 = jnp.tile(p["conv2_b"], oh2 * ow2).reshape(1, -1)              # (1, 512)

    n_sp = oh2 * ow2
    assert p["fc_w"].shape[1] == n_sp * oc2
    # FC weight with the (position-major, channel-minor) -> torch NCHW flatten
    # permutation folded into the rows.
    j = jnp.arange(p["fc_w"].shape[1])
    perm = (j % oc2) * n_sp + (j // oc2)
    wfc = p["fc_w"].T[perm]                                            # (512, 256)
    bfc = p["fc_b"].reshape(1, -1)

    heads = {}
    # eval: [reach_fc | stop1] then [out -> cols 0:n_out, stop2 -> col n_out]
    wh1 = jnp.concatenate([p["reach_w"].T, p["stop1_w"].T], axis=1).astype(bf16)
    bh1 = jnp.concatenate([p["reach_b"], p["stop1_b"]]).reshape(1, -1).astype(f32)
    wh2 = jnp.zeros((n_reach + n_stop, 128), f32)
    wh2 = wh2.at[:n_reach, :n_out].set(p["out_w"].T)
    wh2 = wh2.at[n_reach:, n_out:n_out + 1].set(p["stop2_w"].T)
    bh2 = jnp.zeros((1, 128), f32)
    bh2 = bh2.at[0, :n_out].set(p["out_b"]).at[0, n_out].set(p["stop2_b"][0])
    heads["eval"] = (wh1, bh1, wh2.astype(bf16), bh2)

    # training, train_stop=False: reach_fc then cat(out, aux)
    wr2 = jnp.zeros((n_reach, 128), f32)
    wr2 = wr2.at[:, :n_out].set(p["out_w"].T)
    wr2 = wr2.at[:, n_out:n_out + n_aux].set(p["aux_w"].T)
    br2 = jnp.zeros((1, 128), f32)
    br2 = br2.at[0, :n_out].set(p["out_b"]).at[0, n_out:n_out + n_aux].set(p["aux_b"])
    heads["reach"] = (p["reach_w"].T.astype(bf16),
                      p["reach_b"].reshape(1, -1).astype(f32),
                      wr2.astype(bf16), br2)

    # training, train_stop=True: stop MLP only
    ws2 = jnp.zeros((n_stop, 128), f32).at[:, 0:1].set(p["stop2_w"].T)
    bs2 = jnp.zeros((1, 128), f32).at[0, 0].set(p["stop2_b"][0])
    heads["stop"] = (p["stop1_w"].T.astype(bf16),
                     p["stop1_b"].reshape(1, -1).astype(f32),
                     ws2.astype(bf16), bs2)

    prep = {"w1": w1.astype(bf16), "b1": b1.astype(f32),
            "w2": w2.astype(bf16), "b2": b2.astype(f32),
            "wfc": wfc.astype(bf16), "bfc": bfc.astype(f32),
            "heads": heads}
    cfg = {"n_out": n_out, "n_aux": n_aux, "in_shape": (in_ch, H, W)}
    return prep, cfg


# ----------------------------------------------------------------------------
# Deterministic parameter init + pure-JAX reference.
# ----------------------------------------------------------------------------
def init_params(key, num_outputs=6, num_aux_outputs=9, in_ch=4):
    ks = jax.random.split(key, 18)
    n = lambda k, shape, s=0.05: (jax.random.normal(k, shape, jnp.float32) * s)
    return {
        "conv1_w": n(ks[0], (16, in_ch, 3, 3)), "conv1_b": n(ks[1], (16,)),
        "conv2_w": n(ks[2], (32, 16, 3, 3)),    "conv2_b": n(ks[3], (32,)),
        "fc_w": n(ks[4], (256, 512)),           "fc_b": n(ks[5], (256,)),
        "reach_w": n(ks[6], (128, 256)),        "reach_b": n(ks[7], (128,)),
        "aux_w": n(ks[8], (num_aux_outputs, 128)), "aux_b": n(ks[9], (num_aux_outputs,)),
        "out_w": n(ks[10], (num_outputs, 128)), "out_b": n(ks[11], (num_outputs,)),
        "stop1_w": n(ks[12], (64, 256)),        "stop1_b": n(ks[13], (64,)),
        "stop2_w": n(ks[14], (1, 64)),          "stop2_b": n(ks[15], (1,)),
    }


def _reference_forward(x, p, training=False, train_stop=None,
                       mm_dtype=jnp.float32):
    """Reference with torch semantics; mm_dtype controls matmul operand dtype
    (bf16 reproduces the kernel's rounding points, f32 gives exact semantics)."""
    f32 = jnp.float32

    def lin(a, w, b):
        return jnp.dot(a.astype(mm_dtype), w.T.astype(mm_dtype),
                       preferred_element_type=f32) + b

    def conv_relu(a, w, b):
        patches, OH, OW = _im2col(a, 3, 3, 2, 1)
        y = jnp.dot(patches.astype(mm_dtype),
                    w.reshape(w.shape[0], -1).T.astype(mm_dtype),
                    preferred_element_type=f32) + b
        y = jnp.maximum(y, 0.0)
        return y.reshape(a.shape[0], OH, OW, w.shape[0]).transpose(0, 3, 1, 2)

    f = conv_relu(x, p["conv1_w"], p["conv1_b"])
    f = conv_relu(f, p["conv2_w"], p["conv2_b"])
    feats = jnp.maximum(lin(f.reshape(x.shape[0], -1), p["fc_w"], p["fc_b"]), 0.0)
    if training and train_stop is False:
        h = jnp.maximum(lin(feats, p["reach_w"], p["reach_b"]), 0.0)
        return jnp.concatenate(
            [lin(h, p["out_w"], p["out_b"]), lin(h, p["aux_w"], p["aux_b"])], axis=1)
    if training and train_stop is True:
        s = jnp.maximum(lin(feats, p["stop1_w"], p["stop1_b"]), 0.0)
        return jax.nn.sigmoid(lin(s, p["stop2_w"], p["stop2_b"]))
    h = jnp.maximum(lin(feats, p["reach_w"], p["reach_b"]), 0.0)
    reach = lin(h, p["out_w"], p["out_b"])
    s = jnp.maximum(lin(feats, p["stop1_w"], p["stop1_b"]), 0.0)
    stop = jax.nn.sigmoid(lin(s, p["stop2_w"], p["stop2_b"]))
    return reach, stop


if __name__ == "__main__":
    key = jax.random.PRNGKey(0)
    kx, kp = jax.random.split(key)
    B, C, H, W = 2, 4, 16, 16
    x = jax.random.normal(kx, (B, C, H, W), jnp.float32)
    params = init_params(kp, in_ch=C)
    prep, cfg = prepare_params(params, input_hw=(H, W))

    fwd_eval = make_forward(cfg, training=False)
    fwd_reach = make_forward(cfg, training=True, train_stop=False)
    fwd_stop = make_forward(cfg, training=True, train_stop=True)

    reach_x, stop_signal = jax.block_until_ready(fwd_eval(x, prep))
    cat_out = jax.block_until_ready(fwd_reach(x, prep))
    stop_only = jax.block_until_ready(fwd_stop(x, prep))

    assert reach_x.shape == (B, 6) and stop_signal.shape == (B, 1)
    assert cat_out.shape == (B, 6 + 9) and stop_only.shape == (B, 1)

    # structure check against a reference reproducing the kernel's bf16 rounding
    ref_r, ref_s = _reference_forward(x, params, mm_dtype=jnp.bfloat16)
    assert jnp.allclose(reach_x, ref_r, atol=2e-3, rtol=2e-2)
    assert jnp.allclose(stop_signal, ref_s, atol=2e-3, rtol=2e-2)
    ref_cat = _reference_forward(x, params, training=True, train_stop=False,
                                 mm_dtype=jnp.bfloat16)
    ref_stp = _reference_forward(x, params, training=True, train_stop=True,
                                 mm_dtype=jnp.bfloat16)
    assert jnp.allclose(cat_out, ref_cat, atol=2e-3, rtol=2e-2)
    assert jnp.allclose(stop_only, ref_stp, atol=2e-3, rtol=2e-2)

    # full-f32 semantic check (bf16 operands introduce only small error)
    f32_r, f32_s = _reference_forward(x, params, mm_dtype=jnp.float32)
    assert jnp.allclose(reach_x, f32_r, atol=3e-2, rtol=3e-2)
    assert jnp.allclose(stop_signal, f32_s, atol=3e-2, rtol=3e-2)

    print("KERNEL_OK")
</pallas_src>

<mosaic_0001>
module attributes {stable_mosaic.version = 11 : i64} {
  func.func @_fused_kernel(%arg0: memref<2x1024xf32, #tpu.memory_space<vmem>>, %arg1: memref<1024x1024xbf16, #tpu.memory_space<vmem>>, %arg2: memref<1x1024xf32, #tpu.memory_space<vmem>>, %arg3: memref<1024x512xbf16, #tpu.memory_space<vmem>>, %arg4: memref<1x512xf32, #tpu.memory_space<vmem>>, %arg5: memref<512x256xbf16, #tpu.memory_space<vmem>>, %arg6: memref<1x256xf32, #tpu.memory_space<vmem>>, %arg7: memref<256x192xbf16, #tpu.memory_space<vmem>>, %arg8: memref<1x192xf32, #tpu.memory_space<vmem>>, %arg9: memref<192x128xbf16, #tpu.memory_space<vmem>>, %arg10: memref<1x128xf32, #tpu.memory_space<vmem>>, %arg11: memref<2x128xf32, #tpu.memory_space<vmem>>) attributes {dimension_semantics = [], scalar_prefetch = 0 : i64, scratch_operands = 0 : i64, tpu.core_type = #tpu.core_type<tc>} {
    %c0 = arith.constant 0 : index
    %c0_0 = arith.constant 0 : index
    %0 = vector.load %arg0[%c0, %c0_0] : memref<2x1024xf32, #tpu.memory_space<vmem>>, vector<2x1024xf32>
    %1 = arith.truncf %0 : vector<2x1024xf32> to vector<2x1024xbf16>
    %c0_1 = arith.constant 0 : index
    %c0_2 = arith.constant 0 : index
    %2 = vector.load %arg1[%c0_1, %c0_2] : memref<1024x1024xbf16, #tpu.memory_space<vmem>>, vector<1024x1024xbf16>
    %cst = arith.constant dense<0.000000e+00> : vector<2x1024xf32>
    %3 = tpu.matmul %1, %2, %cst {dimension_numbers = #tpu.dot_dimension_numbers<[1], [0], [0], [1], [0, 0, 1, 1], [], []>} : vector<2x1024xbf16>, vector<1024x1024xbf16>, vector<2x1024xf32> -> vector<2x1024xf32>
    %c0_3 = arith.constant 0 : index
    %c0_4 = arith.constant 0 : index
    %4 = vector.load %arg2[%c0_3, %c0_4] : memref<1x1024xf32, #tpu.memory_space<vmem>>, vector<1x1024xf32>
    %5 = vector.broadcast %4 : vector<1x1024xf32> to vector<2x1024xf32>
    %6 = arith.addf %3, %5 : vector<2x1024xf32>
    %cst_5 = arith.constant 0.000000e+00 : f32
    %7 = vector.broadcast %cst_5 : f32 to vector<2x1024xf32>
    %8 = arith.maximumf %6, %7 : vector<2x1024xf32>
    %9 = arith.truncf %8 : vector<2x1024xf32> to vector<2x1024xbf16>
    %c0_6 = arith.constant 0 : index
    %c0_7 = arith.constant 0 : index
    %10 = vector.load %arg3[%c0_6, %c0_7] : memref<1024x512xbf16, #tpu.memory_space<vmem>>, vector<1024x512xbf16>
    %cst_8 = arith.constant dense<0.000000e+00> : vector<2x512xf32>
    %11 = tpu.matmul %9, %10, %cst_8 {dimension_numbers = #tpu.dot_dimension_numbers<[1], [0], [0], [1], [0, 0, 1, 1], [], []>} : vector<2x1024xbf16>, vector<1024x512xbf16>, vector<2x512xf32> -> vector<2x512xf32>
    %c0_9 = arith.constant 0 : index
    %c0_10 = arith.constant 0 : index
    %12 = vector.load %arg4[%c0_9, %c0_10] : memref<1x512xf32, #tpu.memory_space<vmem>>, vector<1x512xf32>
    %13 = vector.broadcast %12 : vector<1x512xf32> to vector<2x512xf32>
    %14 = arith.addf %11, %13 : vector<2x512xf32>
    %cst_11 = arith.constant 0.000000e+00 : f32
    %15 = vector.broadcast %cst_11 : f32 to vector<2x512xf32>
    %16 = arith.maximumf %14, %15 : vector<2x512xf32>
    %17 = arith.truncf %16 : vector<2x512xf32> to vector<2x512xbf16>
    %c0_12 = arith.constant 0 : index
    %c0_13 = arith.constant 0 : index
    %18 = vector.load %arg5[%c0_12, %c0_13] : memref<512x256xbf16, #tpu.memory_space<vmem>>, vector<512x256xbf16>
    %cst_14 = arith.constant dense<0.000000e+00> : vector<2x256xf32>
    %19 = tpu.matmul %17, %18, %cst_14 {dimension_numbers = #tpu.dot_dimension_numbers<[1], [0], [0], [1], [0, 0, 1, 1], [], []>} : vector<2x512xbf16>, vector<512x256xbf16>, vector<2x256xf32> -> vector<2x256xf32>
    %c0_15 = arith.constant 0 : index
    %c0_16 = arith.constant 0 : index
    %20 = vector.load %arg6[%c0_15, %c0_16] : memref<1x256xf32, #tpu.memory_space<vmem>>, vector<1x256xf32>
    %21 = vector.broadcast %20 : vector<1x256xf32> to vector<2x256xf32>
    %22 = arith.addf %19, %21 : vector<2x256xf32>
    %cst_17 = arith.constant 0.000000e+00 : f32
    %23 = vector.broadcast %cst_17 : f32 to vector<2x256xf32>
    %24 = arith.maximumf %22, %23 : vector<2x256xf32>
    %25 = arith.truncf %24 : vector<2x256xf32> to vector<2x256xbf16>
    %c0_18 = arith.constant 0 : index
    %c0_19 = arith.constant 0 : index
    %26 = vector.load %arg7[%c0_18, %c0_19] : memref<256x192xbf16, #tpu.memory_space<vmem>>, vector<256x192xbf16>
    %cst_20 = arith.constant dense<0.000000e+00> : vector<2x192xf32>
    %27 = tpu.matmul %25, %26, %cst_20 {dimension_numbers = #tpu.dot_dimension_numbers<[1], [0], [0], [1], [0, 0, 1, 1], [], []>} : vector<2x256xbf16>, vector<256x192xbf16>, vector<2x192xf32> -> vector<2x192xf32>
    %c0_21 = arith.constant 0 : index
    %c0_22 = arith.constant 0 : index
    %28 = vector.load %arg8[%c0_21, %c0_22] : memref<1x192xf32, #tpu.memory_space<vmem>>, vector<1x192xf32>
    %29 = vector.broadcast %28 : vector<1x192xf32> to vector<2x192xf32>
    %30 = arith.addf %27, %29 : vector<2x192xf32>
    %cst_23 = arith.constant 0.000000e+00 : f32
    %31 = vector.broadcast %cst_23 : f32 to vector<2x192xf32>
    %32 = arith.maximumf %30, %31 : vector<2x192xf32>
    %33 = arith.truncf %32 : vector<2x192xf32> to vector<2x192xbf16>
    %c0_24 = arith.constant 0 : index
    %c0_25 = arith.constant 0 : index
    %34 = vector.load %arg9[%c0_24, %c0_25] : memref<192x128xbf16, #tpu.memory_space<vmem>>, vector<192x128xbf16>
    %cst_26 = arith.constant dense<0.000000e+00> : vector<2x128xf32>
    %35 = tpu.matmul %33, %34, %cst_26 {dimension_numbers = #tpu.dot_dimension_numbers<[1], [0], [0], [1], [0, 0, 1, 1], [], []>} : vector<2x192xbf16>, vector<192x128xbf16>, vector<2x128xf32> -> vector<2x128xf32>
    %c0_27 = arith.constant 0 : index
    %c0_28 = arith.constant 0 : index
    %36 = vector.load %arg10[%c0_27, %c0_28] : memref<1x128xf32, #tpu.memory_space<vmem>>, vector<1x128xf32>
    %37 = vector.broadcast %36 : vector<1x128xf32> to vector<2x128xf32>
    %38 = arith.addf %35, %37 : vector<2x128xf32>
    %39 = tpu.iota {dimensions = array<i32: 1>} : vector<2x128xi32>
    %c6_i32 = arith.constant 6 : i32
    %40 = vector.broadcast %c6_i32 : i32 to vector<2x128xi32>
    %41 = arith.cmpi eq, %39, %40 : vector<2x128xi32>
    %42 = arith.negf %38 : vector<2x128xf32>
    %43 = math.exp %42 : vector<2x128xf32>
    %cst_29 = arith.constant 1.000000e+00 : f32
    %44 = vector.broadcast %cst_29 : f32 to vector<2x128xf32>
    %45 = arith.addf %44, %43 : vector<2x128xf32>
    %46 = arith.divf %44, %45 : vector<2x128xf32>
    %47 = arith.select %41, %46, %38 : vector<2x128xi1>, vector<2x128xf32>
    %c0_30 = arith.constant 0 : index
    %c0_31 = arith.constant 0 : index
    %48 = vector.load %arg11[%c0_30, %c0_31] : memref<2x128xf32, #tpu.memory_space<vmem>>, vector<2x128xf32>
    tpu.vector_store %arg11[%c0_30, %c0_31], %47 {strides = array<i32>} : memref<2x128xf32, #tpu.memory_space<vmem>>, vector<2x128xf32>,
    return
  }
}

</mosaic_0001>

<llo_original>
// kernel: fwd.1
$region0: #{fwd.1}
  #allocation0 [shape = 'u32[]', space=smem, size = 0x4, offset = 0x4, fixed_abs, tag = 'smem constant byte address 0x4 - core index']
  #allocation1 [shape = 'u32[72,128]{1,0:T(1,128)}', space=vmem, size = 0x9000, scoped, tag = 'internal scratch']
  %s0 = inlined_call_operand.vmem [shape: f32[2,1024], index: 0, kind: input, shape index: {}]
  %s1 = inlined_call_operand.hbm [shape: bf16[1024,1024], index: 1, kind: input, shape index: {}]
  %s2 = inlined_call_operand.hbm [shape: f32[1,1024], index: 2, kind: input, shape index: {}]
  %s3 = inlined_call_operand.hbm [shape: bf16[1024,512], index: 3, kind: input, shape index: {}]
  %s4 = inlined_call_operand.hbm [shape: f32[1,512], index: 4, kind: input, shape index: {}]
  %s5 = inlined_call_operand.hbm [shape: bf16[512,256], index: 5, kind: input, shape index: {}]
  %s6 = inlined_call_operand.hbm [shape: f32[1,256], index: 6, kind: input, shape index: {}]
  %s7 = inlined_call_operand.vmem [shape: bf16[256,192], index: 7, kind: input, shape index: {}]
  %s8 = inlined_call_operand.hbm [shape: f32[1,192], index: 8, kind: input, shape index: {}]
  %s9 = inlined_call_operand.hbm [shape: bf16[192,128], index: 9, kind: input, shape index: {}]
  %s10 = inlined_call_operand.hbm [shape: f32[1,128], index: 10, kind: input, shape index: {}]
  %s11 = inlined_call_operand.vmem [shape: f32[2,128], index: 11, kind: output, shape index: {}]
  %s12 = sld [smem:[#allocation0]]
  $region90: #{fwd.1} parent=0
    _
  %s14 = ssub.s32 1, %s12
  %s15 = scalar_select 0, %s14, %s12
  $region1: #{fwd.1} parent=0
    #allocation2 [shape = 'u8[2097152]{0}', space=vmem, size = 0x200000, scoped, tag = 'input window, operand 1, single buffered']
    #allocation3 [shape = 's32[1]{0}', space=sflag, size = 0x4, scoped, tag = 'scoped memory for fwd.1']
    #allocation4 [shape = 'u8[4096]{0}', space=vmem, size = 0x1000, scoped, tag = 'input window, operand 2, single buffered']
    #allocation5 [shape = 's32[1]{0}', space=sflag, size = 0x4, scoped, tag = 'scoped memory for fwd.1']
    #allocation6 [shape = 'u8[1048576]{0}', space=vmem, size = 0x100000, scoped, tag = 'input window, operand 3, single buffered']
    #allocation7 [shape = 'u8[2048]{0}', space=vmem, size = 0x800, scoped, tag = 'input window, operand 4, single buffered']
    #allocation8 [shape = 's32[1]{0}', space=sflag, size = 0x4, scoped, tag = 'scoped memory for fwd.1']
    #allocation9 [shape = 'u8[262144]{0}', space=vmem, size = 0x40000, scoped, tag = 'input window, operand 5, single buffered']
    #allocation10 [shape = 'u8[1024]{0}', space=vmem, size = 0x400, scoped, tag = 'input window, operand 6, single buffered']
    #allocation11 [shape = 's32[1]{0}', space=sflag, size = 0x4, scoped, tag = 'scoped memory for fwd.1']
    #allocation12 [shape = 'u8[1024]{0}', space=vmem, size = 0x400, scoped, tag = 'input window, operand 8, single buffered']
    #allocation13 [shape = 'u8[49152]{0}', space=vmem, size = 0xc000, scoped, tag = 'input window, operand 9, single buffered']
    #allocation14 [shape = 's32[1]{0}', space=sflag, size = 0x4, scoped, tag = 'scoped memory for fwd.1']
    #allocation15 [shape = 'u8[512]{0}', space=vmem, size = 0x400, scoped, tag = 'input window, operand 10, single buffered']
    %16 = vsyncpa [#allocation3], 0
    %17 = vsyncpa [#allocation5], 0
    %18 = vsyncpa [#allocation8], 0
    %19 = vsyncpa [#allocation11], 0
    %20 = vsyncpa [#allocation14], 0
    // Predicated region
    $region2: #{fwd.1} parent=1 // pred_check
      _
    $region3: #{fwd.1} parent=1 // pred_check_branch
      %22 = sbr.rel (0) target = $region5
    $region4: #{fwd.1} parent=1 // pred_region
      _
    $region5: #{fwd.1} parent=1 // pred_fallthru
      _
    // Predicated region
    $region6: #{fwd.1} parent=1 // pred_check
      _
    $region7: #{fwd.1} parent=1 // pred_check_branch
      %24 = sbr.rel (0) target = $region9
    $region8: #{fwd.1} parent=1 // pred_region
      %26 = vsyncadd [#allocation3], 0
      %s27 = sshll.u32 %s1, 4
      %s28 = int_to_ptr.hbm [resolvable:$true] %s27
      %s29 = sshll.u32 [#allocation2], 4
      %s30 = int_to_ptr.vmem [resolvable:$true] %s29
      %35 = dma.hbm_to_vmem [thread:$0]  %s28, 65536, %s30, [#allocation3], 512, 512, 32
    $region9: #{fwd.1} parent=1 // pred_fallthru
      _
    // Predicated region
    $region10: #{fwd.1} parent=1 // pred_check
      _
    $region11: #{fwd.1} parent=1 // pred_check_branch
      %37 = sbr.rel (0) target = $region13
    $region12: #{fwd.1} parent=1 // pred_region
      %39 = vsyncadd [#allocation5], 0
      %s41 = sshll.u32 %s2, 4
      %s42 = int_to_ptr.hbm [resolvable:$true] %s41
      %s43 = sshll.u32 [#allocation4], 4
      %s44 = int_to_ptr.vmem [resolvable:$true] %s43
      %46 = dma.hbm_to_vmem [thread:$0]  %s42, 128, %s44, [#allocation5]
    $region13: #{fwd.1} parent=1 // pred_fallthru
      _
    // Predicated region
    $region14: #{fwd.1} parent=1 // pred_check
      _
    $region15: #{fwd.1} parent=1 // pred_check_branch
      %48 = sbr.rel (0) target = $region17
    $region16: #{fwd.1} parent=1 // pred_region
      %50 = vsyncadd [#allocation5], 0
      %s51 = sshll.u32 %s3, 4
      %s52 = int_to_ptr.hbm [resolvable:$true] %s51
      %s53 = sshll.u32 [#allocation6], 4
      %s54 = int_to_ptr.vmem [resolvable:$true] %s53
      %59 = dma.hbm_to_vmem [thread:$0]  %s52, 32768, %s54, [#allocation5], 256, 256, 16
    $region17: #{fwd.1} parent=1 // pred_fallthru
      _
    // Predicated region
    $region18: #{fwd.1} parent=1 // pred_check
      _
    $region19: #{fwd.1} parent=1 // pred_check_branch
      %61 = sbr.rel (0) target = $region21
    $region20: #{fwd.1} parent=1 // pred_region
      %63 = vsyncadd [#allocation8], 0
      %s65 = sshll.u32 %s4, 4
      %s66 = int_to_ptr.hbm [resolvable:$true] %s65
      %s67 = sshll.u32 [#allocation7], 4
      %s68 = int_to_ptr.vmem [resolvable:$true] %s67
      %70 = dma.hbm_to_vmem [thread:$0]  %s66, 64, %s68, [#allocation8]
    $region21: #{fwd.1} parent=1 // pred_fallthru
      _
    // Predicated region
    $region22: #{fwd.1} parent=1 // pred_check
      _
    $region23: #{fwd.1} parent=1 // pred_check_branch
      %72 = sbr.rel (0) target = $region25
    $region24: #{fwd.1} parent=1 // pred_region
      %74 = vsyncadd [#allocation8], 0
      %s75 = sshll.u32 %s5, 4
      %s76 = int_to_ptr.hbm [resolvable:$true] %s75
      %s77 = sshll.u32 [#allocation9], 4
      %s78 = int_to_ptr.vmem [resolvable:$true] %s77
      %83 = dma.hbm_to_vmem [thread:$0]  %s76, 8192, %s78, [#allocation8], 128, 128, 8
    $region25: #{fwd.1} parent=1 // pred_fallthru
      _
    // Predicated region
    $region26: #{fwd.1} parent=1 // pred_check
      _
    $region27: #{fwd.1} parent=1 // pred_check_branch
      %85 = sbr.rel (0) target = $region29
    $region28: #{fwd.1} parent=1 // pred_region
      %87 = vsyncadd [#allocation11], 0
      %s89 = sshll.u32 %s6, 4
      %s90 = int_to_ptr.hbm [resolvable:$true] %s89
      %s91 = sshll.u32 [#allocation10], 4
      %s92 = int_to_ptr.vmem [resolvable:$true] %s91
      %94 = dma.hbm_to_vmem [thread:$0]  %s90, 32, %s92, [#allocation11]
    $region29: #{fwd.1} parent=1 // pred_fallthru
      _
    // Predicated region
    $region30: #{fwd.1} parent=1 // pred_check
      _
    $region31: #{fwd.1} parent=1 // pred_check_branch
      %96 = sbr.rel (0) target = $region33
    $region32: #{fwd.1} parent=1 // pred_region
      _
    $region33: #{fwd.1} parent=1 // pred_fallthru
      _
    // Predicated region
    $region34: #{fwd.1} parent=1 // pred_check
      _
    $region35: #{fwd.1} parent=1 // pred_check_branch
      %98 = sbr.rel (0) target = $region37
    $region36: #{fwd.1} parent=1 // pred_region
      %100 = vsyncadd [#allocation11], 0
      %s102 = sshll.u32 %s8, 4
      %s103 = int_to_ptr.hbm [resolvable:$true] %s102
      %s104 = sshll.u32 [#allocation12], 4
      %s105 = int_to_ptr.vmem [resolvable:$true] %s104
      %107 = dma.hbm_to_vmem [thread:$0]  %s103, 32, %s105, [#allocation11]
    $region37: #{fwd.1} parent=1 // pred_fallthru
      _
    // Predicated region
    $region38: #{fwd.1} parent=1 // pred_check
      _
    $region39: #{fwd.1} parent=1 // pred_check_branch
      %109 = sbr.rel (0) target = $region41
    $region40: #{fwd.1} parent=1 // pred_region
      %111 = vsyncadd [#allocation14], 0
      %s112 = sshll.u32 %s9, 4
      %s113 = int_to_ptr.hbm [resolvable:$true] %s112
      %s114 = sshll.u32 [#allocation13], 4
      %s115 = int_to_ptr.vmem [resolvable:$true] %s114
      %120 = dma.hbm_to_vmem [thread:$0]  %s113, 1536, %s115, [#allocation14], 64, 64, 4
    $region41: #{fwd.1} parent=1 // pred_fallthru
      _
    // Predicated region
    $region42: #{fwd.1} parent=1 // pred_check
      _
    $region43: #{fwd.1} parent=1 // pred_check_branch
      %122 = sbr.rel (0) target = $region45
    $region44: #{fwd.1} parent=1 // pred_region
      %124 = vsyncadd [#allocation14], 0
      %s126 = sshll.u32 %s10, 4
      %s127 = int_to_ptr.hbm [resolvable:$true] %s126
      %s128 = sshll.u32 [#allocation15], 4
      %s129 = int_to_ptr.vmem [resolvable:$true] %s128
      %131 = dma.hbm_to_vmem [thread:$0]  %s127, 16, %s129, [#allocation14]
    $region45: #{fwd.1} parent=1 // pred_fallthru
      _
    // Predicated region
    $region46: #{fwd.1} parent=1 // pred_check
      _
    $region47: #{fwd.1} parent=1 // pred_check_branch
      %133 = sbr.rel (0) target = $region49
    $region48: #{fwd.1} parent=1 // pred_region
      %135 = dma.done [#allocation3], 65536
    $region49: #{fwd.1} parent=1 // pred_fallthru
      _
    // Predicated region
    $region50: #{fwd.1} parent=1 // pred_check
      _
    $region51: #{fwd.1} parent=1 // pred_check_branch
      %137 = sbr.rel (0) target = $region53
    $region52: #{fwd.1} parent=1 // pred_region
      %139 = dma.done [#allocation5], 128
    $region53: #{fwd.1} parent=1 // pred_fallthru
      _
    // Predicated region
    $region54: #{fwd.1} parent=1 // pred_check
      _
    $region55: #{fwd.1} parent=1 // pred_check_branch
      %141 = sbr.rel (0) target = $region57
    $region56: #{fwd.1} parent=1 // pred_region
      %143 = dma.done [#allocation5], 32768
    $region57: #{fwd.1} parent=1 // pred_fallthru
      _
    // Predicated region
    $region58: #{fwd.1} parent=1 // pred_check
      _
    $region59: #{fwd.1} parent=1 // pred_check_branch
      %145 = sbr.rel (0) target = $region61
    $region60: #{fwd.1} parent=1 // pred_region
      %147 = dma.done [#allocation8], 64
    $region61: #{fwd.1} parent=1 // pred_fallthru
      _
    // Predicated region
    $region62: #{fwd.1} parent=1 // pred_check
      _
    $region63: #{fwd.1} parent=1 // pred_check_branch
      %149 = sbr.rel (0) target = $region65
    $region64: #{fwd.1} parent=1 // pred_region
      %151 = dma.done [#allocation8], 8192
    $region65: #{fwd.1} parent=1 // pred_fallthru
      _
    // Predicated region
    $region66: #{fwd.1} parent=1 // pred_check
      _
    $region67: #{fwd.1} parent=1 // pred_check_branch
      %153 = sbr.rel (0) target = $region69
    $region68: #{fwd.1} parent=1 // pred_region
      %155 = dma.done [#allocation11], 32
    $region69: #{fwd.1} parent=1 // pred_fallthru
      _
    // Predicated region
    $region70: #{fwd.1} parent=1 // pred_check
      _
    $region71: #{fwd.1} parent=1 // pred_check_branch
      %157 = sbr.rel (0) target = $region73
    $region72: #{fwd.1} parent=1 // pred_region
      %159 = dma.done [#allocation11], 32
    $region73: #{fwd.1} parent=1 // pred_fallthru
      _
    // Predicated region
    $region74: #{fwd.1} parent=1 // pred_check
      _
    $region75: #{fwd.1} parent=1 // pred_check_branch
      %161 = sbr.rel (0) target = $region77
    $region76: #{fwd.1} parent=1 // pred_region
      %163 = dma.done [#allocation14], 1536
    $region77: #{fwd.1} parent=1 // pred_fallthru
      _
    // Predicated region
    $region78: #{fwd.1} parent=1 // pred_check
      _
    $region79: #{fwd.1} parent=1 // pred_check_branch
      %165 = sbr.rel (0) target = $region81
    $region80: #{fwd.1} parent=1 // pred_region
      %167 = dma.done [#allocation14], 16
    $region81: #{fwd.1} parent=1 // pred_fallthru
      _
    %v169 = vld [vmem:[%s0] sm:$0xff]
    %v170 = vld [vmem:[%s0 + $0x8] sm:$0xff]
    %173 = vst [vmem:[#allocation1] ss:$4 sm:$0xff] %v169
    %s174 = scalar_lea.vmem [#allocation1], 32
    %175 = vst [vmem:[%s174] ss:$4 sm:$0xff] %v170
    %v176 = vld.sshfl [vmem:[#allocation1] sm:$0xff pattern:$0x73625140]
    %v177 = vld.sshfl [vmem:[#allocation1 + $0x8] sm:$0xff pattern:$0x73625140]
    %v178 = vld.sshfl [vmem:[#allocation1 + $0x10] sm:$0xff pattern:$0x73625140]
    %v179 = vld.sshfl [vmem:[#allocation1 + $0x18] sm:$0xff pattern:$0x73625140]
    %v180 = vld.sshfl [vmem:[#allocation1 + $0x20] sm:$0xff pattern:$0x73625140]
    %v181 = vld.sshfl [vmem:[#allocation1 + $0x28] sm:$0xff pattern:$0x73625140]
    %v182 = vld.sshfl [vmem:[#allocation1 + $0x30] sm:$0xff pattern:$0x73625140]
    %v183 = vld.sshfl [vmem:[#allocation1 + $0x38] sm:$0xff pattern:$0x73625140]
    %v192 = vpack.c.bf16 %v176, %v176
    %v193 = vpack.c.bf16 %v177, %v177
    %v194 = vpack.c.bf16 %v178, %v178
    %v195 = vpack.c.bf16 %v179, %v179
    %v196 = vpack.c.bf16 %v180, %v180
    %v197 = vpack.c.bf16 %v181, %v181
    %v198 = vpack.c.bf16 %v182, %v182
    %v199 = vpack.c.bf16 %v183, %v183
    %v200 = vld [vmem:[#allocation2] sm:$0xff]
    %v201 = vld [vmem:[#allocation2 + $0x8] sm:$0xff]
    %v202 = vld [vmem:[#allocation2 + $0x10] sm:$0xff]
    %v203 = vld [vmem:[#allocation2 + $0x18] sm:$0xff]
    %v204 = vld [vmem:[#allocation2 + $0x20] sm:$0xff]
    %v205 = vld [vmem:[#allocation2 + $0x28] sm:$0xff]
    %v206 = vld [vmem:[#allocation2 + $0x30] sm:$0xff]
    %v207 = vld [vmem:[#allocation2 + $0x38] sm:$0xff]
    %v208 = vld [vmem:[#allocation2 + $0x40] sm:$0xff]
    %v209 = vld [vmem:[#allocation2 + $0x48] sm:$0xff]
    %v210 = vld [vmem:[#allocation2 + $0x50] sm:$0xff]
    %v211 = vld [vmem:[#allocation2 + $0x58] sm:$0xff]
    %v212 = vld [vmem:[#allocation2 + $0x60] sm:$0xff]
    %v213 = vld [vmem:[#allocation2 + $0x68] sm:$0xff]
    %v214 = vld [vmem:[#allocation2 + $0x70] sm:$0xff]
    %v215 = vld [vmem:[#allocation2 + $0x78] sm:$0xff]
    %v216 = vld [vmem:[#allocation2 + $0x80] sm:$0xff]
    %v217 = vld [vmem:[#allocation2 + $0x88] sm:$0xff]
    %v218 = vld [vmem:[#allocation2 + $0x90] sm:$0xff]
    %v219 = vld [vmem:[#allocation2 + $0x98] sm:$0xff]
    %v220 = vld [vmem:[#allocation2 + $0xa0] sm:$0xff]
    %v221 = vld [vmem:[#allocation2 + $0xa8] sm:$0xff]
    %v222 = vld [vmem:[#allocation2 + $0xb0] sm:$0xff]
    %v223 = vld [vmem:[#allocation2 + $0xb8] sm:$0xff]
    %v224 = vld [vmem:[#allocation2 + $0xc0] sm:$0xff]
    %v225 = vld [vmem:[#allocation2 + $0xc8] sm:$0xff]
    %v226 = vld [vmem:[#allocation2 + $0xd0] sm:$0xff]
    %v227 = vld [vmem:[#allocation2 + $0xd8] sm:$0xff]
    %v228 = vld [vmem:[#allocation2 + $0xe0] sm:$0xff]
    %v229 = vld [vmem:[#allocation2 + $0xe8] sm:$0xff]
    %v230 = vld [vmem:[#allocation2 + $0xf0] sm:$0xff]
    %v231 = vld [vmem:[#allocation2 + $0xf8] sm:$0xff]
    %v232 = vld [vmem:[#allocation2 + $0x100] sm:$0xff]
    %v233 = vld [vmem:[#allocation2 + $0x108] sm:$0xff]
    %v234 = vld [vmem:[#allocation2 + $0x110] sm:$0xff]
    %v235 = vld [vmem:[#allocation2 + $0x118] sm:$0xff]
    %v236 = vld [vmem:[#allocation2 + $0x120] sm:$0xff]
    %v237 = vld [vmem:[#allocation2 + $0x128] sm:$0xff]
    %v238 = vld [vmem:[#allocation2 + $0x130] sm:$0xff]
    %v239 = vld [vmem:[#allocation2 + $0x138] sm:$0xff]
    %v240 = vld [vmem:[#allocation2 + $0x140] sm:$0xff]
    %v241 = vld [vmem:[#allocation2 + $0x148] sm:$0xff]
    %v242 = vld [vmem:[#allocation2 + $0x150] sm:$0xff]
    %v243 = vld [vmem:[#allocation2 + $0x158] sm:$0xff]
    %v244 = vld [vmem:[#allocation2 + $0x160] sm:$0xff]
    %v245 = vld [vmem:[#allocation2 + $0x168] sm:$0xff]
    %v246 = vld [vmem:[#allocation2 + $0x170] sm:$0xff]
    %v247 = vld [vmem:[#allocation2 + $0x178] sm:$0xff]
    %v248 = vld [vmem:[#allocation2 + $0x180] sm:$0xff]
    %v249 = vld [vmem:[#allocation2 + $0x188] sm:$0xff]
    %v250 = vld [vmem:[#allocation2 + $0x190] sm:$0xff]
    %v251 = vld [vmem:[#allocation2 + $0x198] sm:$0xff]
    %v252 = vld [vmem:[#allocation2 + $0x1a0] sm:$0xff]
    %v253 = vld [vmem:[#allocation2 + $0x1a8] sm:$0xff]
    %v254 = vld [vmem:[#allocation2 + $0x1b0] sm:$0xff]
    %v255 = vld [vmem:[#allocation2 + $0x1b8] sm:$0xff]
    %v256 = vld [vmem:[#allocation2 + $0x1c0] sm:$0xff]
    %v257 = vld [vmem:[#allocation2 + $0x1c8] sm:$0xff]
    %v258 = vld [vmem:[#allocation2 + $0x1d0] sm:$0xff]
    %v259 = vld [vmem:[#allocation2 + $0x1d8] sm:$0xff]
    %v260 = vld [vmem:[#allocation2 + $0x1e0] sm:$0xff]
    %v261 = vld [vmem:[#allocation2 + $0x1e8] sm:$0xff]
    %v262 = vld [vmem:[#allocation2 + $0x1f0] sm:$0xff]
    %v263 = vld [vmem:[#allocation2 + $0x1f8] sm:$0xff]
    %v264 = vld [vmem:[#allocation2 + $0x200] sm:$0xff]
    %v265 = vld [vmem:[#allocation2 + $0x208] sm:$0xff]
    %v266 = vld [vmem:[#allocation2 + $0x210] sm:$0xff]
    %v267 = vld [vmem:[#allocation2 + $0x218] sm:$0xff]
    %v268 = vld [vmem:[#allocation2 + $0x220] sm:$0xff]
    %v269 = vld [vmem:[#allocation2 + $0x228] sm:$0xff]
    %v270 = vld [vmem:[#allocation2 + $0x230] sm:$0xff]
    %v271 = vld [vmem:[#allocation2 + $0x238] sm:$0xff]
    %v272 = vld [vmem:[#allocation2 + $0x240] sm:$0xff]
    %v273 = vld [vmem:[#allocation2 + $0x248] sm:$0xff]
    %v274 = vld [vmem:[#allocation2 + $0x250] sm:$0xff]
    %v275 = vld [vmem:[#allocation2 + $0x258] sm:$0xff]
    %v276 = vld [vmem:[#allocation2 + $0x260] sm:$0xff]
    %v277 = vld [vmem:[#allocation2 + $0x268] sm:$0xff]
    %v278 = vld [vmem:[#allocation2 + $0x270] sm:$0xff]
    %v279 = vld [vmem:[#allocation2 + $0x278] sm:$0xff]
    %v280 = vld [vmem:[#allocation2 + $0x280] sm:$0xff]
    %v281 = vld [vmem:[#allocation2 + $0x288] sm:$0xff]
    %v282 = vld [vmem:[#allocation2 + $0x290] sm:$0xff]
    %v283 = vld [vmem:[#allocation2 + $0x298] sm:$0xff]
    %v284 = vld [vmem:[#allocation2 + $0x2a0] sm:$0xff]
    %v285 = vld [vmem:[#allocation2 + $0x2a8] sm:$0xff]
    %v286 = vld [vmem:[#allocation2 + $0x2b0] sm:$0xff]
    %v287 = vld [vmem:[#allocation2 + $0x2b8] sm:$0xff]
    %v288 = vld [vmem:[#allocation2 + $0x2c0] sm:$0xff]
    %v289 = vld [vmem:[#allocation2 + $0x2c8] sm:$0xff]
    %v290 = vld [vmem:[#allocation2 + $0x2d0] sm:$0xff]
    %v291 = vld [vmem:[#allocation2 + $0x2d8] sm:$0xff]
    %v292 = vld [vmem:[#allocation2 + $0x2e0] sm:$0xff]
    %v293 = vld [vmem:[#allocation2 + $0x2e8] sm:$0xff]
    %v294 = vld [vmem:[#allocation2 + $0x2f0] sm:$0xff]
    %v295 = vld [vmem:[#allocation2 + $0x2f8] sm:$0xff]
    %v296 = vld [vmem:[#allocation2 + $0x300] sm:$0xff]
    %v297 = vld [vmem:[#allocation2 + $0x308] sm:$0xff]
    %v298 = vld [vmem:[#allocation2 + $0x310] sm:$0xff]
    %v299 = vld [vmem:[#allocation2 + $0x318] sm:$0xff]
    %v300 = vld [vmem:[#allocation2 + $0x320] sm:$0xff]
    %v301 = vld [vmem:[#allocation2 + $0x328] sm:$0xff]
    %v302 = vld [vmem:[#allocation2 + $0x330] sm:$0xff]
    %v303 = vld [vmem:[#allocation2 + $0x338] sm:$0xff]
    %v304 = vld [vmem:[#allocation2 + $0x340] sm:$0xff]
    %v305 = vld [vmem:[#allocation2 + $0x348] sm:$0xff]
    %v306 = vld [vmem:[#allocation2 + $0x350] sm:$0xff]
    %v307 = vld [vmem:[#allocation2 + $0x358] sm:$0xff]
    %v308 = vld [vmem:[#allocation2 + $0x360] sm:$0xff]
    %v309 = vld [vmem:[#allocation2 + $0x368] sm:$0xff]
    %v310 = vld [vmem:[#allocation2 + $0x370] sm:$0xff]
    %v311 = vld [vmem:[#allocation2 + $0x378] sm:$0xff]
    %v312 = vld [vmem:[#allocation2 + $0x380] sm:$0xff]
    %v313 = vld [vmem:[#allocation2 + $0x388] sm:$0xff]
    %v314 = vld [vmem:[#allocation2 + $0x390] sm:$0xff]
    %v315 = vld [vmem:[#allocation2 + $0x398] sm:$0xff]
    %v316 = vld [vmem:[#allocation2 + $0x3a0] sm:$0xff]
    %v317 = vld [vmem:[#allocation2 + $0x3a8] sm:$0xff]
    %v318 = vld [vmem:[#allocation2 + $0x3b0] sm:$0xff]
    %v319 = vld [vmem:[#allocation2 + $0x3b8] sm:$0xff]
    %v320 = vld [vmem:[#allocation2 + $0x3c0] sm:$0xff]
    %v321 = vld [vmem:[#allocation2 + $0x3c8] sm:$0xff]
    %v322 = vld [vmem:[#allocation2 + $0x3d0] sm:$0xff]
    %v323 = vld [vmem:[#allocation2 + $0x3d8] sm:$0xff]
    %v324 = vld [vmem:[#allocation2 + $0x3e0] sm:$0xff]
    %v325 = vld [vmem:[#allocation2 + $0x3e8] sm:$0xff]
    %v326 = vld [vmem:[#allocation2 + $0x3f0] sm:$0xff]
    %v327 = vld [vmem:[#allocation2 + $0x3f8] sm:$0xff]
    %v328 = vld [vmem:[#allocation2 + $0x400] sm:$0xff]
    %v329 = vld [vmem:[#allocation2 + $0x408] sm:$0xff]
    %v330 = vld [vmem:[#allocation2 + $0x410] sm:$0xff]
    %v331 = vld [vmem:[#allocation2 + $0x418] sm:$0xff]
    %v332 = vld [vmem:[#allocation2 + $0x420] sm:$0xff]
    %v333 = vld [vmem:[#allocation2 + $0x428] sm:$0xff]
    %v334 = vld [vmem:[#allocation2 + $0x430] sm:$0xff]
    %v335 = vld [vmem:[#allocation2 + $0x438] sm:$0xff]
    %v336 = vld [vmem:[#allocation2 + $0x440] sm:$0xff]
    %v337 = vld [vmem:[#allocation2 + $0x448] sm:$0xff]
    %v338 = vld [vmem:[#allocation2 + $0x450] sm:$0xff]
    %v339 = vld [vmem:[#allocation2 + $0x458] sm:$0xff]
    %v340 = vld [vmem:[#allocation2 + $0x460] sm:$0xff]
    %v341 = vld [vmem:[#allocation2 + $0x468] sm:$0xff]
    %v342 = vld [vmem:[#allocation2 + $0x470] sm:$0xff]
    %v343 = vld [vmem:[#allocation2 + $0x478] sm:$0xff]
    %v344 = vld [vmem:[#allocation2 + $0x480] sm:$0xff]
    %v345 = vld [vmem:[#allocation2 + $0x488] sm:$0xff]
    %v346 = vld [vmem:[#allocation2 + $0x490] sm:$0xff]
    %v347 = vld [vmem:[#allocation2 + $0x498] sm:$0xff]
    %v348 = vld [vmem:[#allocation2 + $0x4a0] sm:$0xff]
    %v349 = vld [vmem:[#allocation2 + $0x4a8] sm:$0xff]
    %v350 = vld [vmem:[#allocation2 + $0x4b0] sm:$0xff]
    %v351 = vld [vmem:[#allocation2 + $0x4b8] sm:$0xff]
    %v352 = vld [vmem:[#allocation2 + $0x4c0] sm:$0xff]
    %v353 = vld [vmem:[#allocation2 + $0x4c8] sm:$0xff]
    %v354 = vld [vmem:[#allocation2 + $0x4d0] sm:$0xff]
    %v355 = vld [vmem:[#allocation2 + $0x4d8] sm:$0xff]
    %v356 = vld [vmem:[#allocation2 + $0x4e0] sm:$0xff]
    %v357 = vld [vmem:[#allocation2 + $0x4e8] sm:$0xff]
    %v358 = vld [vmem:[#allocation2 + $0x4f0] sm:$0xff]
    %v359 = vld [vmem:[#allocation2 + $0x4f8] sm:$0xff]
    %v360 = vld [vmem:[#allocation2 + $0x500] sm:$0xff]
    %v361 = vld [vmem:[#allocation2 + $0x508] sm:$0xff]
    %v362 = vld [vmem:[#allocation2 + $0x510] sm:$0xff]
    %v363 = vld [vmem:[#allocation2 + $0x518] sm:$0xff]
    %v364 = vld [vmem:[#allocation2 + $0x520] sm:$0xff]
    %v365 = vld [vmem:[#allocation2 + $0x528] sm:$0xff]
    %v366 = vld [vmem:[#allocation2 + $0x530] sm:$0xff]
    %v367 = vld [vmem:[#allocation2 + $0x538] sm:$0xff]
    %v368 = vld [vmem:[#allocation2 + $0x540] sm:$0xff]
    %v369 = vld [vmem:[#allocation2 + $0x548] sm:$0xff]
    %v370 = vld [vmem:[#allocation2 + $0x550] sm:$0xff]
    %v371 = vld [vmem:[#allocation2 + $0x558] sm:$0xff]
    %v372 = vld [vmem:[#allocation2 + $0x560] sm:$0xff]
    %v373 = vld [vmem:[#allocation2 + $0x568] sm:$0xff]
    %v374 = vld [vmem:[#allocation2 + $0x570] sm:$0xff]
    %v375 = vld [vmem:[#allocation2 + $0x578] sm:$0xff]
    %v376 = vld [vmem:[#allocation2 + $0x580] sm:$0xff]
    %v377 = vld [vmem:[#allocation2 + $0x588] sm:$0xff]
    %v378 = vld [vmem:[#allocation2 + $0x590] sm:$0xff]
    %v379 = vld [vmem:[#allocation2 + $0x598] sm:$0xff]
    %v380 = vld [vmem:[#allocation2 + $0x5a0] sm:$0xff]
    %v381 = vld [vmem:[#allocation2 + $0x5a8] sm:$0xff]
    %v382 = vld [vmem:[#allocation2 + $0x5b0] sm:$0xff]
    %v383 = vld [vmem:[#allocation2 + $0x5b8] sm:$0xff]
    %v384 = vld [vmem:[#allocation2 + $0x5c0] sm:$0xff]
    %v385 = vld [vmem:[#allocation2 + $0x5c8] sm:$0xff]
    %v386 = vld [vmem:[#allocation2 + $0x5d0] sm:$0xff]
    %v387 = vld [vmem:[#allocation2 + $0x5d8] sm:$0xff]
    %v388 = vld [vmem:[#allocation2 + $0x5e0] sm:$0xff]
    %v389 = vld [vmem:[#allocation2 + $0x5e8] sm:$0xff]
    %v390 = vld [vmem:[#allocation2 + $0x5f0] sm:$0xff]
    %v391 = vld [vmem:[#allocation2 + $0x5f8] sm:$0xff]
    %v392 = vld [vmem:[#allocation2 + $0x600] sm:$0xff]
    %v393 = vld [vmem:[#allocation2 + $0x608] sm:$0xff]
    %v394 = vld [vmem:[#allocation2 + $0x610] sm:$0xff]
    %v395 = vld [vmem:[#allocation2 + $0x618] sm:$0xff]
    %v396 = vld [vmem:[#allocation2 + $0x620] sm:$0xff]
    %v397 = vld [vmem:[#allocation2 + $0x628] sm:$0xff]
    %v398 = vld [vmem:[#allocation2 + $0x630] sm:$0xff]
    %v399 = vld [vmem:[#allocation2 + $0x638] sm:$0xff]
    %v400 = vld [vmem:[#allocation2 + $0x640] sm:$0xff]
    %v401 = vld [vmem:[#allocation2 + $0x648] sm:$0xff]
    %v402 = vld [vmem:[#allocation2 + $0x650] sm:$0xff]
    %v403 = vld [vmem:[#allocation2 + $0x658] sm:$0xff]
    %v404 = vld [vmem:[#allocation2 + $0x660] sm:$0xff]
    %v405 = vld [vmem:[#allocation2 + $0x668] sm:$0xff]
    %v406 = vld [vmem:[#allocation2 + $0x670] sm:$0xff]
    %v407 = vld [vmem:[#allocation2 + $0x678] sm:$0xff]
    %v408 = vld [vmem:[#allocation2 + $0x680] sm:$0xff]
    %v409 = vld [vmem:[#allocation2 + $0x688] sm:$0xff]
    %v410 = vld [vmem:[#allocation2 + $0x690] sm:$0xff]
    %v411 = vld [vmem:[#allocation2 + $0x698] sm:$0xff]
    %v412 = vld [vmem:[#allocation2 + $0x6a0] sm:$0xff]
    %v413 = vld [vmem:[#allocation2 + $0x6a8] sm:$0xff]
    %v414 = vld [vmem:[#allocation2 + $0x6b0] sm:$0xff]
    %v415 = vld [vmem:[#allocation2 + $0x6b8] sm:$0xff]
    %v416 = vld [vmem:[#allocation2 + $0x6c0] sm:$0xff]
    %v417 = vld [vmem:[#allocation2 + $0x6c8] sm:$0xff]
    %v418 = vld [vmem:[#allocation2 + $0x6d0] sm:$0xff]
    %v419 = vld [vmem:[#allocation2 + $0x6d8] sm:$0xff]
    %v420 = vld [vmem:[#allocation2 + $0x6e0] sm:$0xff]
    %v421 = vld [vmem:[#allocation2 + $0x6e8] sm:$0xff]
    %v422 = vld [vmem:[#allocation2 + $0x6f0] sm:$0xff]
    %v423 = vld [vmem:[#allocation2 + $0x6f8] sm:$0xff]
    %v424 = vld [vmem:[#allocation2 + $0x700] sm:$0xff]
    %v425 = vld [vmem:[#allocation2 + $0x708] sm:$0xff]
    %v426 = vld [vmem:[#allocation2 + $0x710] sm:$0xff]
    %v427 = vld [vmem:[#allocation2 + $0x718] sm:$0xff]
    %v428 = vld [vmem:[#allocation2 + $0x720] sm:$0xff]
    %v429 = vld [vmem:[#allocation2 + $0x728] sm:$0xff]
    %v430 = vld [vmem:[#allocation2 + $0x730] sm:$0xff]
    %v431 = vld [vmem:[#allocation2 + $0x738] sm:$0xff]
    %v432 = vld [vmem:[#allocation2 + $0x740] sm:$0xff]
    %v433 = vld [vmem:[#allocation2 + $0x748] sm:$0xff]
    %v434 = vld [vmem:[#allocation2 + $0x750] sm:$0xff]
    %v435 = vld [vmem:[#allocation2 + $0x758] sm:$0xff]
    %v436 = vld [vmem:[#allocation2 + $0x760] sm:$0xff]
    %v437 = vld [vmem:[#allocation2 + $0x768] sm:$0xff]
    %v438 = vld [vmem:[#allocation2 + $0x770] sm:$0xff]
    %v439 = vld [vmem:[#allocation2 + $0x778] sm:$0xff]
    %v440 = vld [vmem:[#allocation2 + $0x780] sm:$0xff]
    %v441 = vld [vmem:[#allocation2 + $0x788] sm:$0xff]
    %v442 = vld [vmem:[#allocation2 + $0x790] sm:$0xff]
    %v443 = vld [vmem:[#allocation2 + $0x798] sm:$0xff]
    %v444 = vld [vmem:[#allocation2 + $0x7a0] sm:$0xff]
    %v445 = vld [vmem:[#allocation2 + $0x7a8] sm:$0xff]
    %v446 = vld [vmem:[#allocation2 + $0x7b0] sm:$0xff]
    %v447 = vld [vmem:[#allocation2 + $0x7b8] sm:$0xff]
    %v448 = vld [vmem:[#allocation2 + $0x7c0] sm:$0xff]
    %v449 = vld [vmem:[#allocation2 + $0x7c8] sm:$0xff]
    %v450 = vld [vmem:[#allocation2 + $0x7d0] sm:$0xff]
    %v451 = vld [vmem:[#allocation2 + $0x7d8] sm:$0xff]
    %v452 = vld [vmem:[#allocation2 + $0x7e0] sm:$0xff]
    %v453 = vld [vmem:[#allocation2 + $0x7e8] sm:$0xff]
    %v454 = vld [vmem:[#allocation2 + $0x7f0] sm:$0xff]
    %v455 = vld [vmem:[#allocation2 + $0x7f8] sm:$0xff]
    %v456 = vld [vmem:[#allocation2 + $0x800] sm:$0xff]
    %v457 = vld [vmem:[#allocation2 + $0x808] sm:$0xff]
    %v458 = vld [vmem:[#allocation2 + $0x810] sm:$0xff]
    %v459 = vld [vmem:[#allocation2 + $0x818] sm:$0xff]
    %v460 = vld [vmem:[#allocation2 + $0x820] sm:$0xff]
    %v461 = vld [vmem:[#allocation2 + $0x828] sm:$0xff]
    %v462 = vld [vmem:[#allocation2 + $0x830] sm:$0xff]
    %v463 = vld [vmem:[#allocation2 + $0x838] sm:$0xff]
    %v464 = vld [vmem:[#allocation2 + $0x840] sm:$0xff]
    %v465 = vld [vmem:[#allocation2 + $0x848] sm:$0xff]
    %v466 = vld [vmem:[#allocation2 + $0x850] sm:$0xff]
    %v467 = vld [vmem:[#allocation2 + $0x858] sm:$0xff]
    %v468 = vld [vmem:[#allocation2 + $0x860] sm:$0xff]
    %v469 = vld [vmem:[#allocation2 + $0x868] sm:$0xff]
    %v470 = vld [vmem:[#allocation2 + $0x870] sm:$0xff]
    %v471 = vld [vmem:[#allocation2 + $0x878] sm:$0xff]
    %v472 = vld [vmem:[#allocation2 + $0x880] sm:$0xff]
    %v473 = vld [vmem:[#allocation2 + $0x888] sm:$0xff]
    %v474 = vld [vmem:[#allocation2 + $0x890] sm:$0xff]
    %v475 = vld [vmem:[#allocation2 + $0x898] sm:$0xff]
    %v476 = vld [vmem:[#allocation2 + $0x8a0] sm:$0xff]
    %v477 = vld [vmem:[#allocation2 + $0x8a8] sm:$0xff]
    %v478 = vld [vmem:[#allocation2 + $0x8b0] sm:$0xff]
    %v479 = vld [vmem:[#allocation2 + $0x8b8] sm:$0xff]
    %v480 = vld [vmem:[#allocation2 + $0x8c0] sm:$0xff]
    %v481 = vld [vmem:[#allocation2 + $0x8c8] sm:$0xff]
    %v482 = vld [vmem:[#allocation2 + $0x8d0] sm:$0xff]
    %v483 = vld [vmem:[#allocation2 + $0x8d8] sm:$0xff]
    %v484 = vld [vmem:[#allocation2 + $0x8e0] sm:$0xff]
    %v485 = vld [vmem:[#allocation2 + $0x8e8] sm:$0xff]
    %v486 = vld [vmem:[#allocation2 + $0x8f0] sm:$0xff]
    %v487 = vld [vmem:[#allocation2 + $0x8f8] sm:$0xff]
    %v488 = vld [vmem:[#allocation2 + $0x900] sm:$0xff]
    %v489 = vld [vmem:[#allocation2 + $0x908] sm:$0xff]
    %v490 = vld [vmem:[#allocation2 + $0x910] sm:$0xff]
    %v491 = vld [vmem:[#allocation2 + $0x918] sm:$0xff]
    %v492 = vld [vmem:[#allocation2 + $0x920] sm:$0xff]
    %v493 = vld [vmem:[#allocation2 + $0x928] sm:$0xff]
    %v494 = vld [vmem:[#allocation2 + $0x930] sm:$0xff]
    %v495 = vld [vmem:[#allocation2 + $0x938] sm:$0xff]
    %v496 = vld [vmem:[#allocation2 + $0x940] sm:$0xff]
    %v497 = vld [vmem:[#allocation2 + $0x948] sm:$0xff]
    %v498 = vld [vmem:[#allocation2 + $0x950] sm:$0xff]
    %v499 = vld [vmem:[#allocation2 + $0x958] sm:$0xff]
    %v500 = vld [vmem:[#allocation2 + $0x960] sm:$0xff]
    %v501 = vld [vmem:[#allocation2 + $0x968] sm:$0xff]
    %v502 = vld [vmem:[#allocation2 + $0x970] sm:$0xff]
    %v503 = vld [vmem:[#allocation2 + $0x978] sm:$0xff]
    %v504 = vld [vmem:[#allocation2 + $0x980] sm:$0xff]
    %v505 = vld [vmem:[#allocation2 + $0x988] sm:$0xff]
    %v506 = vld [vmem:[#allocation2 + $0x990] sm:$0xff]
    %v507 = vld [vmem:[#allocation2 + $0x998] sm:$0xff]
    %v508 = vld [vmem:[#allocation2 + $0x9a0] sm:$0xff]
    %v509 = vld [vmem:[#allocation2 + $0x9a8] sm:$0xff]
    %v510 = vld [vmem:[#allocation2 + $0x9b0] sm:$0xff]
    %v511 = vld [vmem:[#allocation2 + $0x9b8] sm:$0xff]
    %v512 = vld [vmem:[#allocation2 + $0x9c0] sm:$0xff]
    %v513 = vld [vmem:[#allocation2 + $0x9c8] sm:$0xff]
    %v514 = vld [vmem:[#allocation2 + $0x9d0] sm:$0xff]
    %v515 = vld [vmem:[#allocation2 + $0x9d8] sm:$0xff]
    %v516 = vld [vmem:[#allocation2 + $0x9e0] sm:$0xff]
    %v517 = vld [vmem:[#allocation2 + $0x9e8] sm:$0xff]
    %v518 = vld [vmem:[#allocation2 + $0x9f0] sm:$0xff]
    %v519 = vld [vmem:[#allocation2 + $0x9f8] sm:$0xff]
    %v520 = vld [vmem:[#allocation2 + $0xa00] sm:$0xff]
    %v521 = vld [vmem:[#allocation2 + $0xa08] sm:$0xff]
    %v522 = vld [vmem:[#allocation2 + $0xa10] sm:$0xff]
    %v523 = vld [vmem:[#allocation2 + $0xa18] sm:$0xff]
    %v524 = vld [vmem:[#allocation2 + $0xa20] sm:$0xff]
    %v525 = vld [vmem:[#allocation2 + $0xa28] sm:$0xff]
    %v526 = vld [vmem:[#allocation2 + $0xa30] sm:$0xff]
    %v527 = vld [vmem:[#allocation2 + $0xa38] sm:$0xff]
    %v528 = vld [vmem:[#allocation2 + $0xa40] sm:$0xff]
    %v529 = vld [vmem:[#allocation2 + $0xa48] sm:$0xff]
    %v530 = vld [vmem:[#allocation2 + $0xa50] sm:$0xff]
    %v531 = vld [vmem:[#allocation2 + $0xa58] sm:$0xff]
    %v532 = vld [vmem:[#allocation2 + $0xa60] sm:$0xff]
    %v533 = vld [vmem:[#allocation2 + $0xa68] sm:$0xff]
    %v534 = vld [vmem:[#allocation2 + $0xa70] sm:$0xff]
    %v535 = vld [vmem:[#allocation2 + $0xa78] sm:$0xff]
    %v536 = vld [vmem:[#allocation2 + $0xa80] sm:$0xff]
    %v537 = vld [vmem:[#allocation2 + $0xa88] sm:$0xff]
    %v538 = vld [vmem:[#allocation2 + $0xa90] sm:$0xff]
    %v539 = vld [vmem:[#allocation2 + $0xa98] sm:$0xff]
    %v540 = vld [vmem:[#allocation2 + $0xaa0] sm:$0xff]
    %v541 = vld [vmem:[#allocation2 + $0xaa8] sm:$0xff]
    %v542 = vld [vmem:[#allocation2 + $0xab0] sm:$0xff]
    %v543 = vld [vmem:[#allocation2 + $0xab8] sm:$0xff]
    %v544 = vld [vmem:[#allocation2 + $0xac0] sm:$0xff]
    %v545 = vld [vmem:[#allocation2 + $0xac8] sm:$0xff]
    %v546 = vld [vmem:[#allocation2 + $0xad0] sm:$0xff]
    %v547 = vld [vmem:[#allocation2 + $0xad8] sm:$0xff]
    %v548 = vld [vmem:[#allocation2 + $0xae0] sm:$0xff]
    %v549 = vld [vmem:[#allocation2 + $0xae8] sm:$0xff]
    %v550 = vld [vmem:[#allocation2 + $0xaf0] sm:$0xff]
    %v551 = vld [vmem:[#allocation2 + $0xaf8] sm:$0xff]
    %v552 = vld [vmem:[#allocation2 + $0xb00] sm:$0xff]
    %v553 = vld [vmem:[#allocation2 + $0xb08] sm:$0xff]
    %v554 = vld [vmem:[#allocation2 + $0xb10] sm:$0xff]
    %v555 = vld [vmem:[#allocation2 + $0xb18] sm:$0xff]
    %v556 = vld [vmem:[#allocation2 + $0xb20] sm:$0xff]
    %v557 = vld [vmem:[#allocation2 + $0xb28] sm:$0xff]
    %v558 = vld [vmem:[#allocation2 + $0xb30] sm:$0xff]
    %v559 = vld [vmem:[#allocation2 + $0xb38] sm:$0xff]
    %v560 = vld [vmem:[#allocation2 + $0xb40] sm:$0xff]
    %v561 = vld [vmem:[#allocation2 + $0xb48] sm:$0xff]
    %v562 = vld [vmem:[#allocation2 + $0xb50] sm:$0xff]
    %v563 = vld [vmem:[#allocation2 + $0xb58] sm:$0xff]
    %v564 = vld [vmem:[#allocation2 + $0xb60] sm:$0xff]
    %v565 = vld [vmem:[#allocation2 + $0xb68] sm:$0xff]
    %v566 = vld [vmem:[#allocation2 + $0xb70] sm:$0xff]
    %v567 = vld [vmem:[#allocation2 + $0xb78] sm:$0xff]
    %v568 = vld [vmem:[#allocation2 + $0xb80] sm:$0xff]
    %v569 = vld [vmem:[#allocation2 + $0xb88] sm:$0xff]
    %v570 = vld [vmem:[#allocation2 + $0xb90] sm:$0xff]
    %v571 = vld [vmem:[#allocation2 + $0xb98] sm:$0xff]
    %v572 = vld [vmem:[#allocation2 + $0xba0] sm:$0xff]
    %v573 = vld [vmem:[#allocation2 + $0xba8] sm:$0xff]
    %v574 = vld [vmem:[#allocation2 + $0xbb0] sm:$0xff]
    %v575 = vld [vmem:[#allocation2 + $0xbb8] sm:$0xff]
    %v576 = vld [vmem:[#allocation2 + $0xbc0] sm:$0xff]
    %v577 = vld [vmem:[#allocation2 + $0xbc8] sm:$0xff]
    %v578 = vld [vmem:[#allocation2 + $0xbd0] sm:$0xff]
    %v579 = vld [vmem:[#allocation2 + $0xbd8] sm:$0xff]
    %v580 = vld [vmem:[#allocation2 + $0xbe0] sm:$0xff]
    %v581 = vld [vmem:[#allocation2 + $0xbe8] sm:$0xff]
    %v582 = vld [vmem:[#allocation2 + $0xbf0] sm:$0xff]
    %v583 = vld [vmem:[#allocation2 + $0xbf8] sm:$0xff]
    %v584 = vld [vmem:[#allocation2 + $0xc00] sm:$0xff]
    %v585 = vld [vmem:[#allocation2 + $0xc08] sm:$0xff]
    %v586 = vld [vmem:[#allocation2 + $0xc10] sm:$0xff]
    %v587 = vld [vmem:[#allocation2 + $0xc18] sm:$0xff]
    %v588 = vld [vmem:[#allocation2 + $0xc20] sm:$0xff]
    %v589 = vld [vmem:[#allocation2 + $0xc28] sm:$0xff]
    %v590 = vld [vmem:[#allocation2 + $0xc30] sm:$0xff]
    %v591 = vld [vmem:[#allocation2 + $0xc38] sm:$0xff]
    %v592 = vld [vmem:[#allocation2 + $0xc40] sm:$0xff]
    %v593 = vld [vmem:[#allocation2 + $0xc48] sm:$0xff]
    %v594 = vld [vmem:[#allocation2 + $0xc50] sm:$0xff]
    %v595 = vld [vmem:[#allocation2 + $0xc58] sm:$0xff]
    %v596 = vld [vmem:[#allocation2 + $0xc60] sm:$0xff]
    %v597 = vld [vmem:[#allocation2 + $0xc68] sm:$0xff]
    %v598 = vld [vmem:[#allocation2 + $0xc70] sm:$0xff]
    %v599 = vld [vmem:[#allocation2 + $0xc78] sm:$0xff]
    %v600 = vld [vmem:[#allocation2 + $0xc80] sm:$0xff]
    %v601 = vld [vmem:[#allocation2 + $0xc88] sm:$0xff]
    %v602 = vld [vmem:[#allocation2 + $0xc90] sm:$0xff]
    %v603 = vld [vmem:[#allocation2 + $0xc98] sm:$0xff]
    %v604 = vld [vmem:[#allocation2 + $0xca0] sm:$0xff]
    %v605 = vld [vmem:[#allocation2 + $0xca8] sm:$0xff]
    %v606 = vld [vmem:[#allocation2 + $0xcb0] sm:$0xff]
    %v607 = vld [vmem:[#allocation2 + $0xcb8] sm:$0xff]
    %v608 = vld [vmem:[#allocation2 + $0xcc0] sm:$0xff]
    %v609 = vld [vmem:[#allocation2 + $0xcc8] sm:$0xff]
    %v610 = vld [vmem:[#allocation2 + $0xcd0] sm:$0xff]
    %v611 = vld [vmem:[#allocation2 + $0xcd8] sm:$0xff]
    %v612 = vld [vmem:[#allocation2 + $0xce0] sm:$0xff]
    %v613 = vld [vmem:[#allocation2 + $0xce8] sm:$0xff]
    %v614 = vld [vmem:[#allocation2 + $0xcf0] sm:$0xff]
    %v615 = vld [vmem:[#allocation2 + $0xcf8] sm:$0xff]
    %v616 = vld [vmem:[#allocation2 + $0xd00] sm:$0xff]
    %v617 = vld [vmem:[#allocation2 + $0xd08] sm:$0xff]
    %v618 = vld [vmem:[#allocation2 + $0xd10] sm:$0xff]
    %v619 = vld [vmem:[#allocation2 + $0xd18] sm:$0xff]
    %v620 = vld [vmem:[#allocation2 + $0xd20] sm:$0xff]
    %v621 = vld [vmem:[#allocation2 + $0xd28] sm:$0xff]
    %v622 = vld [vmem:[#allocation2 + $0xd30] sm:$0xff]
    %v623 = vld [vmem:[#allocation2 + $0xd38] sm:$0xff]
    %v624 = vld [vmem:[#allocation2 + $0xd40] sm:$0xff]
    %v625 = vld [vmem:[#allocation2 + $0xd48] sm:$0xff]
    %v626 = vld [vmem:[#allocation2 + $0xd50] sm:$0xff]
    %v627 = vld [vmem:[#allocation2 + $0xd58] sm:$0xff]
    %v628 = vld [vmem:[#allocation2 + $0xd60] sm:$0xff]
    %v629 = vld [vmem:[#allocation2 + $0xd68] sm:$0xff]
    %v630 = vld [vmem:[#allocation2 + $0xd70] sm:$0xff]
    %v631 = vld [vmem:[#allocation2 + $0xd78] sm:$0xff]
    %v632 = vld [vmem:[#allocation2 + $0xd80] sm:$0xff]
    %v633 = vld [vmem:[#allocation2 + $0xd88] sm:$0xff]
    %v634 = vld [vmem:[#allocation2 + $0xd90] sm:$0xff]
    %v635 = vld [vmem:[#allocation2 + $0xd98] sm:$0xff]
    %v636 = vld [vmem:[#allocation2 + $0xda0] sm:$0xff]
    %v637 = vld [vmem:[#allocation2 + $0xda8] sm:$0xff]
    %v638 = vld [vmem:[#allocation2 + $0xdb0] sm:$0xff]
    %v639 = vld [vmem:[#allocation2 + $0xdb8] sm:$0xff]
    %v640 = vld [vmem:[#allocation2 + $0xdc0] sm:$0xff]
    %v641 = vld [vmem:[#allocation2 + $0xdc8] sm:$0xff]
    %v642 = vld [vmem:[#allocation2 + $0xdd0] sm:$0xff]
    %v643 = vld [vmem:[#allocation2 + $0xdd8] sm:$0xff]
    %v644 = vld [vmem:[#allocation2 + $0xde0] sm:$0xff]
    %v645 = vld [vmem:[#allocation2 + $0xde8] sm:$0xff]
    %v646 = vld [vmem:[#allocation2 + $0xdf0] sm:$0xff]
    %v647 = vld [vmem:[#allocation2 + $0xdf8] sm:$0xff]
    %v648 = vld [vmem:[#allocation2 + $0xe00] sm:$0xff]
    %v649 = vld [vmem:[#allocation2 + $0xe08] sm:$0xff]
    %v650 = vld [vmem:[#allocation2 + $0xe10] sm:$0xff]
    %v651 = vld [vmem:[#allocation2 + $0xe18] sm:$0xff]
    %v652 = vld [vmem:[#allocation2 + $0xe20] sm:$0xff]
    %v653 = vld [vmem:[#allocation2 + $0xe28] sm:$0xff]
    %v654 = vld [vmem:[#allocation2 + $0xe30] sm:$0xff]
    %v655 = vld [vmem:[#allocation2 + $0xe38] sm:$0xff]
    %v656 = vld [vmem:[#allocation2 + $0xe40] sm:$0xff]
    %v657 = vld [vmem:[#allocation2 + $0xe48] sm:$0xff]
    %v658 = vld [vmem:[#allocation2 + $0xe50] sm:$0xff]
    %v659 = vld [vmem:[#allocation2 + $0xe58] sm:$0xff]
    %v660 = vld [vmem:[#allocation2 + $0xe60] sm:$0xff]
    %v661 = vld [vmem:[#allocation2 + $0xe68] sm:$0xff]
    %v662 = vld [vmem:[#allocation2 + $0xe70] sm:$0xff]
    %v663 = vld [vmem:[#allocation2 + $0xe78] sm:$0xff]
    %v664 = vld [vmem:[#allocation2 + $0xe80] sm:$0xff]
    %v665 = vld [vmem:[#allocation2 + $0xe88] sm:$0xff]
    %v666 = vld [vmem:[#allocation2 + $0xe90] sm:$0xff]
    %v667 = vld [vmem:[#allocation2 + $0xe98] sm:$0xff]
    %v668 = vld [vmem:[#allocation2 + $0xea0] sm:$0xff]
    %v669 = vld [vmem:[#allocation2 + $0xea8] sm:$0xff]
    %v670 = vld [vmem:[#allocation2 + $0xeb0] sm:$0xff]
    %v671 = vld [vmem:[#allocation2 + $0xeb8] sm:$0xff]
    %v672 = vld [vmem:[#allocation2 + $0xec0] sm:$0xff]
    %v673 = vld [vmem:[#allocation2 + $0xec8] sm:$0xff]
    %v674 = vld [vmem:[#allocation2 + $0xed0] sm:$0xff]
    %v675 = vld [vmem:[#allocation2 + $0xed8] sm:$0xff]
    %v676 = vld [vmem:[#allocation2 + $0xee0] sm:$0xff]
    %v677 = vld [vmem:[#allocation2 + $0xee8] sm:$0xff]
    %v678 = vld [vmem:[#allocation2 + $0xef0] sm:$0xff]
    %v679 = vld [vmem:[#allocation2 + $0xef8] sm:$0xff]
    %v680 = vld [vmem:[#allocation2 + $0xf00] sm:$0xff]
    %v681 = vld [vmem:[#allocation2 + $0xf08] sm:$0xff]
    %v682 = vld [vmem:[#allocation2 + $0xf10] sm:$0xff]
    %v683 = vld [vmem:[#allocation2 + $0xf18] sm:$0xff]
    %v684 = vld [vmem:[#allocation2 + $0xf20] sm:$0xff]
    %v685 = vld [vmem:[#allocation2 + $0xf28] sm:$0xff]
    %v686 = vld [vmem:[#allocation2 + $0xf30] sm:$0xff]
    %v687 = vld [vmem:[#allocation2 + $0xf38] sm:$0xff]
    %v688 = vld [vmem:[#allocation2 + $0xf40] sm:$0xff]
    %v689 = vld [vmem:[#allocation2 + $0xf48] sm:$0xff]
    %v690 = vld [vmem:[#allocation2 + $0xf50] sm:$0xff]
    %v691 = vld [vmem:[#allocation2 + $0xf58] sm:$0xff]
    %v692 = vld [vmem:[#allocation2 + $0xf60] sm:$0xff]
    %v693 = vld [vmem:[#allocation2 + $0xf68] sm:$0xff]
    %v694 = vld [vmem:[#allocation2 + $0xf70] sm:$0xff]
    %v695 = vld [vmem:[#allocation2 + $0xf78] sm:$0xff]
    %v696 = vld [vmem:[#allocation2 + $0xf80] sm:$0xff]
    %v697 = vld [vmem:[#allocation2 + $0xf88] sm:$0xff]
    %v698 = vld [vmem:[#allocation2 + $0xf90] sm:$0xff]
    %v699 = vld [vmem:[#allocation2 + $0xf98] sm:$0xff]
    %v700 = vld [vmem:[#allocation2 + $0xfa0] sm:$0xff]
    %v701 = vld [vmem:[#allocation2 + $0xfa8] sm:$0xff]
    %v702 = vld [vmem:[#allocation2 + $0xfb0] sm:$0xff]
    %v703 = vld [vmem:[#allocation2 + $0xfb8] sm:$0xff]
    %v704 = vld [vmem:[#allocation2 + $0xfc0] sm:$0xff]
    %v705 = vld [vmem:[#allocation2 + $0xfc8] sm:$0xff]
    %v706 = vld [vmem:[#allocation2 + $0xfd0] sm:$0xff]
    %v707 = vld [vmem:[#allocation2 + $0xfd8] sm:$0xff]
    %v708 = vld [vmem:[#allocation2 + $0xfe0] sm:$0xff]
    %v709 = vld [vmem:[#allocation2 + $0xfe8] sm:$0xff]
    %v710 = vld [vmem:[#allocation2 + $0xff0] sm:$0xff]
    %v711 = vld [vmem:[#allocation2 + $0xff8] sm:$0xff]
    %v712 = vld [vmem:[#allocation4] sm:$0xff]
    %v714 = vperm.slane %v712, 0
    %v715 = vperm.slane %v712, 1
    %v716 = vperm.slane %v712, 2
    %v717 = vperm.slane %v712, 3
    %v718 = vperm.slane %v712, 4
    %v719 = vperm.slane %v712, 5
    %v720 = vperm.slane %v712, 6
    %v721 = vperm.slane %v712, 7
    %v1242 = vunpack.c.l.b16 %v200
    %v1243 = vunpack.c.h.b16 %v200
    %v1244 = vunpack.c.l.b16 %v201
    %v1245 = vunpack.c.h.b16 %v201
    %v1246 = vunpack.c.l.b16 %v202
    %v1247 = vunpack.c.h.b16 %v202
    %v1248 = vunpack.c.l.b16 %v203
    %v1249 = vunpack.c.h.b16 %v203
    %v1250 = vunpack.c.l.b16 %v204
    %v1251 = vunpack.c.h.b16 %v204
    %v1252 = vunpack.c.l.b16 %v205
    %v1253 = vunpack.c.h.b16 %v205
    %v1254 = vunpack.c.l.b16 %v206
    %v1255 = vunpack.c.h.b16 %v206
    %v1256 = vunpack.c.l.b16 %v207
    %v1257 = vunpack.c.h.b16 %v207
    %v1258 = vunpack.c.l.b16 %v208
    %v1259 = vunpack.c.h.b16 %v208
    %v1260 = vunpack.c.l.b16 %v209
    %v1261 = vunpack.c.h.b16 %v209
    %v1262 = vunpack.c.l.b16 %v210
    %v1263 = vunpack.c.h.b16 %v210
    %v1264 = vunpack.c.l.b16 %v211
    %v1265 = vunpack.c.h.b16 %v211
    %v1266 = vunpack.c.l.b16 %v212
    %v1267 = vunpack.c.h.b16 %v212
    %v1268 = vunpack.c.l.b16 %v213
    %v1269 = vunpack.c.h.b16 %v213
    %v1270 = vunpack.c.l.b16 %v214
    %v1271 = vunpack.c.h.b16 %v214
    %v1272 = vunpack.c.l.b16 %v215
    %v1273 = vunpack.c.h.b16 %v215
    %v1274 = vunpack.c.l.b16 %v216
    %v1275 = vunpack.c.h.b16 %v216
    %v1276 = vunpack.c.l.b16 %v217
    %v1277 = vunpack.c.h.b16 %v217
    %v1278 = vunpack.c.l.b16 %v218
    %v1279 = vunpack.c.h.b16 %v218
    %v1280 = vunpack.c.l.b16 %v219
    %v1281 = vunpack.c.h.b16 %v219
    %v1282 = vunpack.c.l.b16 %v220
    %v1283 = vunpack.c.h.b16 %v220
    %v1284 = vunpack.c.l.b16 %v221
    %v1285 = vunpack.c.h.b16 %v221
    %v1286 = vunpack.c.l.b16 %v222
    %v1287 = vunpack.c.h.b16 %v222
    %v1288 = vunpack.c.l.b16 %v223
    %v1289 = vunpack.c.h.b16 %v223
    %v1290 = vunpack.c.l.b16 %v224
    %v1291 = vunpack.c.h.b16 %v224
    %v1292 = vunpack.c.l.b16 %v225
    %v1293 = vunpack.c.h.b16 %v225
    %v1294 = vunpack.c.l.b16 %v226
    %v1295 = vunpack.c.h.b16 %v226
    %v1296 = vunpack.c.l.b16 %v227
    %v1297 = vunpack.c.h.b16 %v227
    %v1298 = vunpack.c.l.b16 %v228
    %v1299 = vunpack.c.h.b16 %v228
    %v1300 = vunpack.c.l.b16 %v229
    %v1301 = vunpack.c.h.b16 %v229
    %v1302 = vunpack.c.l.b16 %v230
    %v1303 = vunpack.c.h.b16 %v230
    %v1304 = vunpack.c.l.b16 %v231
    %v1305 = vunpack.c.h.b16 %v231
    %v1306 = vunpack.c.l.b16 %v232
    %v1307 = vunpack.c.h.b16 %v232
    %v1308 = vunpack.c.l.b16 %v233
    %v1309 = vunpack.c.h.b16 %v233
    %v1310 = vunpack.c.l.b16 %v234
    %v1311 = vunpack.c.h.b16 %v234
    %v1312 = vunpack.c.l.b16 %v235
    %v1313 = vunpack.c.h.b16 %v235
    %v1314 = vunpack.c.l.b16 %v236
    %v1315 = vunpack.c.h.b16 %v236
    %v1316 = vunpack.c.l.b16 %v237
    %v1317 = vunpack.c.h.b16 %v237
    %v1318 = vunpack.c.l.b16 %v238
    %v1319 = vunpack.c.h.b16 %v238
    %v1320 = vunpack.c.l.b16 %v239
    %v1321 = vunpack.c.h.b16 %v239
    %v1322 = vunpack.c.l.b16 %v240
    %v1323 = vunpack.c.h.b16 %v240
    %v1324 = vunpack.c.l.b16 %v241
    %v1325 = vunpack.c.h.b16 %v241
    %v1326 = vunpack.c.l.b16 %v242
    %v1327 = vunpack.c.h.b16 %v242
    %v1328 = vunpack.c.l.b16 %v243
    %v1329 = vunpack.c.h.b16 %v243
    %v1330 = vunpack.c.l.b16 %v244
    %v1331 = vunpack.c.h.b16 %v244
    %v1332 = vunpack.c.l.b16 %v245
    %v1333 = vunpack.c.h.b16 %v245
    %v1334 = vunpack.c.l.b16 %v246
    %v1335 = vunpack.c.h.b16 %v246
    %v1336 = vunpack.c.l.b16 %v247
    %v1337 = vunpack.c.h.b16 %v247
    %v1338 = vunpack.c.l.b16 %v248
    %v1339 = vunpack.c.h.b16 %v248
    %v1340 = vunpack.c.l.b16 %v249
    %v1341 = vunpack.c.h.b16 %v249
    %v1342 = vunpack.c.l.b16 %v250
    %v1343 = vunpack.c.h.b16 %v250
    %v1344 = vunpack.c.l.b16 %v251
    %v1345 = vunpack.c.h.b16 %v251
    %v1346 = vunpack.c.l.b16 %v252
    %v1347 = vunpack.c.h.b16 %v252
    %v1348 = vunpack.c.l.b16 %v253
    %v1349 = vunpack.c.h.b16 %v253
    %v1350 = vunpack.c.l.b16 %v254
    %v1351 = vunpack.c.h.b16 %v254
    %v1352 = vunpack.c.l.b16 %v255
    %v1353 = vunpack.c.h.b16 %v255
    %v1354 = vunpack.c.l.b16 %v256
    %v1355 = vunpack.c.h.b16 %v256
    %v1356 = vunpack.c.l.b16 %v257
    %v1357 = vunpack.c.h.b16 %v257
    %v1358 = vunpack.c.l.b16 %v258
    %v1359 = vunpack.c.h.b16 %v258
    %v1360 = vunpack.c.l.b16 %v259
    %v1361 = vunpack.c.h.b16 %v259
    %v1362 = vunpack.c.l.b16 %v260
    %v1363 = vunpack.c.h.b16 %v260
    %v1364 = vunpack.c.l.b16 %v261
    %v1365 = vunpack.c.h.b16 %v261
    %v1366 = vunpack.c.l.b16 %v262
    %v1367 = vunpack.c.h.b16 %v262
    %v1368 = vunpack.c.l.b16 %v263
    %v1369 = vunpack.c.h.b16 %v263
    %v1370 = vunpack.c.l.b16 %v264
    %v1371 = vunpack.c.h.b16 %v264
    %v1372 = vunpack.c.l.b16 %v265
    %v1373 = vunpack.c.h.b16 %v265
    %v1374 = vunpack.c.l.b16 %v266
    %v1375 = vunpack.c.h.b16 %v266
    %v1376 = vunpack.c.l.b16 %v267
    %v1377 = vunpack.c.h.b16 %v267
    %v1378 = vunpack.c.l.b16 %v268
    %v1379 = vunpack.c.h.b16 %v268
    %v1380 = vunpack.c.l.b16 %v269
    %v1381 = vunpack.c.h.b16 %v269
    %v1382 = vunpack.c.l.b16 %v270
    %v1383 = vunpack.c.h.b16 %v270
    %v1384 = vunpack.c.l.b16 %v271
    %v1385 = vunpack.c.h.b16 %v271
    %v1386 = vunpack.c.l.b16 %v272
    %v1387 = vunpack.c.h.b16 %v272
    %v1388 = vunpack.c.l.b16 %v273
    %v1389 = vunpack.c.h.b16 %v273
    %v1390 = vunpack.c.l.b16 %v274
    %v1391 = vunpack.c.h.b16 %v274
    %v1392 = vunpack.c.l.b16 %v275
    %v1393 = vunpack.c.h.b16 %v275
    %v1394 = vunpack.c.l.b16 %v276
    %v1395 = vunpack.c.h.b16 %v276
    %v1396 = vunpack.c.l.b16 %v277
    %v1397 = vunpack.c.h.b16 %v277
    %v1398 = vunpack.c.l.b16 %v278
    %v1399 = vunpack.c.h.b16 %v278
    %v1400 = vunpack.c.l.b16 %v279
    %v1401 = vunpack.c.h.b16 %v279
    %v1402 = vunpack.c.l.b16 %v280
    %v1403 = vunpack.c.h.b16 %v280
    %v1404 = vunpack.c.l.b16 %v281
    %v1405 = vunpack.c.h.b16 %v281
    %v1406 = vunpack.c.l.b16 %v282
    %v1407 = vunpack.c.h.b16 %v282
    %v1408 = vunpack.c.l.b16 %v283
    %v1409 = vunpack.c.h.b16 %v283
    %v1410 = vunpack.c.l.b16 %v284
    %v1411 = vunpack.c.h.b16 %v284
    %v1412 = vunpack.c.l.b16 %v285
    %v1413 = vunpack.c.h.b16 %v285
    %v1414 = vunpack.c.l.b16 %v286
    %v1415 = vunpack.c.h.b16 %v286
    %v1416 = vunpack.c.l.b16 %v287
    %v1417 = vunpack.c.h.b16 %v287
    %v1418 = vunpack.c.l.b16 %v288
    %v1419 = vunpack.c.h.b16 %v288
    %v1420 = vunpack.c.l.b16 %v289
    %v1421 = vunpack.c.h.b16 %v289
    %v1422 = vunpack.c.l.b16 %v290
    %v1423 = vunpack.c.h.b16 %v290
    %v1424 = vunpack.c.l.b16 %v291
    %v1425 = vunpack.c.h.b16 %v291
    %v1426 = vunpack.c.l.b16 %v292
    %v1427 = vunpack.c.h.b16 %v292
    %v1428 = vunpack.c.l.b16 %v293
    %v1429 = vunpack.c.h.b16 %v293
    %v1430 = vunpack.c.l.b16 %v294
    %v1431 = vunpack.c.h.b16 %v294
    %v1432 = vunpack.c.l.b16 %v295
    %v1433 = vunpack.c.h.b16 %v295
    %v1434 = vunpack.c.l.b16 %v296
    %v1435 = vunpack.c.h.b16 %v296
    %v1436 = vunpack.c.l.b16 %v297
    %v1437 = vunpack.c.h.b16 %v297
    %v1438 = vunpack.c.l.b16 %v298
    %v1439 = vunpack.c.h.b16 %v298
    %v1440 = vunpack.c.l.b16 %v299
    %v1441 = vunpack.c.h.b16 %v299
    %v1442 = vunpack.c.l.b16 %v300
    %v1443 = vunpack.c.h.b16 %v300
    %v1444 = vunpack.c.l.b16 %v301
    %v1445 = vunpack.c.h.b16 %v301
    %v1446 = vunpack.c.l.b16 %v302
    %v1447 = vunpack.c.h.b16 %v302
    %v1448 = vunpack.c.l.b16 %v303
    %v1449 = vunpack.c.h.b16 %v303
    %v1450 = vunpack.c.l.b16 %v304
    %v1451 = vunpack.c.h.b16 %v304
    %v1452 = vunpack.c.l.b16 %v305
    %v1453 = vunpack.c.h.b16 %v305
    %v1454 = vunpack.c.l.b16 %v306
    %v1455 = vunpack.c.h.b16 %v306
    %v1456 = vunpack.c.l.b16 %v307
    %v1457 = vunpack.c.h.b16 %v307
    %v1458 = vunpack.c.l.b16 %v308
    %v1459 = vunpack.c.h.b16 %v308
    %v1460 = vunpack.c.l.b16 %v309
    %v1461 = vunpack.c.h.b16 %v309
    %v1462 = vunpack.c.l.b16 %v310
    %v1463 = vunpack.c.h.b16 %v310
    %v1464 = vunpack.c.l.b16 %v311
    %v1465 = vunpack.c.h.b16 %v311
    %v1466 = vunpack.c.l.b16 %v312
    %v1467 = vunpack.c.h.b16 %v312
    %v1468 = vunpack.c.l.b16 %v313
    %v1469 = vunpack.c.h.b16 %v313
    %v1470 = vunpack.c.l.b16 %v314
    %v1471 = vunpack.c.h.b16 %v314
    %v1472 = vunpack.c.l.b16 %v315
    %v1473 = vunpack.c.h.b16 %v315
    %v1474 = vunpack.c.l.b16 %v316
    %v1475 = vunpack.c.h.b16 %v316
    %v1476 = vunpack.c.l.b16 %v317
    %v1477 = vunpack.c.h.b16 %v317
    %v1478 = vunpack.c.l.b16 %v318
    %v1479 = vunpack.c.h.b16 %v318
    %v1480 = vunpack.c.l.b16 %v319
    %v1481 = vunpack.c.h.b16 %v319
    %v1482 = vunpack.c.l.b16 %v320
    %v1483 = vunpack.c.h.b16 %v320
    %v1484 = vunpack.c.l.b16 %v321
    %v1485 = vunpack.c.h.b16 %v321
    %v1486 = vunpack.c.l.b16 %v322
    %v1487 = vunpack.c.h.b16 %v322
    %v1488 = vunpack.c.l.b16 %v323
    %v1489 = vunpack.c.h.b16 %v323
    %v1490 = vunpack.c.l.b16 %v324
    %v1491 = vunpack.c.h.b16 %v324
    %v1492 = vunpack.c.l.b16 %v325
    %v1493 = vunpack.c.h.b16 %v325
    %v1494 = vunpack.c.l.b16 %v326
    %v1495 = vunpack.c.h.b16 %v326
    %v1496 = vunpack.c.l.b16 %v327
    %v1497 = vunpack.c.h.b16 %v327
    %v1498 = vunpack.c.l.b16 %v328
    %v1499 = vunpack.c.h.b16 %v328
    %v1500 = vunpack.c.l.b16 %v329
    %v1501 = vunpack.c.h.b16 %v329
    %v1502 = vunpack.c.l.b16 %v330
    %v1503 = vunpack.c.h.b16 %v330
    %v1504 = vunpack.c.l.b16 %v331
    %v1505 = vunpack.c.h.b16 %v331
    %v1506 = vunpack.c.l.b16 %v332
    %v1507 = vunpack.c.h.b16 %v332
    %v1508 = vunpack.c.l.b16 %v333
    %v1509 = vunpack.c.h.b16 %v333
    %v1510 = vunpack.c.l.b16 %v334
    %v1511 = vunpack.c.h.b16 %v334
    %v1512 = vunpack.c.l.b16 %v335
    %v1513 = vunpack.c.h.b16 %v335
    %v1514 = vunpack.c.l.b16 %v336
    %v1515 = vunpack.c.h.b16 %v336
    %v1516 = vunpack.c.l.b16 %v337
    %v1517 = vunpack.c.h.b16 %v337
    %v1518 = vunpack.c.l.b16 %v338
    %v1519 = vunpack.c.h.b16 %v338
    %v1520 = vunpack.c.l.b16 %v339
    %v1521 = vunpack.c.h.b16 %v339
    %v1522 = vunpack.c.l.b16 %v340
    %v1523 = vunpack.c.h.b16 %v340
    %v1524 = vunpack.c.l.b16 %v341
    %v1525 = vunpack.c.h.b16 %v341
    %v1526 = vunpack.c.l.b16 %v342
    %v1527 = vunpack.c.h.b16 %v342
    %v1528 = vunpack.c.l.b16 %v343
    %v1529 = vunpack.c.h.b16 %v343
    %v1530 = vunpack.c.l.b16 %v344
    %v1531 = vunpack.c.h.b16 %v344
    %v1532 = vunpack.c.l.b16 %v345
    %v1533 = vunpack.c.h.b16 %v345
    %v1534 = vunpack.c.l.b16 %v346
    %v1535 = vunpack.c.h.b16 %v346
    %v1536 = vunpack.c.l.b16 %v347
    %v1537 = vunpack.c.h.b16 %v347
    %v1538 = vunpack.c.l.b16 %v348
    %v1539 = vunpack.c.h.b16 %v348
    %v1540 = vunpack.c.l.b16 %v349
    %v1541 = vunpack.c.h.b16 %v349
    %v1542 = vunpack.c.l.b16 %v350
    %v1543 = vunpack.c.h.b16 %v350
    %v1544 = vunpack.c.l.b16 %v351
    %v1545 = vunpack.c.h.b16 %v351
    %v1546 = vunpack.c.l.b16 %v352
    %v1547 = vunpack.c.h.b16 %v352
    %v1548 = vunpack.c.l.b16 %v353
    %v1549 = vunpack.c.h.b16 %v353
    %v1550 = vunpack.c.l.b16 %v354
    %v1551 = vunpack.c.h.b16 %v354
    %v1552 = vunpack.c.l.b16 %v355
    %v1553 = vunpack.c.h.b16 %v355
    %v1554 = vunpack.c.l.b16 %v356
    %v1555 = vunpack.c.h.b16 %v356
    %v1556 = vunpack.c.l.b16 %v357
    %v1557 = vunpack.c.h.b16 %v357
    %v1558 = vunpack.c.l.b16 %v358
    %v1559 = vunpack.c.h.b16 %v358
    %v1560 = vunpack.c.l.b16 %v359
    %v1561 = vunpack.c.h.b16 %v359
    %v1562 = vunpack.c.l.b16 %v360
    %v1563 = vunpack.c.h.b16 %v360
    %v1564 = vunpack.c.l.b16 %v361
    %v1565 = vunpack.c.h.b16 %v361
    %v1566 = vunpack.c.l.b16 %v362
    %v1567 = vunpack.c.h.b16 %v362
    %v1568 = vunpack.c.l.b16 %v363
    %v1569 = vunpack.c.h.b16 %v363
    %v1570 = vunpack.c.l.b16 %v364
    %v1571 = vunpack.c.h.b16 %v364
    %v1572 = vunpack.c.l.b16 %v365
    %v1573 = vunpack.c.h.b16 %v365
    %v1574 = vunpack.c.l.b16 %v366
    %v1575 = vunpack.c.h.b16 %v366
    %v1576 = vunpack.c.l.b16 %v367
    %v1577 = vunpack.c.h.b16 %v367
    %v1578 = vunpack.c.l.b16 %v368
    %v1579 = vunpack.c.h.b16 %v368
    %v1580 = vunpack.c.l.b16 %v369
    %v1581 = vunpack.c.h.b16 %v369
    %v1582 = vunpack.c.l.b16 %v370
    %v1583 = vunpack.c.h.b16 %v370
    %v1584 = vunpack.c.l.b16 %v371
    %v1585 = vunpack.c.h.b16 %v371
    %v1586 = vunpack.c.l.b16 %v372
    %v1587 = vunpack.c.h.b16 %v372
    %v1588 = vunpack.c.l.b16 %v373
    %v1589 = vunpack.c.h.b16 %v373
    %v1590 = vunpack.c.l.b16 %v374
    %v1591 = vunpack.c.h.b16 %v374
    %v1592 = vunpack.c.l.b16 %v375
    %v1593 = vunpack.c.h.b16 %v375
    %v1594 = vunpack.c.l.b16 %v376
    %v1595 = vunpack.c.h.b16 %v376
    %v1596 = vunpack.c.l.b16 %v377
    %v1597 = vunpack.c.h.b16 %v377
    %v1598 = vunpack.c.l.b16 %v378
    %v1599 = vunpack.c.h.b16 %v378
    %v1600 = vunpack.c.l.b16 %v379
    %v1601 = vunpack.c.h.b16 %v379
    %v1602 = vunpack.c.l.b16 %v380
    %v1603 = vunpack.c.h.b16 %v380
    %v1604 = vunpack.c.l.b16 %v381
    %v1605 = vunpack.c.h.b16 %v381
    %v1606 = vunpack.c.l.b16 %v382
    %v1607 = vunpack.c.h.b16 %v382
    %v1608 = vunpack.c.l.b16 %v383
    %v1609 = vunpack.c.h.b16 %v383
    %v1610 = vunpack.c.l.b16 %v384
    %v1611 = vunpack.c.h.b16 %v384
    %v1612 = vunpack.c.l.b16 %v385
    %v1613 = vunpack.c.h.b16 %v385
    %v1614 = vunpack.c.l.b16 %v386
    %v1615 = vunpack.c.h.b16 %v386
    %v1616 = vunpack.c.l.b16 %v387
    %v1617 = vunpack.c.h.b16 %v387
    %v1618 = vunpack.c.l.b16 %v388
    %v1619 = vunpack.c.h.b16 %v388
    %v1620 = vunpack.c.l.b16 %v389
    %v1621 = vunpack.c.h.b16 %v389
    %v1622 = vunpack.c.l.b16 %v390
    %v1623 = vunpack.c.h.b16 %v390
    %v1624 = vunpack.c.l.b16 %v391
    %v1625 = vunpack.c.h.b16 %v391
    %v1626 = vunpack.c.l.b16 %v392
    %v1627 = vunpack.c.h.b16 %v392
    %v1628 = vunpack.c.l.b16 %v393
    %v1629 = vunpack.c.h.b16 %v393
    %v1630 = vunpack.c.l.b16 %v394
    %v1631 = vunpack.c.h.b16 %v394
    %v1632 = vunpack.c.l.b16 %v395
    %v1633 = vunpack.c.h.b16 %v395
    %v1634 = vunpack.c.l.b16 %v396
    %v1635 = vunpack.c.h.b16 %v396
    %v1636 = vunpack.c.l.b16 %v397
    %v1637 = vunpack.c.h.b16 %v397
    %v1638 = vunpack.c.l.b16 %v398
    %v1639 = vunpack.c.h.b16 %v398
    %v1640 = vunpack.c.l.b16 %v399
    %v1641 = vunpack.c.h.b16 %v399
    %v1642 = vunpack.c.l.b16 %v400
    %v1643 = vunpack.c.h.b16 %v400
    %v1644 = vunpack.c.l.b16 %v401
    %v1645 = vunpack.c.h.b16 %v401
    %v1646 = vunpack.c.l.b16 %v402
    %v1647 = vunpack.c.h.b16 %v402
    %v1648 = vunpack.c.l.b16 %v403
    %v1649 = vunpack.c.h.b16 %v403
    %v1650 = vunpack.c.l.b16 %v404
    %v1651 = vunpack.c.h.b16 %v404
    %v1652 = vunpack.c.l.b16 %v405
    %v1653 = vunpack.c.h.b16 %v405
    %v1654 = vunpack.c.l.b16 %v406
    %v1655 = vunpack.c.h.b16 %v406
    %v1656 = vunpack.c.l.b16 %v407
    %v1657 = vunpack.c.h.b16 %v407
    %v1658 = vunpack.c.l.b16 %v408
    %v1659 = vunpack.c.h.b16 %v408
    %v1660 = vunpack.c.l.b16 %v409
    %v1661 = vunpack.c.h.b16 %v409
    %v1662 = vunpack.c.l.b16 %v410
    %v1663 = vunpack.c.h.b16 %v410
    %v1664 = vunpack.c.l.b16 %v411
    %v1665 = vunpack.c.h.b16 %v411
    %v1666 = vunpack.c.l.b16 %v412
    %v1667 = vunpack.c.h.b16 %v412
    %v1668 = vunpack.c.l.b16 %v413
    %v1669 = vunpack.c.h.b16 %v413
    %v1670 = vunpack.c.l.b16 %v414
    %v1671 = vunpack.c.h.b16 %v414
    %v1672 = vunpack.c.l.b16 %v415
    %v1673 = vunpack.c.h.b16 %v415
    %v1674 = vunpack.c.l.b16 %v416
    %v1675 = vunpack.c.h.b16 %v416
    %v1676 = vunpack.c.l.b16 %v417
    %v1677 = vunpack.c.h.b16 %v417
    %v1678 = vunpack.c.l.b16 %v418
    %v1679 = vunpack.c.h.b16 %v418
    %v1680 = vunpack.c.l.b16 %v419
    %v1681 = vunpack.c.h.b16 %v419
    %v1682 = vunpack.c.l.b16 %v420
    %v1683 = vunpack.c.h.b16 %v420
    %v1684 = vunpack.c.l.b16 %v421
    %v1685 = vunpack.c.h.b16 %v421
    %v1686 = vunpack.c.l.b16 %v422
    %v1687 = vunpack.c.h.b16 %v422
    %v1688 = vunpack.c.l.b16 %v423
    %v1689 = vunpack.c.h.b16 %v423
    %v1690 = vunpack.c.l.b16 %v424
    %v1691 = vunpack.c.h.b16 %v424
    %v1692 = vunpack.c.l.b16 %v425
    %v1693 = vunpack.c.h.b16 %v425
    %v1694 = vunpack.c.l.b16 %v426
    %v1695 = vunpack.c.h.b16 %v426
    %v1696 = vunpack.c.l.b16 %v427
    %v1697 = vunpack.c.h.b16 %v427
    %v1698 = vunpack.c.l.b16 %v428
    %v1699 = vunpack.c.h.b16 %v428
    %v1700 = vunpack.c.l.b16 %v429
    %v1701 = vunpack.c.h.b16 %v429
    %v1702 = vunpack.c.l.b16 %v430
    %v1703 = vunpack.c.h.b16 %v430
    %v1704 = vunpack.c.l.b16 %v431
    %v1705 = vunpack.c.h.b16 %v431
    %v1706 = vunpack.c.l.b16 %v432
    %v1707 = vunpack.c.h.b16 %v432
    %v1708 = vunpack.c.l.b16 %v433
    %v1709 = vunpack.c.h.b16 %v433
    %v1710 = vunpack.c.l.b16 %v434
    %v1711 = vunpack.c.h.b16 %v434
    %v1712 = vunpack.c.l.b16 %v435
    %v1713 = vunpack.c.h.b16 %v435
    %v1714 = vunpack.c.l.b16 %v436
    %v1715 = vunpack.c.h.b16 %v436
    %v1716 = vunpack.c.l.b16 %v437
    %v1717 = vunpack.c.h.b16 %v437
    %v1718 = vunpack.c.l.b16 %v438
    %v1719 = vunpack.c.h.b16 %v438
    %v1720 = vunpack.c.l.b16 %v439
    %v1721 = vunpack.c.h.b16 %v439
    %v1722 = vunpack.c.l.b16 %v440
    %v1723 = vunpack.c.h.b16 %v440
    %v1724 = vunpack.c.l.b16 %v441
    %v1725 = vunpack.c.h.b16 %v441
    %v1726 = vunpack.c.l.b16 %v442
    %v1727 = vunpack.c.h.b16 %v442
    %v1728 = vunpack.c.l.b16 %v443
    %v1729 = vunpack.c.h.b16 %v443
    %v1730 = vunpack.c.l.b16 %v444
    %v1731 = vunpack.c.h.b16 %v444
    %v1732 = vunpack.c.l.b16 %v445
    %v1733 = vunpack.c.h.b16 %v445
    %v1734 = vunpack.c.l.b16 %v446
    %v1735 = vunpack.c.h.b16 %v446
    %v1736 = vunpack.c.l.b16 %v447
    %v1737 = vunpack.c.h.b16 %v447
    %v1738 = vunpack.c.l.b16 %v448
    %v1739 = vunpack.c.h.b16 %v448
    %v1740 = vunpack.c.l.b16 %v449
    %v1741 = vunpack.c.h.b16 %v449
    %v1742 = vunpack.c.l.b16 %v450
    %v1743 = vunpack.c.h.b16 %v450
    %v1744 = vunpack.c.l.b16 %v451
    %v1745 = vunpack.c.h.b16 %v451
    %v1746 = vunpack.c.l.b16 %v452
    %v1747 = vunpack.c.h.b16 %v452
    %v1748 = vunpack.c.l.b16 %v453
    %v1749 = vunpack.c.h.b16 %v453
    %v1750 = vunpack.c.l.b16 %v454
    %v1751 = vunpack.c.h.b16 %v454
    %v1752 = vunpack.c.l.b16 %v455
    %v1753 = vunpack.c.h.b16 %v455
    %v1754 = vunpack.c.l.b16 %v456
    %v1755 = vunpack.c.h.b16 %v456
    %v1756 = vunpack.c.l.b16 %v457
    %v1757 = vunpack.c.h.b16 %v457
    %v1758 = vunpack.c.l.b16 %v458
    %v1759 = vunpack.c.h.b16 %v458
    %v1760 = vunpack.c.l.b16 %v459
    %v1761 = vunpack.c.h.b16 %v459
    %v1762 = vunpack.c.l.b16 %v460
    %v1763 = vunpack.c.h.b16 %v460
    %v1764 = vunpack.c.l.b16 %v461
    %v1765 = vunpack.c.h.b16 %v461
    %v1766 = vunpack.c.l.b16 %v462
    %v1767 = vunpack.c.h.b16 %v462
    %v1768 = vunpack.c.l.b16 %v463
    %v1769 = vunpack.c.h.b16 %v463
    %v1770 = vunpack.c.l.b16 %v464
    %v1771 = vunpack.c.h.b16 %v464
    %v1772 = vunpack.c.l.b16 %v465
    %v1773 = vunpack.c.h.b16 %v465
    %v1774 = vunpack.c.l.b16 %v466
    %v1775 = vunpack.c.h.b16 %v466
    %v1776 = vunpack.c.l.b16 %v467
    %v1777 = vunpack.c.h.b16 %v467
    %v1778 = vunpack.c.l.b16 %v468
    %v1779 = vunpack.c.h.b16 %v468
    %v1780 = vunpack.c.l.b16 %v469
    %v1781 = vunpack.c.h.b16 %v469
    %v1782 = vunpack.c.l.b16 %v470
    %v1783 = vunpack.c.h.b16 %v470
    %v1784 = vunpack.c.l.b16 %v471
    %v1785 = vunpack.c.h.b16 %v471
    %v1786 = vunpack.c.l.b16 %v472
    %v1787 = vunpack.c.h.b16 %v472
    %v1788 = vunpack.c.l.b16 %v473
    %v1789 = vunpack.c.h.b16 %v473
    %v1790 = vunpack.c.l.b16 %v474
    %v1791 = vunpack.c.h.b16 %v474
    %v1792 = vunpack.c.l.b16 %v475
    %v1793 = vunpack.c.h.b16 %v475
    %v1794 = vunpack.c.l.b16 %v476
    %v1795 = vunpack.c.h.b16 %v476
    %v1796 = vunpack.c.l.b16 %v477
    %v1797 = vunpack.c.h.b16 %v477
    %v1798 = vunpack.c.l.b16 %v478
    %v1799 = vunpack.c.h.b16 %v478
    %v1800 = vunpack.c.l.b16 %v479
    %v1801 = vunpack.c.h.b16 %v479
    %v1802 = vunpack.c.l.b16 %v480
    %v1803 = vunpack.c.h.b16 %v480
    %v1804 = vunpack.c.l.b16 %v481
    %v1805 = vunpack.c.h.b16 %v481
    %v1806 = vunpack.c.l.b16 %v482
    %v1807 = vunpack.c.h.b16 %v482
    %v1808 = vunpack.c.l.b16 %v483
    %v1809 = vunpack.c.h.b16 %v483
    %v1810 = vunpack.c.l.b16 %v484
    %v1811 = vunpack.c.h.b16 %v484
    %v1812 = vunpack.c.l.b16 %v485
    %v1813 = vunpack.c.h.b16 %v485
    %v1814 = vunpack.c.l.b16 %v486
    %v1815 = vunpack.c.h.b16 %v486
    %v1816 = vunpack.c.l.b16 %v487
    %v1817 = vunpack.c.h.b16 %v487
    %v1818 = vunpack.c.l.b16 %v488
    %v1819 = vunpack.c.h.b16 %v488
    %v1820 = vunpack.c.l.b16 %v489
    %v1821 = vunpack.c.h.b16 %v489
    %v1822 = vunpack.c.l.b16 %v490
    %v1823 = vunpack.c.h.b16 %v490
    %v1824 = vunpack.c.l.b16 %v491
    %v1825 = vunpack.c.h.b16 %v491
    %v1826 = vunpack.c.l.b16 %v492
    %v1827 = vunpack.c.h.b16 %v492
    %v1828 = vunpack.c.l.b16 %v493
    %v1829 = vunpack.c.h.b16 %v493
    %v1830 = vunpack.c.l.b16 %v494
    %v1831 = vunpack.c.h.b16 %v494
    %v1832 = vunpack.c.l.b16 %v495
    %v1833 = vunpack.c.h.b16 %v495
    %v1834 = vunpack.c.l.b16 %v496
    %v1835 = vunpack.c.h.b16 %v496
    %v1836 = vunpack.c.l.b16 %v497
    %v1837 = vunpack.c.h.b16 %v497
    %v1838 = vunpack.c.l.b16 %v498
    %v1839 = vunpack.c.h.b16 %v498
    %v1840 = vunpack.c.l.b16 %v499
    %v1841 = vunpack.c.h.b16 %v499
    %v1842 = vunpack.c.l.b16 %v500
    %v1843 = vunpack.c.h.b16 %v500
    %v1844 = vunpack.c.l.b16 %v501
    %v1845 = vunpack.c.h.b16 %v501
    %v1846 = vunpack.c.l.b16 %v502
    %v1847 = vunpack.c.h.b16 %v502
    %v1848 = vunpack.c.l.b16 %v503
    %v1849 = vunpack.c.h.b16 %v503
    %v1850 = vunpack.c.l.b16 %v504
    %v1851 = vunpack.c.h.b16 %v504
    %v1852 = vunpack.c.l.b16 %v505
    %v1853 = vunpack.c.h.b16 %v505
    %v1854 = vunpack.c.l.b16 %v506
    %v1855 = vunpack.c.h.b16 %v506
    %v1856 = vunpack.c.l.b16 %v507
    %v1857 = vunpack.c.h.b16 %v507
    %v1858 = vunpack.c.l.b16 %v508
    %v1859 = vunpack.c.h.b16 %v508
    %v1860 = vunpack.c.l.b16 %v509
    %v1861 = vunpack.c.h.b16 %v509
    %v1862 = vunpack.c.l.b16 %v510
    %v1863 = vunpack.c.h.b16 %v510
    %v1864 = vunpack.c.l.b16 %v511
    %v1865 = vunpack.c.h.b16 %v511
    %v1866 = vunpack.c.l.b16 %v512
    %v1867 = vunpack.c.h.b16 %v512
    %v1868 = vunpack.c.l.b16 %v513
    %v1869 = vunpack.c.h.b16 %v513
    %v1870 = vunpack.c.l.b16 %v514
    %v1871 = vunpack.c.h.b16 %v514
    %v1872 = vunpack.c.l.b16 %v515
    %v1873 = vunpack.c.h.b16 %v515
    %v1874 = vunpack.c.l.b16 %v516
    %v1875 = vunpack.c.h.b16 %v516
    %v1876 = vunpack.c.l.b16 %v517
    %v1877 = vunpack.c.h.b16 %v517
    %v1878 = vunpack.c.l.b16 %v518
    %v1879 = vunpack.c.h.b16 %v518
    %v1880 = vunpack.c.l.b16 %v519
    %v1881 = vunpack.c.h.b16 %v519
    %v1882 = vunpack.c.l.b16 %v520
    %v1883 = vunpack.c.h.b16 %v520
    %v1884 = vunpack.c.l.b16 %v521
    %v1885 = vunpack.c.h.b16 %v521
    %v1886 = vunpack.c.l.b16 %v522
    %v1887 = vunpack.c.h.b16 %v522
    %v1888 = vunpack.c.l.b16 %v523
    %v1889 = vunpack.c.h.b16 %v523
    %v1890 = vunpack.c.l.b16 %v524
    %v1891 = vunpack.c.h.b16 %v524
    %v1892 = vunpack.c.l.b16 %v525
    %v1893 = vunpack.c.h.b16 %v525
    %v1894 = vunpack.c.l.b16 %v526
    %v1895 = vunpack.c.h.b16 %v526
    %v1896 = vunpack.c.l.b16 %v527
    %v1897 = vunpack.c.h.b16 %v527
    %v1898 = vunpack.c.l.b16 %v528
    %v1899 = vunpack.c.h.b16 %v528
    %v1900 = vunpack.c.l.b16 %v529
    %v1901 = vunpack.c.h.b16 %v529
    %v1902 = vunpack.c.l.b16 %v530
    %v1903 = vunpack.c.h.b16 %v530
    %v1904 = vunpack.c.l.b16 %v531
    %v1905 = vunpack.c.h.b16 %v531
    %v1906 = vunpack.c.l.b16 %v532
    %v1907 = vunpack.c.h.b16 %v532
    %v1908 = vunpack.c.l.b16 %v533
    %v1909 = vunpack.c.h.b16 %v533
    %v1910 = vunpack.c.l.b16 %v534
    %v1911 = vunpack.c.h.b16 %v534
    %v1912 = vunpack.c.l.b16 %v535
    %v1913 = vunpack.c.h.b16 %v535
    %v1914 = vunpack.c.l.b16 %v536
    %v1915 = vunpack.c.h.b16 %v536
    %v1916 = vunpack.c.l.b16 %v537
    %v1917 = vunpack.c.h.b16 %v537
    %v1918 = vunpack.c.l.b16 %v538
    %v1919 = vunpack.c.h.b16 %v538
    %v1920 = vunpack.c.l.b16 %v539
    %v1921 = vunpack.c.h.b16 %v539
    %v1922 = vunpack.c.l.b16 %v540
    %v1923 = vunpack.c.h.b16 %v540
    %v1924 = vunpack.c.l.b16 %v541
    %v1925 = vunpack.c.h.b16 %v541
    %v1926 = vunpack.c.l.b16 %v542
    %v1927 = vunpack.c.h.b16 %v542
    %v1928 = vunpack.c.l.b16 %v543
    %v1929 = vunpack.c.h.b16 %v543
    %v1930 = vunpack.c.l.b16 %v544
    %v1931 = vunpack.c.h.b16 %v544
    %v1932 = vunpack.c.l.b16 %v545
    %v1933 = vunpack.c.h.b16 %v545
    %v1934 = vunpack.c.l.b16 %v546
    %v1935 = vunpack.c.h.b16 %v546
    %v1936 = vunpack.c.l.b16 %v547
    %v1937 = vunpack.c.h.b16 %v547
    %v1938 = vunpack.c.l.b16 %v548
    %v1939 = vunpack.c.h.b16 %v548
    %v1940 = vunpack.c.l.b16 %v549
    %v1941 = vunpack.c.h.b16 %v549
    %v1942 = vunpack.c.l.b16 %v550
    %v1943 = vunpack.c.h.b16 %v550
    %v1944 = vunpack.c.l.b16 %v551
    %v1945 = vunpack.c.h.b16 %v551
    %v1946 = vunpack.c.l.b16 %v552
    %v1947 = vunpack.c.h.b16 %v552
    %v1948 = vunpack.c.l.b16 %v553
    %v1949 = vunpack.c.h.b16 %v553
    %v1950 = vunpack.c.l.b16 %v554
    %v1951 = vunpack.c.h.b16 %v554
    %v1952 = vunpack.c.l.b16 %v555
    %v1953 = vunpack.c.h.b16 %v555
    %v1954 = vunpack.c.l.b16 %v556
    %v1955 = vunpack.c.h.b16 %v556
    %v1956 = vunpack.c.l.b16 %v557
    %v1957 = vunpack.c.h.b16 %v557
    %v1958 = vunpack.c.l.b16 %v558
    %v1959 = vunpack.c.h.b16 %v558
    %v1960 = vunpack.c.l.b16 %v559
    %v1961 = vunpack.c.h.b16 %v559
    %v1962 = vunpack.c.l.b16 %v560
    %v1963 = vunpack.c.h.b16 %v560
    %v1964 = vunpack.c.l.b16 %v561
    %v1965 = vunpack.c.h.b16 %v561
    %v1966 = vunpack.c.l.b16 %v562
    %v1967 = vunpack.c.h.b16 %v562
    %v1968 = vunpack.c.l.b16 %v563
    %v1969 = vunpack.c.h.b16 %v563
    %v1970 = vunpack.c.l.b16 %v564
    %v1971 = vunpack.c.h.b16 %v564
    %v1972 = vunpack.c.l.b16 %v565
    %v1973 = vunpack.c.h.b16 %v565
    %v1974 = vunpack.c.l.b16 %v566
    %v1975 = vunpack.c.h.b16 %v566
    %v1976 = vunpack.c.l.b16 %v567
    %v1977 = vunpack.c.h.b16 %v567
    %v1978 = vunpack.c.l.b16 %v568
    %v1979 = vunpack.c.h.b16 %v568
    %v1980 = vunpack.c.l.b16 %v569
    %v1981 = vunpack.c.h.b16 %v569
    %v1982 = vunpack.c.l.b16 %v570
    %v1983 = vunpack.c.h.b16 %v570
    %v1984 = vunpack.c.l.b16 %v571
    %v1985 = vunpack.c.h.b16 %v571
    %v1986 = vunpack.c.l.b16 %v572
    %v1987 = vunpack.c.h.b16 %v572
    %v1988 = vunpack.c.l.b16 %v573
    %v1989 = vunpack.c.h.b16 %v573
    %v1990 = vunpack.c.l.b16 %v574
    %v1991 = vunpack.c.h.b16 %v574
    %v1992 = vunpack.c.l.b16 %v575
    %v1993 = vunpack.c.h.b16 %v575
    %v1994 = vunpack.c.l.b16 %v576
    %v1995 = vunpack.c.h.b16 %v576
    %v1996 = vunpack.c.l.b16 %v577
    %v1997 = vunpack.c.h.b16 %v577
    %v1998 = vunpack.c.l.b16 %v578
    %v1999 = vunpack.c.h.b16 %v578
    %v2000 = vunpack.c.l.b16 %v579
    %v2001 = vunpack.c.h.b16 %v579
    %v2002 = vunpack.c.l.b16 %v580
    %v2003 = vunpack.c.h.b16 %v580
    %v2004 = vunpack.c.l.b16 %v581
    %v2005 = vunpack.c.h.b16 %v581
    %v2006 = vunpack.c.l.b16 %v582
    %v2007 = vunpack.c.h.b16 %v582
    %v2008 = vunpack.c.l.b16 %v583
    %v2009 = vunpack.c.h.b16 %v583
    %v2010 = vunpack.c.l.b16 %v584
    %v2011 = vunpack.c.h.b16 %v584
    %v2012 = vunpack.c.l.b16 %v585
    %v2013 = vunpack.c.h.b16 %v585
    %v2014 = vunpack.c.l.b16 %v586
    %v2015 = vunpack.c.h.b16 %v586
    %v2016 = vunpack.c.l.b16 %v587
    %v2017 = vunpack.c.h.b16 %v587
    %v2018 = vunpack.c.l.b16 %v588
    %v2019 = vunpack.c.h.b16 %v588
    %v2020 = vunpack.c.l.b16 %v589
    %v2021 = vunpack.c.h.b16 %v589
    %v2022 = vunpack.c.l.b16 %v590
    %v2023 = vunpack.c.h.b16 %v590
    %v2024 = vunpack.c.l.b16 %v591
    %v2025 = vunpack.c.h.b16 %v591
    %v2026 = vunpack.c.l.b16 %v592
    %v2027 = vunpack.c.h.b16 %v592
    %v2028 = vunpack.c.l.b16 %v593
    %v2029 = vunpack.c.h.b16 %v593
    %v2030 = vunpack.c.l.b16 %v594
    %v2031 = vunpack.c.h.b16 %v594
    %v2032 = vunpack.c.l.b16 %v595
    %v2033 = vunpack.c.h.b16 %v595
    %v2034 = vunpack.c.l.b16 %v596
    %v2035 = vunpack.c.h.b16 %v596
    %v2036 = vunpack.c.l.b16 %v597
    %v2037 = vunpack.c.h.b16 %v597
    %v2038 = vunpack.c.l.b16 %v598
    %v2039 = vunpack.c.h.b16 %v598
    %v2040 = vunpack.c.l.b16 %v599
    %v2041 = vunpack.c.h.b16 %v599
    %v2042 = vunpack.c.l.b16 %v600
    %v2043 = vunpack.c.h.b16 %v600
    %v2044 = vunpack.c.l.b16 %v601
    %v2045 = vunpack.c.h.b16 %v601
    %v2046 = vunpack.c.l.b16 %v602
    %v2047 = vunpack.c.h.b16 %v602
    %v2048 = vunpack.c.l.b16 %v603
    %v2049 = vunpack.c.h.b16 %v603
    %v2050 = vunpack.c.l.b16 %v604
    %v2051 = vunpack.c.h.b16 %v604
    %v2052 = vunpack.c.l.b16 %v605
    %v2053 = vunpack.c.h.b16 %v605
    %v2054 = vunpack.c.l.b16 %v606
    %v2055 = vunpack.c.h.b16 %v606
    %v2056 = vunpack.c.l.b16 %v607
    %v2057 = vunpack.c.h.b16 %v607
    %v2058 = vunpack.c.l.b16 %v608
    %v2059 = vunpack.c.h.b16 %v608
    %v2060 = vunpack.c.l.b16 %v609
    %v2061 = vunpack.c.h.b16 %v609
    %v2062 = vunpack.c.l.b16 %v610
    %v2063 = vunpack.c.h.b16 %v610
    %v2064 = vunpack.c.l.b16 %v611
    %v2065 = vunpack.c.h.b16 %v611
    %v2066 = vunpack.c.l.b16 %v612
    %v2067 = vunpack.c.h.b16 %v612
    %v2068 = vunpack.c.l.b16 %v613
    %v2069 = vunpack.c.h.b16 %v613
    %v2070 = vunpack.c.l.b16 %v614
    %v2071 = vunpack.c.h.b16 %v614
    %v2072 = vunpack.c.l.b16 %v615
    %v2073 = vunpack.c.h.b16 %v615
    %v2074 = vunpack.c.l.b16 %v616
    %v2075 = vunpack.c.h.b16 %v616
    %v2076 = vunpack.c.l.b16 %v617
    %v2077 = vunpack.c.h.b16 %v617
    %v2078 = vunpack.c.l.b16 %v618
    %v2079 = vunpack.c.h.b16 %v618
    %v2080 = vunpack.c.l.b16 %v619
    %v2081 = vunpack.c.h.b16 %v619
    %v2082 = vunpack.c.l.b16 %v620
    %v2083 = vunpack.c.h.b16 %v620
    %v2084 = vunpack.c.l.b16 %v621
    %v2085 = vunpack.c.h.b16 %v621
    %v2086 = vunpack.c.l.b16 %v622
    %v2087 = vunpack.c.h.b16 %v622
    %v2088 = vunpack.c.l.b16 %v623
    %v2089 = vunpack.c.h.b16 %v623
    %v2090 = vunpack.c.l.b16 %v624
    %v2091 = vunpack.c.h.b16 %v624
    %v2092 = vunpack.c.l.b16 %v625
    %v2093 = vunpack.c.h.b16 %v625
    %v2094 = vunpack.c.l.b16 %v626
    %v2095 = vunpack.c.h.b16 %v626
    %v2096 = vunpack.c.l.b16 %v627
    %v2097 = vunpack.c.h.b16 %v627
    %v2098 = vunpack.c.l.b16 %v628
    %v2099 = vunpack.c.h.b16 %v628
    %v2100 = vunpack.c.l.b16 %v629
    %v2101 = vunpack.c.h.b16 %v629
    %v2102 = vunpack.c.l.b16 %v630
    %v2103 = vunpack.c.h.b16 %v630
    %v2104 = vunpack.c.l.b16 %v631
    %v2105 = vunpack.c.h.b16 %v631
    %v2106 = vunpack.c.l.b16 %v632
    %v2107 = vunpack.c.h.b16 %v632
    %v2108 = vunpack.c.l.b16 %v633
    %v2109 = vunpack.c.h.b16 %v633
    %v2110 = vunpack.c.l.b16 %v634
    %v2111 = vunpack.c.h.b16 %v634
    %v2112 = vunpack.c.l.b16 %v635
    %v2113 = vunpack.c.h.b16 %v635
    %v2114 = vunpack.c.l.b16 %v636
    %v2115 = vunpack.c.h.b16 %v636
    %v2116 = vunpack.c.l.b16 %v637
    %v2117 = vunpack.c.h.b16 %v637
    %v2118 = vunpack.c.l.b16 %v638
    %v2119 = vunpack.c.h.b16 %v638
    %v2120 = vunpack.c.l.b16 %v639
    %v2121 = vunpack.c.h.b16 %v639
    %v2122 = vunpack.c.l.b16 %v640
    %v2123 = vunpack.c.h.b16 %v640
    %v2124 = vunpack.c.l.b16 %v641
    %v2125 = vunpack.c.h.b16 %v641
    %v2126 = vunpack.c.l.b16 %v642
    %v2127 = vunpack.c.h.b16 %v642
    %v2128 = vunpack.c.l.b16 %v643
    %v2129 = vunpack.c.h.b16 %v643
    %v2130 = vunpack.c.l.b16 %v644
    %v2131 = vunpack.c.h.b16 %v644
    %v2132 = vunpack.c.l.b16 %v645
    %v2133 = vunpack.c.h.b16 %v645
    %v2134 = vunpack.c.l.b16 %v646
    %v2135 = vunpack.c.h.b16 %v646
    %v2136 = vunpack.c.l.b16 %v647
    %v2137 = vunpack.c.h.b16 %v647
    %v2138 = vunpack.c.l.b16 %v648
    %v2139 = vunpack.c.h.b16 %v648
    %v2140 = vunpack.c.l.b16 %v649
    %v2141 = vunpack.c.h.b16 %v649
    %v2142 = vunpack.c.l.b16 %v650
    %v2143 = vunpack.c.h.b16 %v650
    %v2144 = vunpack.c.l.b16 %v651
    %v2145 = vunpack.c.h.b16 %v651
    %v2146 = vunpack.c.l.b16 %v652
    %v2147 = vunpack.c.h.b16 %v652
    %v2148 = vunpack.c.l.b16 %v653
    %v2149 = vunpack.c.h.b16 %v653
    %v2150 = vunpack.c.l.b16 %v654
    %v2151 = vunpack.c.h.b16 %v654
    %v2152 = vunpack.c.l.b16 %v655
    %v2153 = vunpack.c.h.b16 %v655
    %v2154 = vunpack.c.l.b16 %v656
    %v2155 = vunpack.c.h.b16 %v656
    %v2156 = vunpack.c.l.b16 %v657
    %v2157 = vunpack.c.h.b16 %v657
    %v2158 = vunpack.c.l.b16 %v658
    %v2159 = vunpack.c.h.b16 %v658
    %v2160 = vunpack.c.l.b16 %v659
    %v2161 = vunpack.c.h.b16 %v659
    %v2162 = vunpack.c.l.b16 %v660
    %v2163 = vunpack.c.h.b16 %v660
    %v2164 = vunpack.c.l.b16 %v661
    %v2165 = vunpack.c.h.b16 %v661
    %v2166 = vunpack.c.l.b16 %v662
    %v2167 = vunpack.c.h.b16 %v662
    %v2168 = vunpack.c.l.b16 %v663
    %v2169 = vunpack.c.h.b16 %v663
    %v2170 = vunpack.c.l.b16 %v664
    %v2171 = vunpack.c.h.b16 %v664
    %v2172 = vunpack.c.l.b16 %v665
    %v2173 = vunpack.c.h.b16 %v665
    %v2174 = vunpack.c.l.b16 %v666
    %v2175 = vunpack.c.h.b16 %v666
    %v2176 = vunpack.c.l.b16 %v667
    %v2177 = vunpack.c.h.b16 %v667
    %v2178 = vunpack.c.l.b16 %v668
    %v2179 = vunpack.c.h.b16 %v668
    %v2180 = vunpack.c.l.b16 %v669
    %v2181 = vunpack.c.h.b16 %v669
    %v2182 = vunpack.c.l.b16 %v670
    %v2183 = vunpack.c.h.b16 %v670
    %v2184 = vunpack.c.l.b16 %v671
    %v2185 = vunpack.c.h.b16 %v671
    %v2186 = vunpack.c.l.b16 %v672
    %v2187 = vunpack.c.h.b16 %v672
    %v2188 = vunpack.c.l.b16 %v673
    %v2189 = vunpack.c.h.b16 %v673
    %v2190 = vunpack.c.l.b16 %v674
    %v2191 = vunpack.c.h.b16 %v674
    %v2192 = vunpack.c.l.b16 %v675
    %v2193 = vunpack.c.h.b16 %v675
    %v2194 = vunpack.c.l.b16 %v676
    %v2195 = vunpack.c.h.b16 %v676
    %v2196 = vunpack.c.l.b16 %v677
    %v2197 = vunpack.c.h.b16 %v677
    %v2198 = vunpack.c.l.b16 %v678
    %v2199 = vunpack.c.h.b16 %v678
    %v2200 = vunpack.c.l.b16 %v679
    %v2201 = vunpack.c.h.b16 %v679
    %v2202 = vunpack.c.l.b16 %v680
    %v2203 = vunpack.c.h.b16 %v680
    %v2204 = vunpack.c.l.b16 %v681
    %v2205 = vunpack.c.h.b16 %v681
    %v2206 = vunpack.c.l.b16 %v682
    %v2207 = vunpack.c.h.b16 %v682
    %v2208 = vunpack.c.l.b16 %v683
    %v2209 = vunpack.c.h.b16 %v683
    %v2210 = vunpack.c.l.b16 %v684
    %v2211 = vunpack.c.h.b16 %v684
    %v2212 = vunpack.c.l.b16 %v685
    %v2213 = vunpack.c.h.b16 %v685
    %v2214 = vunpack.c.l.b16 %v686
    %v2215 = vunpack.c.h.b16 %v686
    %v2216 = vunpack.c.l.b16 %v687
    %v2217 = vunpack.c.h.b16 %v687
    %v2218 = vunpack.c.l.b16 %v688
    %v2219 = vunpack.c.h.b16 %v688
    %v2220 = vunpack.c.l.b16 %v689
    %v2221 = vunpack.c.h.b16 %v689
    %v2222 = vunpack.c.l.b16 %v690
    %v2223 = vunpack.c.h.b16 %v690
    %v2224 = vunpack.c.l.b16 %v691
    %v2225 = vunpack.c.h.b16 %v691
    %v2226 = vunpack.c.l.b16 %v692
    %v2227 = vunpack.c.h.b16 %v692
    %v2228 = vunpack.c.l.b16 %v693
    %v2229 = vunpack.c.h.b16 %v693
    %v2230 = vunpack.c.l.b16 %v694
    %v2231 = vunpack.c.h.b16 %v694
    %v2232 = vunpack.c.l.b16 %v695
    %v2233 = vunpack.c.h.b16 %v695
    %v2234 = vunpack.c.l.b16 %v696
    %v2235 = vunpack.c.h.b16 %v696
    %v2236 = vunpack.c.l.b16 %v697
    %v2237 = vunpack.c.h.b16 %v697
    %v2238 = vunpack.c.l.b16 %v698
    %v2239 = vunpack.c.h.b16 %v698
    %v2240 = vunpack.c.l.b16 %v699
    %v2241 = vunpack.c.h.b16 %v699
    %v2242 = vunpack.c.l.b16 %v700
    %v2243 = vunpack.c.h.b16 %v700
    %v2244 = vunpack.c.l.b16 %v701
    %v2245 = vunpack.c.h.b16 %v701
    %v2246 = vunpack.c.l.b16 %v702
    %v2247 = vunpack.c.h.b16 %v702
    %v2248 = vunpack.c.l.b16 %v703
    %v2249 = vunpack.c.h.b16 %v703
    %v2250 = vunpack.c.l.b16 %v704
    %v2251 = vunpack.c.h.b16 %v704
    %v2252 = vunpack.c.l.b16 %v705
    %v2253 = vunpack.c.h.b16 %v705
    %v2254 = vunpack.c.l.b16 %v706
    %v2255 = vunpack.c.h.b16 %v706
    %v2256 = vunpack.c.l.b16 %v707
    %v2257 = vunpack.c.h.b16 %v707
    %v2258 = vunpack.c.l.b16 %v708
    %v2259 = vunpack.c.h.b16 %v708
    %v2260 = vunpack.c.l.b16 %v709
    %v2261 = vunpack.c.h.b16 %v709
    %v2262 = vunpack.c.l.b16 %v710
    %v2263 = vunpack.c.h.b16 %v710
    %v2264 = vunpack.c.l.b16 %v711
    %v2265 = vunpack.c.h.b16 %v711
    %v2266 = vpack.c.b16 %v1250, %v1242
    %v2267 = vpack.c.b16 %v1251, %v1243
    %v2268 = vpack.c.b16 %v1252, %v1244
    %v2269 = vpack.c.b16 %v1253, %v1245
    %v2270 = vpack.c.b16 %v1254, %v1246
    %v2271 = vpack.c.b16 %v1255, %v1247
    %v2272 = vpack.c.b16 %v1256, %v1248
    %v2273 = vpack.c.b16 %v1257, %v1249
    %v2274 = vpack.c.b16 %v1266, %v1258
    %v2275 = vpack.c.b16 %v1267, %v1259
    %v2276 = vpack.c.b16 %v1268, %v1260
    %v2277 = vpack.c.b16 %v1269, %v1261
    %v2278 = vpack.c.b16 %v1270, %v1262
    %v2279 = vpack.c.b16 %v1271, %v1263
    %v2280 = vpack.c.b16 %v1272, %v1264
    %v2281 = vpack.c.b16 %v1273, %v1265
    %v2282 = vpack.c.b16 %v1282, %v1274
    %v2283 = vpack.c.b16 %v1283, %v1275
    %v2284 = vpack.c.b16 %v1284, %v1276
    %v2285 = vpack.c.b16 %v1285, %v1277
    %v2286 = vpack.c.b16 %v1286, %v1278
    %v2287 = vpack.c.b16 %v1287, %v1279
    %v2288 = vpack.c.b16 %v1288, %v1280
    %v2289 = vpack.c.b16 %v1289, %v1281
    %v2290 = vpack.c.b16 %v1298, %v1290
    %v2291 = vpack.c.b16 %v1299, %v1291
    %v2292 = vpack.c.b16 %v1300, %v1292
    %v2293 = vpack.c.b16 %v1301, %v1293
    %v2294 = vpack.c.b16 %v1302, %v1294
    %v2295 = vpack.c.b16 %v1303, %v1295
    %v2296 = vpack.c.b16 %v1304, %v1296
    %v2297 = vpack.c.b16 %v1305, %v1297
    %v2298 = vpack.c.b16 %v1314, %v1306
    %v2299 = vpack.c.b16 %v1315, %v1307
    %v2300 = vpack.c.b16 %v1316, %v1308
    %v2301 = vpack.c.b16 %v1317, %v1309
    %v2302 = vpack.c.b16 %v1318, %v1310
    %v2303 = vpack.c.b16 %v1319, %v1311
    %v2304 = vpack.c.b16 %v1320, %v1312
    %v2305 = vpack.c.b16 %v1321, %v1313
    %v2306 = vpack.c.b16 %v1330, %v1322
    %v2307 = vpack.c.b16 %v1331, %v1323
    %v2308 = vpack.c.b16 %v1332, %v1324
    %v2309 = vpack.c.b16 %v1333, %v1325
    %v2310 = vpack.c.b16 %v1334, %v1326
    %v2311 = vpack.c.b16 %v1335, %v1327
    %v2312 = vpack.c.b16 %v1336, %v1328
    %v2313 = vpack.c.b16 %v1337, %v1329
    %v2314 = vpack.c.b16 %v1346, %v1338
    %v2315 = vpack.c.b16 %v1347, %v1339
    %v2316 = vpack.c.b16 %v1348, %v1340
    %v2317 = vpack.c.b16 %v1349, %v1341
    %v2318 = vpack.c.b16 %v1350, %v1342
    %v2319 = vpack.c.b16 %v1351, %v1343
    %v2320 = vpack.c.b16 %v1352, %v1344
    %v2321 = vpack.c.b16 %v1353, %v1345
    %v2322 = vpack.c.b16 %v1362, %v1354
    %v2323 = vpack.c.b16 %v1363, %v1355
    %v2324 = vpack.c.b16 %v1364, %v1356
    %v2325 = vpack.c.b16 %v1365, %v1357
    %v2326 = vpack.c.b16 %v1366, %v1358
    %v2327 = vpack.c.b16 %v1367, %v1359
    %v2328 = vpack.c.b16 %v1368, %v1360
    %v2329 = vpack.c.b16 %v1369, %v1361
    %v2330 = vpack.c.b16 %v1378, %v1370
    %v2331 = vpack.c.b16 %v1379, %v1371
    %v2332 = vpack.c.b16 %v1380, %v1372
    %v2333 = vpack.c.b16 %v1381, %v1373
    %v2334 = vpack.c.b16 %v1382, %v1374
    %v2335 = vpack.c.b16 %v1383, %v1375
    %v2336 = vpack.c.b16 %v1384, %v1376
    %v2337 = vpack.c.b16 %v1385, %v1377
    %v2338 = vpack.c.b16 %v1394, %v1386
    %v2339 = vpack.c.b16 %v1395, %v1387
    %v2340 = vpack.c.b16 %v1396, %v1388
    %v2341 = vpack.c.b16 %v1397, %v1389
    %v2342 = vpack.c.b16 %v1398, %v1390
    %v2343 = vpack.c.b16 %v1399, %v1391
    %v2344 = vpack.c.b16 %v1400, %v1392
    %v2345 = vpack.c.b16 %v1401, %v1393
    %v2346 = vpack.c.b16 %v1410, %v1402
    %v2347 = vpack.c.b16 %v1411, %v1403
    %v2348 = vpack.c.b16 %v1412, %v1404
    %v2349 = vpack.c.b16 %v1413, %v1405
    %v2350 = vpack.c.b16 %v1414, %v1406
    %v2351 = vpack.c.b16 %v1415, %v1407
    %v2352 = vpack.c.b16 %v1416, %v1408
    %v2353 = vpack.c.b16 %v1417, %v1409
    %v2354 = vpack.c.b16 %v1426, %v1418
    %v2355 = vpack.c.b16 %v1427, %v1419
    %v2356 = vpack.c.b16 %v1428, %v1420
    %v2357 = vpack.c.b16 %v1429, %v1421
    %v2358 = vpack.c.b16 %v1430, %v1422
    %v2359 = vpack.c.b16 %v1431, %v1423
    %v2360 = vpack.c.b16 %v1432, %v1424
    %v2361 = vpack.c.b16 %v1433, %v1425
    %v2362 = vpack.c.b16 %v1442, %v1434
    %v2363 = vpack.c.b16 %v1443, %v1435
    %v2364 = vpack.c.b16 %v1444, %v1436
    %v2365 = vpack.c.b16 %v1445, %v1437
    %v2366 = vpack.c.b16 %v1446, %v1438
    %v2367 = vpack.c.b16 %v1447, %v1439
    %v2368 = vpack.c.b16 %v1448, %v1440
    %v2369 = vpack.c.b16 %v1449, %v1441
    %v2370 = vpack.c.b16 %v1458, %v1450
    %v2371 = vpack.c.b16 %v1459, %v1451
    %v2372 = vpack.c.b16 %v1460, %v1452
    %v2373 = vpack.c.b16 %v1461, %v1453
    %v2374 = vpack.c.b16 %v1462, %v1454
    %v2375 = vpack.c.b16 %v1463, %v1455
    %v2376 = vpack.c.b16 %v1464, %v1456
    %v2377 = vpack.c.b16 %v1465, %v1457
    %v2378 = vpack.c.b16 %v1474, %v1466
    %v2379 = vpack.c.b16 %v1475, %v1467
    %v2380 = vpack.c.b16 %v1476, %v1468
    %v2381 = vpack.c.b16 %v1477, %v1469
    %v2382 = vpack.c.b16 %v1478, %v1470
    %v2383 = vpack.c.b16 %v1479, %v1471
    %v2384 = vpack.c.b16 %v1480, %v1472
    %v2385 = vpack.c.b16 %v1481, %v1473
    %v2386 = vpack.c.b16 %v1490, %v1482
    %v2387 = vpack.c.b16 %v1491, %v1483
    %v2388 = vpack.c.b16 %v1492, %v1484
    %v2389 = vpack.c.b16 %v1493, %v1485
    %v2390 = vpack.c.b16 %v1494, %v1486
    %v2391 = vpack.c.b16 %v1495, %v1487
    %v2392 = vpack.c.b16 %v1496, %v1488
    %v2393 = vpack.c.b16 %v1497, %v1489
    %v2394 = vpack.c.b16 %v1506, %v1498
    %v2395 = vpack.c.b16 %v1507, %v1499
    %v2396 = vpack.c.b16 %v1508, %v1500
    %v2397 = vpack.c.b16 %v1509, %v1501
    %v2398 = vpack.c.b16 %v1510, %v1502
    %v2399 = vpack.c.b16 %v1511, %v1503
    %v2400 = vpack.c.b16 %v1512, %v1504
    %v2401 = vpack.c.b16 %v1513, %v1505
    %v2402 = vpack.c.b16 %v1522, %v1514
    %v2403 = vpack.c.b16 %v1523, %v1515
    %v2404 = vpack.c.b16 %v1524, %v1516
    %v2405 = vpack.c.b16 %v1525, %v1517
    %v2406 = vpack.c.b16 %v1526, %v1518
    %v2407 = vpack.c.b16 %v1527, %v1519
    %v2408 = vpack.c.b16 %v1528, %v1520
    %v2409 = vpack.c.b16 %v1529, %v1521
    %v2410 = vpack.c.b16 %v1538, %v1530
    %v2411 = vpack.c.b16 %v1539, %v1531
    %v2412 = vpack.c.b16 %v1540, %v1532
    %v2413 = vpack.c.b16 %v1541, %v1533
    %v2414 = vpack.c.b16 %v1542, %v1534
    %v2415 = vpack.c.b16 %v1543, %v1535
    %v2416 = vpack.c.b16 %v1544, %v1536
    %v2417 = vpack.c.b16 %v1545, %v1537
    %v2418 = vpack.c.b16 %v1554, %v1546
    %v2419 = vpack.c.b16 %v1555, %v1547
    %v2420 = vpack.c.b16 %v1556, %v1548
    %v2421 = vpack.c.b16 %v1557, %v1549
    %v2422 = vpack.c.b16 %v1558, %v1550
    %v2423 = vpack.c.b16 %v1559, %v1551
    %v2424 = vpack.c.b16 %v1560, %v1552
    %v2425 = vpack.c.b16 %v1561, %v1553
    %v2426 = vpack.c.b16 %v1570, %v1562
    %v2427 = vpack.c.b16 %v1571, %v1563
    %v2428 = vpack.c.b16 %v1572, %v1564
    %v2429 = vpack.c.b16 %v1573, %v1565
    %v2430 = vpack.c.b16 %v1574, %v1566
    %v2431 = vpack.c.b16 %v1575, %v1567
    %v2432 = vpack.c.b16 %v1576, %v1568
    %v2433 = vpack.c.b16 %v1577, %v1569
    %v2434 = vpack.c.b16 %v1586, %v1578
    %v2435 = vpack.c.b16 %v1587, %v1579
    %v2436 = vpack.c.b16 %v1588, %v1580
    %v2437 = vpack.c.b16 %v1589, %v1581
    %v2438 = vpack.c.b16 %v1590, %v1582
    %v2439 = vpack.c.b16 %v1591, %v1583
    %v2440 = vpack.c.b16 %v1592, %v1584
    %v2441 = vpack.c.b16 %v1593, %v1585
    %v2442 = vpack.c.b16 %v1602, %v1594
    %v2443 = vpack.c.b16 %v1603, %v1595
    %v2444 = vpack.c.b16 %v1604, %v1596
    %v2445 = vpack.c.b16 %v1605, %v1597
    %v2446 = vpack.c.b16 %v1606, %v1598
    %v2447 = vpack.c.b16 %v1607, %v1599
    %v2448 = vpack.c.b16 %v1608, %v1600
    %v2449 = vpack.c.b16 %v1609, %v1601
    %v2450 = vpack.c.b16 %v1618, %v1610
    %v2451 = vpack.c.b16 %v1619, %v1611
    %v2452 = vpack.c.b16 %v1620, %v1612
    %v2453 = vpack.c.b16 %v1621, %v1613
    %v2454 = vpack.c.b16 %v1622, %v1614
    %v2455 = vpack.c.b16 %v1623, %v1615
    %v2456 = vpack.c.b16 %v1624, %v1616
    %v2457 = vpack.c.b16 %v1625, %v1617
    %v2458 = vpack.c.b16 %v1634, %v1626
    %v2459 = vpack.c.b16 %v1635, %v1627
    %v2460 = vpack.c.b16 %v1636, %v1628
    %v2461 = vpack.c.b16 %v1637, %v1629
    %v2462 = vpack.c.b16 %v1638, %v1630
    %v2463 = vpack.c.b16 %v1639, %v1631
    %v2464 = vpack.c.b16 %v1640, %v1632
    %v2465 = vpack.c.b16 %v1641, %v1633
    %v2466 = vpack.c.b16 %v1650, %v1642
    %v2467 = vpack.c.b16 %v1651, %v1643
    %v2468 = vpack.c.b16 %v1652, %v1644
    %v2469 = vpack.c.b16 %v1653, %v1645
    %v2470 = vpack.c.b16 %v1654, %v1646
    %v2471 = vpack.c.b16 %v1655, %v1647
    %v2472 = vpack.c.b16 %v1656, %v1648
    %v2473 = vpack.c.b16 %v1657, %v1649
    %v2474 = vpack.c.b16 %v1666, %v1658
    %v2475 = vpack.c.b16 %v1667, %v1659
    %v2476 = vpack.c.b16 %v1668, %v1660
    %v2477 = vpack.c.b16 %v1669, %v1661
    %v2478 = vpack.c.b16 %v1670, %v1662
    %v2479 = vpack.c.b16 %v1671, %v1663
    %v2480 = vpack.c.b16 %v1672, %v1664
    %v2481 = vpack.c.b16 %v1673, %v1665
    %v2482 = vpack.c.b16 %v1682, %v1674
    %v2483 = vpack.c.b16 %v1683, %v1675
    %v2484 = vpack.c.b16 %v1684, %v1676
    %v2485 = vpack.c.b16 %v1685, %v1677
    %v2486 = vpack.c.b16 %v1686, %v1678
    %v2487 = vpack.c.b16 %v1687, %v1679
    %v2488 = vpack.c.b16 %v1688, %v1680
    %v2489 = vpack.c.b16 %v1689, %v1681
    %v2490 = vpack.c.b16 %v1698, %v1690
    %v2491 = vpack.c.b16 %v1699, %v1691
    %v2492 = vpack.c.b16 %v1700, %v1692
    %v2493 = vpack.c.b16 %v1701, %v1693
    %v2494 = vpack.c.b16 %v1702, %v1694
    %v2495 = vpack.c.b16 %v1703, %v1695
    %v2496 = vpack.c.b16 %v1704, %v1696
    %v2497 = vpack.c.b16 %v1705, %v1697
    %v2498 = vpack.c.b16 %v1714, %v1706
    %v2499 = vpack.c.b16 %v1715, %v1707
    %v2500 = vpack.c.b16 %v1716, %v1708
    %v2501 = vpack.c.b16 %v1717, %v1709
    %v2502 = vpack.c.b16 %v1718, %v1710
    %v2503 = vpack.c.b16 %v1719, %v1711
    %v2504 = vpack.c.b16 %v1720, %v1712
    %v2505 = vpack.c.b16 %v1721, %v1713
    %v2506 = vpack.c.b16 %v1730, %v1722
    %v2507 = vpack.c.b16 %v1731, %v1723
    %v2508 = vpack.c.b16 %v1732, %v1724
    %v2509 = vpack.c.b16 %v1733, %v1725
    %v2510 = vpack.c.b16 %v1734, %v1726
    %v2511 = vpack.c.b16 %v1735, %v1727
    %v2512 = vpack.c.b16 %v1736, %v1728
    %v2513 = vpack.c.b16 %v1737, %v1729
    %v2514 = vpack.c.b16 %v1746, %v1738
    %v2515 = vpack.c.b16 %v1747, %v1739
    %v2516 = vpack.c.b16 %v1748, %v1740
    %v2517 = vpack.c.b16 %v1749, %v1741
    %v2518 = vpack.c.b16 %v1750, %v1742
    %v2519 = vpack.c.b16 %v1751, %v1743
    %v2520 = vpack.c.b16 %v1752, %v1744
    %v2521 = vpack.c.b16 %v1753, %v1745
    %v2522 = vpack.c.b16 %v1762, %v1754
    %v2523 = vpack.c.b16 %v1763, %v1755
    %v2524 = vpack.c.b16 %v1764, %v1756
    %v2525 = vpack.c.b16 %v1765, %v1757
    %v2526 = vpack.c.b16 %v1766, %v1758
    %v2527 = vpack.c.b16 %v1767, %v1759
    %v2528 = vpack.c.b16 %v1768, %v1760
    %v2529 = vpack.c.b16 %v1769, %v1761
    %v2530 = vpack.c.b16 %v1778, %v1770
    %v2531 = vpack.c.b16 %v1779, %v1771
    %v2532 = vpack.c.b16 %v1780, %v1772
    %v2533 = vpack.c.b16 %v1781, %v1773
    %v2534 = vpack.c.b16 %v1782, %v1774
    %v2535 = vpack.c.b16 %v1783, %v1775
    %v2536 = vpack.c.b16 %v1784, %v1776
    %v2537 = vpack.c.b16 %v1785, %v1777
    %v2538 = vpack.c.b16 %v1794, %v1786
    %v2539 = vpack.c.b16 %v1795, %v1787
    %v2540 = vpack.c.b16 %v1796, %v1788
    %v2541 = vpack.c.b16 %v1797, %v1789
    %v2542 = vpack.c.b16 %v1798, %v1790
    %v2543 = vpack.c.b16 %v1799, %v1791
    %v2544 = vpack.c.b16 %v1800, %v1792
    %v2545 = vpack.c.b16 %v1801, %v1793
    %v2546 = vpack.c.b16 %v1810, %v1802
    %v2547 = vpack.c.b16 %v1811, %v1803
    %v2548 = vpack.c.b16 %v1812, %v1804
    %v2549 = vpack.c.b16 %v1813, %v1805
    %v2550 = vpack.c.b16 %v1814, %v1806
    %v2551 = vpack.c.b16 %v1815, %v1807
    %v2552 = vpack.c.b16 %v1816, %v1808
    %v2553 = vpack.c.b16 %v1817, %v1809
    %v2554 = vpack.c.b16 %v1826, %v1818
    %v2555 = vpack.c.b16 %v1827, %v1819
    %v2556 = vpack.c.b16 %v1828, %v1820
    %v2557 = vpack.c.b16 %v1829, %v1821
    %v2558 = vpack.c.b16 %v1830, %v1822
    %v2559 = vpack.c.b16 %v1831, %v1823
    %v2560 = vpack.c.b16 %v1832, %v1824
    %v2561 = vpack.c.b16 %v1833, %v1825
    %v2562 = vpack.c.b16 %v1842, %v1834
    %v2563 = vpack.c.b16 %v1843, %v1835
    %v2564 = vpack.c.b16 %v1844, %v1836
    %v2565 = vpack.c.b16 %v1845, %v1837
    %v2566 = vpack.c.b16 %v1846, %v1838
    %v2567 = vpack.c.b16 %v1847, %v1839
    %v2568 = vpack.c.b16 %v1848, %v1840
    %v2569 = vpack.c.b16 %v1849, %v1841
    %v2570 = vpack.c.b16 %v1858, %v1850
    %v2571 = vpack.c.b16 %v1859, %v1851
    %v2572 = vpack.c.b16 %v1860, %v1852
    %v2573 = vpack.c.b16 %v1861, %v1853
    %v2574 = vpack.c.b16 %v1862, %v1854
    %v2575 = vpack.c.b16 %v1863, %v1855
    %v2576 = vpack.c.b16 %v1864, %v1856
    %v2577 = vpack.c.b16 %v1865, %v1857
    %v2578 = vpack.c.b16 %v1874, %v1866
    %v2579 = vpack.c.b16 %v1875, %v1867
    %v2580 = vpack.c.b16 %v1876, %v1868
    %v2581 = vpack.c.b16 %v1877, %v1869
    %v2582 = vpack.c.b16 %v1878, %v1870
    %v2583 = vpack.c.b16 %v1879, %v1871
    %v2584 = vpack.c.b16 %v1880, %v1872
    %v2585 = vpack.c.b16 %v1881, %v1873
    %v2586 = vpack.c.b16 %v1890, %v1882
    %v2587 = vpack.c.b16 %v1891, %v1883
    %v2588 = vpack.c.b16 %v1892, %v1884
    %v2589 = vpack.c.b16 %v1893, %v1885
    %v2590 = vpack.c.b16 %v1894, %v1886
    %v2591 = vpack.c.b16 %v1895, %v1887
    %v2592 = vpack.c.b16 %v1896, %v1888
    %v2593 = vpack.c.b16 %v1897, %v1889
    %v2594 = vpack.c.b16 %v1906, %v1898
    %v2595 = vpack.c.b16 %v1907, %v1899
    %v2596 = vpack.c.b16 %v1908, %v1900
    %v2597 = vpack.c.b16 %v1909, %v1901
    %v2598 = vpack.c.b16 %v1910, %v1902
    %v2599 = vpack.c.b16 %v1911, %v1903
    %v2600 = vpack.c.b16 %v1912, %v1904
    %v2601 = vpack.c.b16 %v1913, %v1905
    %v2602 = vpack.c.b16 %v1922, %v1914
    %v2603 = vpack.c.b16 %v1923, %v1915
    %v2604 = vpack.c.b16 %v1924, %v1916
    %v2605 = vpack.c.b16 %v1925, %v1917
    %v2606 = vpack.c.b16 %v1926, %v1918
    %v2607 = vpack.c.b16 %v1927, %v1919
    %v2608 = vpack.c.b16 %v1928, %v1920
    %v2609 = vpack.c.b16 %v1929, %v1921
    %v2610 = vpack.c.b16 %v1938, %v1930
    %v2611 = vpack.c.b16 %v1939, %v1931
    %v2612 = vpack.c.b16 %v1940, %v1932
    %v2613 = vpack.c.b16 %v1941, %v1933
    %v2614 = vpack.c.b16 %v1942, %v1934
    %v2615 = vpack.c.b16 %v1943, %v1935
    %v2616 = vpack.c.b16 %v1944, %v1936
    %v2617 = vpack.c.b16 %v1945, %v1937
    %v2618 = vpack.c.b16 %v1954, %v1946
    %v2619 = vpack.c.b16 %v1955, %v1947
    %v2620 = vpack.c.b16 %v1956, %v1948
    %v2621 = vpack.c.b16 %v1957, %v1949
    %v2622 = vpack.c.b16 %v1958, %v1950
    %v2623 = vpack.c.b16 %v1959, %v1951
    %v2624 = vpack.c.b16 %v1960, %v1952
    %v2625 = vpack.c.b16 %v1961, %v1953
    %v2626 = vpack.c.b16 %v1970, %v1962
    %v2627 = vpack.c.b16 %v1971, %v1963
    %v2628 = vpack.c.b16 %v1972, %v1964
    %v2629 = vpack.c.b16 %v1973, %v1965
    %v2630 = vpack.c.b16 %v1974, %v1966
    %v2631 = vpack.c.b16 %v1975, %v1967
    %v2632 = vpack.c.b16 %v1976, %v1968
    %v2633 = vpack.c.b16 %v1977, %v1969
    %v2634 = vpack.c.b16 %v1986, %v1978
    %v2635 = vpack.c.b16 %v1987, %v1979
    %v2636 = vpack.c.b16 %v1988, %v1980
    %v2637 = vpack.c.b16 %v1989, %v1981
    %v2638 = vpack.c.b16 %v1990, %v1982
    %v2639 = vpack.c.b16 %v1991, %v1983
    %v2640 = vpack.c.b16 %v1992, %v1984
    %v2641 = vpack.c.b16 %v1993, %v1985
    %v2642 = vpack.c.b16 %v2002, %v1994
    %v2643 = vpack.c.b16 %v2003, %v1995
    %v2644 = vpack.c.b16 %v2004, %v1996
    %v2645 = vpack.c.b16 %v2005, %v1997
    %v2646 = vpack.c.b16 %v2006, %v1998
    %v2647 = vpack.c.b16 %v2007, %v1999
    %v2648 = vpack.c.b16 %v2008, %v2000
    %v2649 = vpack.c.b16 %v2009, %v2001
    %v2650 = vpack.c.b16 %v2018, %v2010
    %v2651 = vpack.c.b16 %v2019, %v2011
    %v2652 = vpack.c.b16 %v2020, %v2012
    %v2653 = vpack.c.b16 %v2021, %v2013
    %v2654 = vpack.c.b16 %v2022, %v2014
    %v2655 = vpack.c.b16 %v2023, %v2015
    %v2656 = vpack.c.b16 %v2024, %v2016
    %v2657 = vpack.c.b16 %v2025, %v2017
    %v2658 = vpack.c.b16 %v2034, %v2026
    %v2659 = vpack.c.b16 %v2035, %v2027
    %v2660 = vpack.c.b16 %v2036, %v2028
    %v2661 = vpack.c.b16 %v2037, %v2029
    %v2662 = vpack.c.b16 %v2038, %v2030
    %v2663 = vpack.c.b16 %v2039, %v2031
    %v2664 = vpack.c.b16 %v2040, %v2032
    %v2665 = vpack.c.b16 %v2041, %v2033
    %v2666 = vpack.c.b16 %v2050, %v2042
    %v2667 = vpack.c.b16 %v2051, %v2043
    %v2668 = vpack.c.b16 %v2052, %v2044
    %v2669 = vpack.c.b16 %v2053, %v2045
    %v2670 = vpack.c.b16 %v2054, %v2046
    %v2671 = vpack.c.b16 %v2055, %v2047
    %v2672 = vpack.c.b16 %v2056, %v2048
    %v2673 = vpack.c.b16 %v2057, %v2049
    %v2674 = vpack.c.b16 %v2066, %v2058
    %v2675 = vpack.c.b16 %v2067, %v2059
    %v2676 = vpack.c.b16 %v2068, %v2060
    %v2677 = vpack.c.b16 %v2069, %v2061
    %v2678 = vpack.c.b16 %v2070, %v2062
    %v2679 = vpack.c.b16 %v2071, %v2063
    %v2680 = vpack.c.b16 %v2072, %v2064
    %v2681 = vpack.c.b16 %v2073, %v2065
    %v2682 = vpack.c.b16 %v2082, %v2074
    %v2683 = vpack.c.b16 %v2083, %v2075
    %v2684 = vpack.c.b16 %v2084, %v2076
    %v2685 = vpack.c.b16 %v2085, %v2077
    %v2686 = vpack.c.b16 %v2086, %v2078
    %v2687 = vpack.c.b16 %v2087, %v2079
    %v2688 = vpack.c.b16 %v2088, %v2080
    %v2689 = vpack.c.b16 %v2089, %v2081
    %v2690 = vpack.c.b16 %v2098, %v2090
    %v2691 = vpack.c.b16 %v2099, %v2091
    %v2692 = vpack.c.b16 %v2100, %v2092
    %v2693 = vpack.c.b16 %v2101, %v2093
    %v2694 = vpack.c.b16 %v2102, %v2094
    %v2695 = vpack.c.b16 %v2103, %v2095
    %v2696 = vpack.c.b16 %v2104, %v2096
    %v2697 = vpack.c.b16 %v2105, %v2097
    %v2698 = vpack.c.b16 %v2114, %v2106
    %v2699 = vpack.c.b16 %v2115, %v2107
    %v2700 = vpack.c.b16 %v2116, %v2108
    %v2701 = vpack.c.b16 %v2117, %v2109
    %v2702 = vpack.c.b16 %v2118, %v2110
    %v2703 = vpack.c.b16 %v2119, %v2111
    %v2704 = vpack.c.b16 %v2120, %v2112
    %v2705 = vpack.c.b16 %v2121, %v2113
    %v2706 = vpack.c.b16 %v2130, %v2122
    %v2707 = vpack.c.b16 %v2131, %v2123
    %v2708 = vpack.c.b16 %v2132, %v2124
    %v2709 = vpack.c.b16 %v2133, %v2125
    %v2710 = vpack.c.b16 %v2134, %v2126
    %v2711 = vpack.c.b16 %v2135, %v2127
    %v2712 = vpack.c.b16 %v2136, %v2128
    %v2713 = vpack.c.b16 %v2137, %v2129
    %v2714 = vpack.c.b16 %v2146, %v2138
    %v2715 = vpack.c.b16 %v2147, %v2139
    %v2716 = vpack.c.b16 %v2148, %v2140
    %v2717 = vpack.c.b16 %v2149, %v2141
    %v2718 = vpack.c.b16 %v2150, %v2142
    %v2719 = vpack.c.b16 %v2151, %v2143
    %v2720 = vpack.c.b16 %v2152, %v2144
    %v2721 = vpack.c.b16 %v2153, %v2145
    %v2722 = vpack.c.b16 %v2162, %v2154
    %v2723 = vpack.c.b16 %v2163, %v2155
    %v2724 = vpack.c.b16 %v2164, %v2156
    %v2725 = vpack.c.b16 %v2165, %v2157
    %v2726 = vpack.c.b16 %v2166, %v2158
    %v2727 = vpack.c.b16 %v2167, %v2159
    %v2728 = vpack.c.b16 %v2168, %v2160
    %v2729 = vpack.c.b16 %v2169, %v2161
    %v2730 = vpack.c.b16 %v2178, %v2170
    %v2731 = vpack.c.b16 %v2179, %v2171
    %v2732 = vpack.c.b16 %v2180, %v2172
    %v2733 = vpack.c.b16 %v2181, %v2173
    %v2734 = vpack.c.b16 %v2182, %v2174
    %v2735 = vpack.c.b16 %v2183, %v2175
    %v2736 = vpack.c.b16 %v2184, %v2176
    %v2737 = vpack.c.b16 %v2185, %v2177
    %v2738 = vpack.c.b16 %v2194, %v2186
    %v2739 = vpack.c.b16 %v2195, %v2187
    %v2740 = vpack.c.b16 %v2196, %v2188
    %v2741 = vpack.c.b16 %v2197, %v2189
    %v2742 = vpack.c.b16 %v2198, %v2190
    %v2743 = vpack.c.b16 %v2199, %v2191
    %v2744 = vpack.c.b16 %v2200, %v2192
    %v2745 = vpack.c.b16 %v2201, %v2193
    %v2746 = vpack.c.b16 %v2210, %v2202
    %v2747 = vpack.c.b16 %v2211, %v2203
    %v2748 = vpack.c.b16 %v2212, %v2204
    %v2749 = vpack.c.b16 %v2213, %v2205
    %v2750 = vpack.c.b16 %v2214, %v2206
    %v2751 = vpack.c.b16 %v2215, %v2207
    %v2752 = vpack.c.b16 %v2216, %v2208
    %v2753 = vpack.c.b16 %v2217, %v2209
    %v2754 = vpack.c.b16 %v2226, %v2218
    %v2755 = vpack.c.b16 %v2227, %v2219
    %v2756 = vpack.c.b16 %v2228, %v2220
    %v2757 = vpack.c.b16 %v2229, %v2221
    %v2758 = vpack.c.b16 %v2230, %v2222
    %v2759 = vpack.c.b16 %v2231, %v2223
    %v2760 = vpack.c.b16 %v2232, %v2224
    %v2761 = vpack.c.b16 %v2233, %v2225
    %v2762 = vpack.c.b16 %v2242, %v2234
    %v2763 = vpack.c.b16 %v2243, %v2235
    %v2764 = vpack.c.b16 %v2244, %v2236
    %v2765 = vpack.c.b16 %v2245, %v2237
    %v2766 = vpack.c.b16 %v2246, %v2238
    %v2767 = vpack.c.b16 %v2247, %v2239
    %v2768 = vpack.c.b16 %v2248, %v2240
    %v2769 = vpack.c.b16 %v2249, %v2241
    %v2770 = vpack.c.b16 %v2258, %v2250
    %v2771 = vpack.c.b16 %v2259, %v2251
    %v2772 = vpack.c.b16 %v2260, %v2252
    %v2773 = vpack.c.b16 %v2261, %v2253
    %v2774 = vpack.c.b16 %v2262, %v2254
    %v2775 = vpack.c.b16 %v2263, %v2255
    %v2776 = vpack.c.b16 %v2264, %v2256
    %v2777 = vpack.c.b16 %v2265, %v2257
    %3290 = vmatpush.bf16.msra.mxu0 %v2322
    %3291 = vmatpush.bf16.msra.mxu0 %v2314
    %3292 = vmatpush.bf16.msra.mxu0 %v2306
    %3293 = vmatpush.bf16.msra.mxu0 %v2298
    %3294 = vmatpush.bf16.msra.mxu0 %v2290
    %3295 = vmatpush.bf16.msra.mxu0 %v2282
    %3296 = vmatpush.bf16.msra.mxu0 %v2274
    %3297 = vmatpush.bf16.msra.mxu0 %v2266
    %3298 = vmatmul.bf16.gmra.mxu0 %v192
    %v3299 = vpop.f32.mrf.mxu0
    %v3300 = vadd.f32 %v714, %v3299
    %v3301 = vpop.f32.mrf.mxu0
    %3302 = vdwg.mxu0
    %3303 = vmatpush.bf16.msra.mxu0 %v2386
    %3304 = vmatpush.bf16.msra.mxu0 %v2378
    %3305 = vmatpush.bf16.msra.mxu0 %v2370
    %3306 = vmatpush.bf16.msra.mxu0 %v2362
    %3307 = vmatpush.bf16.msra.mxu0 %v2354
    %3308 = vmatpush.bf16.msra.mxu0 %v2346
    %3309 = vmatpush.bf16.msra.mxu0 %v2338
    %3310 = vmatpush.bf16.msra.mxu0 %v2330
    %3311 = vmatmul.bf16.gmra.mxu0 %v193
    %v3312 = vpop.f32.mrf.mxu0
    %v3313 = vadd.f32 %v3300, %v3312
    %v3314 = vpop.f32.mrf.mxu0
    %3315 = vdwg.mxu0
    %3316 = vmatpush.bf16.msra.mxu0 %v2450
    %3317 = vmatpush.bf16.msra.mxu0 %v2442
    %3318 = vmatpush.bf16.msra.mxu0 %v2434
    %3319 = vmatpush.bf16.msra.mxu0 %v2426
    %3320 = vmatpush.bf16.msra.mxu0 %v2418
    %3321 = vmatpush.bf16.msra.mxu0 %v2410
    %3322 = vmatpush.bf16.msra.mxu0 %v2402
    %3323 = vmatpush.bf16.msra.mxu0 %v2394
    %3324 = vmatmul.bf16.gmra.mxu0 %v194
    %v3325 = vpop.f32.mrf.mxu0
    %v3326 = vadd.f32 %v3313, %v3325
    %v3327 = vpop.f32.mrf.mxu0
    %3328 = vdwg.mxu0
    %3329 = vmatpush.bf16.msra.mxu0 %v2514
    %3330 = vmatpush.bf16.msra.mxu0 %v2506
    %3331 = vmatpush.bf16.msra.mxu0 %v2498
    %3332 = vmatpush.bf16.msra.mxu0 %v2490
    %3333 = vmatpush.bf16.msra.mxu0 %v2482
    %3334 = vmatpush.bf16.msra.mxu0 %v2474
    %3335 = vmatpush.bf16.msra.mxu0 %v2466
    %3336 = vmatpush.bf16.msra.mxu0 %v2458
    %3337 = vmatmul.bf16.gmra.mxu0 %v195
    %v3338 = vpop.f32.mrf.mxu0
    %v3339 = vadd.f32 %v3326, %v3338
    %v3340 = vpop.f32.mrf.mxu0
    %3341 = vdwg.mxu0
    %3342 = vmatpush.bf16.msra.mxu0 %v2578
    %3343 = vmatpush.bf16.msra.mxu0 %v2570
    %3344 = vmatpush.bf16.msra.mxu0 %v2562
    %3345 = vmatpush.bf16.msra.mxu0 %v2554
    %3346 = vmatpush.bf16.msra.mxu0 %v2546
    %3347 = vmatpush.bf16.msra.mxu0 %v2538
    %3348 = vmatpush.bf16.msra.mxu0 %v2530
    %3349 = vmatpush.bf16.msra.mxu0 %v2522
    %3350 = vmatmul.bf16.gmra.mxu0 %v196
    %v3351 = vpop.f32.mrf.mxu0
    %v3352 = vadd.f32 %v3339, %v3351
    %v3353 = vpop.f32.mrf.mxu0
    %3354 = vdwg.mxu0
    %3355 = vmatpush.bf16.msra.mxu0 %v2642
    %3356 = vmatpush.bf16.msra.mxu0 %v2634
    %3357 = vmatpush.bf16.msra.mxu0 %v2626
    %3358 = vmatpush.bf16.msra.mxu0 %v2618
    %3359 = vmatpush.bf16.msra.mxu0 %v2610
    %3360 = vmatpush.bf16.msra.mxu0 %v2602
    %3361 = vmatpush.bf16.msra.mxu0 %v2594
    %3362 = vmatpush.bf16.msra.mxu0 %v2586
    %3363 = vmatmul.bf16.gmra.mxu0 %v197
    %v3364 = vpop.f32.mrf.mxu0
    %v3365 = vadd.f32 %v3352, %v3364
    %v3366 = vpop.f32.mrf.mxu0
    %3367 = vdwg.mxu0
    %3368 = vmatpush.bf16.msra.mxu0 %v2706
    %3369 = vmatpush.bf16.msra.mxu0 %v2698
    %3370 = vmatpush.bf16.msra.mxu0 %v2690
    %3371 = vmatpush.bf16.msra.mxu0 %v2682
    %3372 = vmatpush.bf16.msra.mxu0 %v2674
    %3373 = vmatpush.bf16.msra.mxu0 %v2666
    %3374 = vmatpush.bf16.msra.mxu0 %v2658
    %3375 = vmatpush.bf16.msra.mxu0 %v2650
    %3376 = vmatmul.bf16.gmra.mxu0 %v198
    %v3377 = vpop.f32.mrf.mxu0
    %v3378 = vadd.f32 %v3365, %v3377
    %v3379 = vpop.f32.mrf.mxu0
    %3380 = vdwg.mxu0
    %3381 = vmatpush.bf16.msra.mxu0 %v2770
    %3382 = vmatpush.bf16.msra.mxu0 %v2762
    %3383 = vmatpush.bf16.msra.mxu0 %v2754
    %3384 = vmatpush.bf16.msra.mxu0 %v2746
    %3385 = vmatpush.bf16.msra.mxu0 %v2738
    %3386 = vmatpush.bf16.msra.mxu0 %v2730
    %3387 = vmatpush.bf16.msra.mxu0 %v2722
    %3388 = vmatpush.bf16.msra.mxu0 %v2714
    %3389 = vmatmul.bf16.gmra.mxu0 %v199
    %v3390 = vpop.f32.mrf.mxu0
    %v3391 = vadd.f32 %v3378, %v3390
    %v3392 = vpop.f32.mrf.mxu0
    %3393 = vdwg.mxu0
    %3394 = vmatpush.bf16.msra.mxu0 %v2323
    %3395 = vmatpush.bf16.msra.mxu0 %v2315
    %3396 = vmatpush.bf16.msra.mxu0 %v2307
    %3397 = vmatpush.bf16.msra.mxu0 %v2299
    %3398 = vmatpush.bf16.msra.mxu0 %v2291
    %3399 = vmatpush.bf16.msra.mxu0 %v2283
    %3400 = vmatpush.bf16.msra.mxu0 %v2275
    %3401 = vmatpush.bf16.msra.mxu0 %v2267
    %3402 = vmatmul.bf16.gmra.mxu0 %v192
    %v3403 = vpop.f32.mrf.mxu0
    %v3404 = vadd.f32 %v715, %v3403
    %v3405 = vpop.f32.mrf.mxu0
    %3406 = vdwg.mxu0
    %3407 = vmatpush.bf16.msra.mxu0 %v2387
    %3408 = vmatpush.bf16.msra.mxu0 %v2379
    %3409 = vmatpush.bf16.msra.mxu0 %v2371
    %3410 = vmatpush.bf16.msra.mxu0 %v2363
    %3411 = vmatpush.bf16.msra.mxu0 %v2355
    %3412 = vmatpush.bf16.msra.mxu0 %v2347
    %3413 = vmatpush.bf16.msra.mxu0 %v2339
    %3414 = vmatpush.bf16.msra.mxu0 %v2331
    %3415 = vmatmul.bf16.gmra.mxu0 %v193
    %v3416 = vpop.f32.mrf.mxu0
    %v3417 = vadd.f32 %v3404, %v3416
    %v3418 = vpop.f32.mrf.mxu0
    %3419 = vdwg.mxu0
    %3420 = vmatpush.bf16.msra.mxu0 %v2451
    %3421 = vmatpush.bf16.msra.mxu0 %v2443
    %3422 = vmatpush.bf16.msra.mxu0 %v2435
    %3423 = vmatpush.bf16.msra.mxu0 %v2427
    %3424 = vmatpush.bf16.msra.mxu0 %v2419
    %3425 = vmatpush.bf16.msra.mxu0 %v2411
    %3426 = vmatpush.bf16.msra.mxu0 %v2403
    %3427 = vmatpush.bf16.msra.mxu0 %v2395
    %3428 = vmatmul.bf16.gmra.mxu0 %v194
    %v3429 = vpop.f32.mrf.mxu0
    %v3430 = vadd.f32 %v3417, %v3429
    %v3431 = vpop.f32.mrf.mxu0
    %3432 = vdwg.mxu0
    %3433 = vmatpush.bf16.msra.mxu0 %v2515
    %3434 = vmatpush.bf16.msra.mxu0 %v2507
    %3435 = vmatpush.bf16.msra.mxu0 %v2499
    %3436 = vmatpush.bf16.msra.mxu0 %v2491
    %3437 = vmatpush.bf16.msra.mxu0 %v2483
    %3438 = vmatpush.bf16.msra.mxu0 %v2475
    %3439 = vmatpush.bf16.msra.mxu0 %v2467
    %3440 = vmatpush.bf16.msra.mxu0 %v2459
    %3441 = vmatmul.bf16.gmra.mxu0 %v195
    %v3442 = vpop.f32.mrf.mxu0
    %v3443 = vadd.f32 %v3430, %v3442
    %v3444 = vpop.f32.mrf.mxu0
    %3445 = vdwg.mxu0
    %3446 = vmatpush.bf16.msra.mxu0 %v2579
    %3447 = vmatpush.bf16.msra.mxu0 %v2571
    %3448 = vmatpush.bf16.msra.mxu0 %v2563
    %3449 = vmatpush.bf16.msra.mxu0 %v2555
    %3450 = vmatpush.bf16.msra.mxu0 %v2547
    %3451 = vmatpush.bf16.msra.mxu0 %v2539
    %3452 = vmatpush.bf16.msra.mxu0 %v2531
    %3453 = vmatpush.bf16.msra.mxu0 %v2523
    %3454 = vmatmul.bf16.gmra.mxu0 %v196
    %v3455 = vpop.f32.mrf.mxu0
    %v3456 = vadd.f32 %v3443, %v3455
    %v3457 = vpop.f32.mrf.mxu0
    %3458 = vdwg.mxu0
    %3459 = vmatpush.bf16.msra.mxu0 %v2643
    %3460 = vmatpush.bf16.msra.mxu0 %v2635
    %3461 = vmatpush.bf16.msra.mxu0 %v2627
    %3462 = vmatpush.bf16.msra.mxu0 %v2619
    %3463 = vmatpush.bf16.msra.mxu0 %v2611
    %3464 = vmatpush.bf16.msra.mxu0 %v2603
    %3465 = vmatpush.bf16.msra.mxu0 %v2595
    %3466 = vmatpush.bf16.msra.mxu0 %v2587
    %3467 = vmatmul.bf16.gmra.mxu0 %v197
    %v3468 = vpop.f32.mrf.mxu0
    %v3469 = vadd.f32 %v3456, %v3468
    %v3470 = vpop.f32.mrf.mxu0
    %3471 = vdwg.mxu0
    %3472 = vmatpush.bf16.msra.mxu0 %v2707
    %3473 = vmatpush.bf16.msra.mxu0 %v2699
    %3474 = vmatpush.bf16.msra.mxu0 %v2691
    %3475 = vmatpush.bf16.msra.mxu0 %v2683
    %3476 = vmatpush.bf16.msra.mxu0 %v2675
    %3477 = vmatpush.bf16.msra.mxu0 %v2667
    %3478 = vmatpush.bf16.msra.mxu0 %v2659
    %3479 = vmatpush.bf16.msra.mxu0 %v2651
    %3480 = vmatmul.bf16.gmra.mxu0 %v198
    %v3481 = vpop.f32.mrf.mxu0
    %v3482 = vadd.f32 %v3469, %v3481
    %v3483 = vpop.f32.mrf.mxu0
    %3484 = vdwg.mxu0
    %3485 = vmatpush.bf16.msra.mxu0 %v2771
    %3486 = vmatpush.bf16.msra.mxu0 %v2763
    %3487 = vmatpush.bf16.msra.mxu0 %v2755
    %3488 = vmatpush.bf16.msra.mxu0 %v2747
    %3489 = vmatpush.bf16.msra.mxu0 %v2739
    %3490 = vmatpush.bf16.msra.mxu0 %v2731
    %3491 = vmatpush.bf16.msra.mxu0 %v2723
    %3492 = vmatpush.bf16.msra.mxu0 %v2715
    %3493 = vmatmul.bf16.gmra.mxu0 %v199
    %v3494 = vpop.f32.mrf.mxu0
    %v3495 = vadd.f32 %v3482, %v3494
    %v3496 = vpop.f32.mrf.mxu0
    %3497 = vdwg.mxu0
    %3498 = vmatpush.bf16.msra.mxu0 %v2324
    %3499 = vmatpush.bf16.msra.mxu0 %v2316
    %3500 = vmatpush.bf16.msra.mxu0 %v2308
    %3501 = vmatpush.bf16.msra.mxu0 %v2300
    %3502 = vmatpush.bf16.msra.mxu0 %v2292
    %3503 = vmatpush.bf16.msra.mxu0 %v2284
    %3504 = vmatpush.bf16.msra.mxu0 %v2276
    %3505 = vmatpush.bf16.msra.mxu0 %v2268
    %3506 = vmatmul.bf16.gmra.mxu0 %v192
    %v3507 = vpop.f32.mrf.mxu0
    %v3508 = vadd.f32 %v716, %v3507
    %v3509 = vpop.f32.mrf.mxu0
    %3510 = vdwg.mxu0
    %3511 = vmatpush.bf16.msra.mxu0 %v2388
    %3512 = vmatpush.bf16.msra.mxu0 %v2380
    %3513 = vmatpush.bf16.msra.mxu0 %v2372
    %3514 = vmatpush.bf16.msra.mxu0 %v2364
    %3515 = vmatpush.bf16.msra.mxu0 %v2356
    %3516 = vmatpush.bf16.msra.mxu0 %v2348
    %3517 = vmatpush.bf16.msra.mxu0 %v2340
    %3518 = vmatpush.bf16.msra.mxu0 %v2332
    %3519 = vmatmul.bf16.gmra.mxu0 %v193
    %v3520 = vpop.f32.mrf.mxu0
    %v3521 = vadd.f32 %v3508, %v3520
    %v3522 = vpop.f32.mrf.mxu0
    %3523 = vdwg.mxu0
    %3524 = vmatpush.bf16.msra.mxu0 %v2452
    %3525 = vmatpush.bf16.msra.mxu0 %v2444
    %3526 = vmatpush.bf16.msra.mxu0 %v2436
    %3527 = vmatpush.bf16.msra.mxu0 %v2428
    %3528 = vmatpush.bf16.msra.mxu0 %v2420
    %3529 = vmatpush.bf16.msra.mxu0 %v2412
    %3530 = vmatpush.bf16.msra.mxu0 %v2404
    %3531 = vmatpush.bf16.msra.mxu0 %v2396
    %3532 = vmatmul.bf16.gmra.mxu0 %v194
    %v3533 = vpop.f32.mrf.mxu0
    %v3534 = vadd.f32 %v3521, %v3533
    %v3535 = vpop.f32.mrf.mxu0
    %3536 = vdwg.mxu0
    %3537 = vmatpush.bf16.msra.mxu0 %v2516
    %3538 = vmatpush.bf16.msra.mxu0 %v2508
    %3539 = vmatpush.bf16.msra.mxu0 %v2500
    %3540 = vmatpush.bf16.msra.mxu0 %v2492
    %3541 = vmatpush.bf16.msra.mxu0 %v2484
    %3542 = vmatpush.bf16.msra.mxu0 %v2476
    %3543 = vmatpush.bf16.msra.mxu0 %v2468
    %3544 = vmatpush.bf16.msra.mxu0 %v2460
    %3545 = vmatmul.bf16.gmra.mxu0 %v195
    %v3546 = vpop.f32.mrf.mxu0
    %v3547 = vadd.f32 %v3534, %v3546
    %v3548 = vpop.f32.mrf.mxu0
    %3549 = vdwg.mxu0
    %3550 = vmatpush.bf16.msra.mxu0 %v2580
    %3551 = vmatpush.bf16.msra.mxu0 %v2572
    %3552 = vmatpush.bf16.msra.mxu0 %v2564
    %3553 = vmatpush.bf16.msra.mxu0 %v2556
    %3554 = vmatpush.bf16.msra.mxu0 %v2548
    %3555 = vmatpush.bf16.msra.mxu0 %v2540
    %3556 = vmatpush.bf16.msra.mxu0 %v2532
    %3557 = vmatpush.bf16.msra.mxu0 %v2524
    %3558 = vmatmul.bf16.gmra.mxu0 %v196
    %v3559 = vpop.f32.mrf.mxu0
    %v3560 = vadd.f32 %v3547, %v3559
    %v3561 = vpop.f32.mrf.mxu0
    %3562 = vdwg.mxu0
    %3563 = vmatpush.bf16.msra.mxu0 %v2644
    %3564 = vmatpush.bf16.msra.mxu0 %v2636
    %3565 = vmatpush.bf16.msra.mxu0 %v2628
    %3566 = vmatpush.bf16.msra.mxu0 %v2620
    %3567 = vmatpush.bf16.msra.mxu0 %v2612
    %3568 = vmatpush.bf16.msra.mxu0 %v2604
    %3569 = vmatpush.bf16.msra.mxu0 %v2596
    %3570 = vmatpush.bf16.msra.mxu0 %v2588
    %3571 = vmatmul.bf16.gmra.mxu0 %v197
    %v3572 = vpop.f32.mrf.mxu0
    %v3573 = vadd.f32 %v3560, %v3572
    %v3574 = vpop.f32.mrf.mxu0
    %3575 = vdwg.mxu0
    %3576 = vmatpush.bf16.msra.mxu0 %v2708
    %3577 = vmatpush.bf16.msra.mxu0 %v2700
    %3578 = vmatpush.bf16.msra.mxu0 %v2692
    %3579 = vmatpush.bf16.msra.mxu0 %v2684
    %3580 = vmatpush.bf16.msra.mxu0 %v2676
    %3581 = vmatpush.bf16.msra.mxu0 %v2668
    %3582 = vmatpush.bf16.msra.mxu0 %v2660
    %3583 = vmatpush.bf16.msra.mxu0 %v2652
    %3584 = vmatmul.bf16.gmra.mxu0 %v198
    %v3585 = vpop.f32.mrf.mxu0
    %v3586 = vadd.f32 %v3573, %v3585
    %v3587 = vpop.f32.mrf.mxu0
    %3588 = vdwg.mxu0
    %3589 = vmatpush.bf16.msra.mxu0 %v2772
    %3590 = vmatpush.bf16.msra.mxu0 %v2764
    %3591 = vmatpush.bf16.msra.mxu0 %v2756
    %3592 = vmatpush.bf16.msra.mxu0 %v2748
    %3593 = vmatpush.bf16.msra.mxu0 %v2740
    %3594 = vmatpush.bf16.msra.mxu0 %v2732
    %3595 = vmatpush.bf16.msra.mxu0 %v2724
    %3596 = vmatpush.bf16.msra.mxu0 %v2716
    %3597 = vmatmul.bf16.gmra.mxu0 %v199
    %v3598 = vpop.f32.mrf.mxu0
    %v3599 = vadd.f32 %v3586, %v3598
    %v3600 = vpop.f32.mrf.mxu0
    %3601 = vdwg.mxu0
    %3602 = vmatpush.bf16.msra.mxu0 %v2325
    %3603 = vmatpush.bf16.msra.mxu0 %v2317
    %3604 = vmatpush.bf16.msra.mxu0 %v2309
    %3605 = vmatpush.bf16.msra.mxu0 %v2301
    %3606 = vmatpush.bf16.msra.mxu0 %v2293
    %3607 = vmatpush.bf16.msra.mxu0 %v2285
    %3608 = vmatpush.bf16.msra.mxu0 %v2277
    %3609 = vmatpush.bf16.msra.mxu0 %v2269
    %3610 = vmatmul.bf16.gmra.mxu0 %v192
    %v3611 = vpop.f32.mrf.mxu0
    %v3612 = vadd.f32 %v717, %v3611
    %v3613 = vpop.f32.mrf.mxu0
    %3614 = vdwg.mxu0
    %3615 = vmatpush.bf16.msra.mxu0 %v2389
    %3616 = vmatpush.bf16.msra.mxu0 %v2381
    %3617 = vmatpush.bf16.msra.mxu0 %v2373
    %3618 = vmatpush.bf16.msra.mxu0 %v2365
    %3619 = vmatpush.bf16.msra.mxu0 %v2357
    %3620 = vmatpush.bf16.msra.mxu0 %v2349
    %3621 = vmatpush.bf16.msra.mxu0 %v2341
    %3622 = vmatpush.bf16.msra.mxu0 %v2333
    %3623 = vmatmul.bf16.gmra.mxu0 %v193
    %v3624 = vpop.f32.mrf.mxu0
    %v3625 = vadd.f32 %v3612, %v3624
    %v3626 = vpop.f32.mrf.mxu0
    %3627 = vdwg.mxu0
    %3628 = vmatpush.bf16.msra.mxu0 %v2453
    %3629 = vmatpush.bf16.msra.mxu0 %v2445
    %3630 = vmatpush.bf16.msra.mxu0 %v2437
    %3631 = vmatpush.bf16.msra.mxu0 %v2429
    %3632 = vmatpush.bf16.msra.mxu0 %v2421
    %3633 = vmatpush.bf16.msra.mxu0 %v2413
    %3634 = vmatpush.bf16.msra.mxu0 %v2405
    %3635 = vmatpush.bf16.msra.mxu0 %v2397
    %3636 = vmatmul.bf16.gmra.mxu0 %v194
    %v3637 = vpop.f32.mrf.mxu0
    %v3638 = vadd.f32 %v3625, %v3637
    %v3639 = vpop.f32.mrf.mxu0
    %3640 = vdwg.mxu0
    %3641 = vmatpush.bf16.msra.mxu0 %v2517
    %3642 = vmatpush.bf16.msra.mxu0 %v2509
    %3643 = vmatpush.bf16.msra.mxu0 %v2501
    %3644 = vmatpush.bf16.msra.mxu0 %v2493
    %3645 = vmatpush.bf16.msra.mxu0 %v2485
    %3646 = vmatpush.bf16.msra.mxu0 %v2477
    %3647 = vmatpush.bf16.msra.mxu0 %v2469
    %3648 = vmatpush.bf16.msra.mxu0 %v2461
    %3649 = vmatmul.bf16.gmra.mxu0 %v195
    %v3650 = vpop.f32.mrf.mxu0
    %v3651 = vadd.f32 %v3638, %v3650
    %v3652 = vpop.f32.mrf.mxu0
    %3653 = vdwg.mxu0
    %3654 = vmatpush.bf16.msra.mxu0 %v2581
    %3655 = vmatpush.bf16.msra.mxu0 %v2573
    %3656 = vmatpush.bf16.msra.mxu0 %v2565
    %3657 = vmatpush.bf16.msra.mxu0 %v2557
    %3658 = vmatpush.bf16.msra.mxu0 %v2549
    %3659 = vmatpush.bf16.msra.mxu0 %v2541
    %3660 = vmatpush.bf16.msra.mxu0 %v2533
    %3661 = vmatpush.bf16.msra.mxu0 %v2525
    %3662 = vmatmul.bf16.gmra.mxu0 %v196
    %v3663 = vpop.f32.mrf.mxu0
    %v3664 = vadd.f32 %v3651, %v3663
    %v3665 = vpop.f32.mrf.mxu0
    %3666 = vdwg.mxu0
    %3667 = vmatpush.bf16.msra.mxu0 %v2645
    %3668 = vmatpush.bf16.msra.mxu0 %v2637
    %3669 = vmatpush.bf16.msra.mxu0 %v2629
    %3670 = vmatpush.bf16.msra.mxu0 %v2621
    %3671 = vmatpush.bf16.msra.mxu0 %v2613
    %3672 = vmatpush.bf16.msra.mxu0 %v2605
    %3673 = vmatpush.bf16.msra.mxu0 %v2597
    %3674 = vmatpush.bf16.msra.mxu0 %v2589
    %3675 = vmatmul.bf16.gmra.mxu0 %v197
    %v3676 = vpop.f32.mrf.mxu0
    %v3677 = vadd.f32 %v3664, %v3676
    %v3678 = vpop.f32.mrf.mxu0
    %3679 = vdwg.mxu0
    %3680 = vmatpush.bf16.msra.mxu0 %v2709
    %3681 = vmatpush.bf16.msra.mxu0 %v2701
    %3682 = vmatpush.bf16.msra.mxu0 %v2693
    %3683 = vmatpush.bf16.msra.mxu0 %v2685
    %3684 = vmatpush.bf16.msra.mxu0 %v2677
    %3685 = vmatpush.bf16.msra.mxu0 %v2669
    %3686 = vmatpush.bf16.msra.mxu0 %v2661
    %3687 = vmatpush.bf16.msra.mxu0 %v2653
    %3688 = vmatmul.bf16.gmra.mxu0 %v198
    %v3689 = vpop.f32.mrf.mxu0
    %v3690 = vadd.f32 %v3677, %v3689
    %v3691 = vpop.f32.mrf.mxu0
    %3692 = vdwg.mxu0
    %3693 = vmatpush.bf16.msra.mxu0 %v2773
    %3694 = vmatpush.bf16.msra.mxu0 %v2765
    %3695 = vmatpush.bf16.msra.mxu0 %v2757
    %3696 = vmatpush.bf16.msra.mxu0 %v2749
    %3697 = vmatpush.bf16.msra.mxu0 %v2741
    %3698 = vmatpush.bf16.msra.mxu0 %v2733
    %3699 = vmatpush.bf16.msra.mxu0 %v2725
    %3700 = vmatpush.bf16.msra.mxu0 %v2717
    %3701 = vmatmul.bf16.gmra.mxu0 %v199
    %v3702 = vpop.f32.mrf.mxu0
    %v3703 = vadd.f32 %v3690, %v3702
    %v3704 = vpop.f32.mrf.mxu0
    %3705 = vdwg.mxu0
    %3706 = vmatpush.bf16.msra.mxu0 %v2326
    %3707 = vmatpush.bf16.msra.mxu0 %v2318
    %3708 = vmatpush.bf16.msra.mxu0 %v2310
    %3709 = vmatpush.bf16.msra.mxu0 %v2302
    %3710 = vmatpush.bf16.msra.mxu0 %v2294
    %3711 = vmatpush.bf16.msra.mxu0 %v2286
    %3712 = vmatpush.bf16.msra.mxu0 %v2278
    %3713 = vmatpush.bf16.msra.mxu0 %v2270
    %3714 = vmatmul.bf16.gmra.mxu0 %v192
    %v3715 = vpop.f32.mrf.mxu0
    %v3716 = vadd.f32 %v718, %v3715
    %v3717 = vpop.f32.mrf.mxu0
    %3718 = vdwg.mxu0
    %3719 = vmatpush.bf16.msra.mxu0 %v2390
    %3720 = vmatpush.bf16.msra.mxu0 %v2382
    %3721 = vmatpush.bf16.msra.mxu0 %v2374
    %3722 = vmatpush.bf16.msra.mxu0 %v2366
    %3723 = vmatpush.bf16.msra.mxu0 %v2358
    %3724 = vmatpush.bf16.msra.mxu0 %v2350
    %3725 = vmatpush.bf16.msra.mxu0 %v2342
    %3726 = vmatpush.bf16.msra.mxu0 %v2334
    %3727 = vmatmul.bf16.gmra.mxu0 %v193
    %v3728 = vpop.f32.mrf.mxu0
    %v3729 = vadd.f32 %v3716, %v3728
    %v3730 = vpop.f32.mrf.mxu0
    %3731 = vdwg.mxu0
    %3732 = vmatpush.bf16.msra.mxu0 %v2454
    %3733 = vmatpush.bf16.msra.mxu0 %v2446
    %3734 = vmatpush.bf16.msra.mxu0 %v2438
    %3735 = vmatpush.bf16.msra.mxu0 %v2430
    %3736 = vmatpush.bf16.msra.mxu0 %v2422
    %3737 = vmatpush.bf16.msra.mxu0 %v2414
    %3738 = vmatpush.bf16.msra.mxu0 %v2406
    %3739 = vmatpush.bf16.msra.mxu0 %v2398
    %3740 = vmatmul.bf16.gmra.mxu0 %v194
    %v3741 = vpop.f32.mrf.mxu0
    %v3742 = vadd.f32 %v3729, %v3741
    %v3743 = vpop.f32.mrf.mxu0
    %3744 = vdwg.mxu0
    %3745 = vmatpush.bf16.msra.mxu0 %v2518
    %3746 = vmatpush.bf16.msra.mxu0 %v2510
    %3747 = vmatpush.bf16.msra.mxu0 %v2502
    %3748 = vmatpush.bf16.msra.mxu0 %v2494
    %3749 = vmatpush.bf16.msra.mxu0 %v2486
    %3750 = vmatpush.bf16.msra.mxu0 %v2478
    %3751 = vmatpush.bf16.msra.mxu0 %v2470
    %3752 = vmatpush.bf16.msra.mxu0 %v2462
    %3753 = vmatmul.bf16.gmra.mxu0 %v195
    %v3754 = vpop.f32.mrf.mxu0
    %v3755 = vadd.f32 %v3742, %v3754
    %v3756 = vpop.f32.mrf.mxu0
    %3757 = vdwg.mxu0
    %3758 = vmatpush.bf16.msra.mxu0 %v2582
    %3759 = vmatpush.bf16.msra.mxu0 %v2574
    %3760 = vmatpush.bf16.msra.mxu0 %v2566
    %3761 = vmatpush.bf16.msra.mxu0 %v2558
    %3762 = vmatpush.bf16.msra.mxu0 %v2550
    %3763 = vmatpush.bf16.msra.mxu0 %v2542
    %3764 = vmatpush.bf16.msra.mxu0 %v2534
    %3765 = vmatpush.bf16.msra.mxu0 %v2526
    %3766 = vmatmul.bf16.gmra.mxu0 %v196
    %v3767 = vpop.f32.mrf.mxu0
    %v3768 = vadd.f32 %v3755, %v3767
    %v3769 = vpop.f32.mrf.mxu0
    %3770 = vdwg.mxu0
    %3771 = vmatpush.bf16.msra.mxu0 %v2646
    %3772 = vmatpush.bf16.msra.mxu0 %v2638
    %3773 = vmatpush.bf16.msra.mxu0 %v2630
    %3774 = vmatpush.bf16.msra.mxu0 %v2622
    %3775 = vmatpush.bf16.msra.mxu0 %v2614
    %3776 = vmatpush.bf16.msra.mxu0 %v2606
    %3777 = vmatpush.bf16.msra.mxu0 %v2598
    %3778 = vmatpush.bf16.msra.mxu0 %v2590
    %3779 = vmatmul.bf16.gmra.mxu0 %v197
    %v3780 = vpop.f32.mrf.mxu0
    %v3781 = vadd.f32 %v3768, %v3780
    %v3782 = vpop.f32.mrf.mxu0
    %3783 = vdwg.mxu0
    %3784 = vmatpush.bf16.msra.mxu0 %v2710
    %3785 = vmatpush.bf16.msra.mxu0 %v2702
    %3786 = vmatpush.bf16.msra.mxu0 %v2694
    %3787 = vmatpush.bf16.msra.mxu0 %v2686
    %3788 = vmatpush.bf16.msra.mxu0 %v2678
    %3789 = vmatpush.bf16.msra.mxu0 %v2670
    %3790 = vmatpush.bf16.msra.mxu0 %v2662
    %3791 = vmatpush.bf16.msra.mxu0 %v2654
    %3792 = vmatmul.bf16.gmra.mxu0 %v198
    %v3793 = vpop.f32.mrf.mxu0
    %v3794 = vadd.f32 %v3781, %v3793
    %v3795 = vpop.f32.mrf.mxu0
    %3796 = vdwg.mxu0
    %3797 = vmatpush.bf16.msra.mxu0 %v2774
    %3798 = vmatpush.bf16.msra.mxu0 %v2766
    %3799 = vmatpush.bf16.msra.mxu0 %v2758
    %3800 = vmatpush.bf16.msra.mxu0 %v2750
    %3801 = vmatpush.bf16.msra.mxu0 %v2742
    %3802 = vmatpush.bf16.msra.mxu0 %v2734
    %3803 = vmatpush.bf16.msra.mxu0 %v2726
    %3804 = vmatpush.bf16.msra.mxu0 %v2718
    %3805 = vmatmul.bf16.gmra.mxu0 %v199
    %v3806 = vpop.f32.mrf.mxu0
    %v3807 = vadd.f32 %v3794, %v3806
    %v3808 = vpop.f32.mrf.mxu0
    %3809 = vdwg.mxu0
    %3810 = vmatpush.bf16.msra.mxu0 %v2327
    %3811 = vmatpush.bf16.msra.mxu0 %v2319
    %3812 = vmatpush.bf16.msra.mxu0 %v2311
    %3813 = vmatpush.bf16.msra.mxu0 %v2303
    %3814 = vmatpush.bf16.msra.mxu0 %v2295
    %3815 = vmatpush.bf16.msra.mxu0 %v2287
    %3816 = vmatpush.bf16.msra.mxu0 %v2279
    %3817 = vmatpush.bf16.msra.mxu0 %v2271
    %3818 = vmatmul.bf16.gmra.mxu0 %v192
    %v3819 = vpop.f32.mrf.mxu0
    %v3820 = vadd.f32 %v719, %v3819
    %v3821 = vpop.f32.mrf.mxu0
    %3822 = vdwg.mxu0
    %3823 = vmatpush.bf16.msra.mxu0 %v2391
    %3824 = vmatpush.bf16.msra.mxu0 %v2383
    %3825 = vmatpush.bf16.msra.mxu0 %v2375
    %3826 = vmatpush.bf16.msra.mxu0 %v2367
    %3827 = vmatpush.bf16.msra.mxu0 %v2359
    %3828 = vmatpush.bf16.msra.mxu0 %v2351
    %3829 = vmatpush.bf16.msra.mxu0 %v2343
    %3830 = vmatpush.bf16.msra.mxu0 %v2335
    %3831 = vmatmul.bf16.gmra.mxu0 %v193
    %v3832 = vpop.f32.mrf.mxu0
    %v3833 = vadd.f32 %v3820, %v3832
    %v3834 = vpop.f32.mrf.mxu0
    %3835 = vdwg.mxu0
    %3836 = vmatpush.bf16.msra.mxu0 %v2455
    %3837 = vmatpush.bf16.msra.mxu0 %v2447
    %3838 = vmatpush.bf16.msra.mxu0 %v2439
    %3839 = vmatpush.bf16.msra.mxu0 %v2431
    %3840 = vmatpush.bf16.msra.mxu0 %v2423
    %3841 = vmatpush.bf16.msra.mxu0 %v2415
    %3842 = vmatpush.bf16.msra.mxu0 %v2407
    %3843 = vmatpush.bf16.msra.mxu0 %v2399
    %3844 = vmatmul.bf16.gmra.mxu0 %v194
    %v3845 = vpop.f32.mrf.mxu0
    %v3846 = vadd.f32 %v3833, %v3845
    %v3847 = vpop.f32.mrf.mxu0
    %3848 = vdwg.mxu0
    %3849 = vmatpush.bf16.msra.mxu0 %v2519
    %3850 = vmatpush.bf16.msra.mxu0 %v2511
    %3851 = vmatpush.bf16.msra.mxu0 %v2503
    %3852 = vmatpush.bf16.msra.mxu0 %v2495
    %3853 = vmatpush.bf16.msra.mxu0 %v2487
    %3854 = vmatpush.bf16.msra.mxu0 %v2479
    %3855 = vmatpush.bf16.msra.mxu0 %v2471
    %3856 = vmatpush.bf16.msra.mxu0 %v2463
    %3857 = vmatmul.bf16.gmra.mxu0 %v195
    %v3858 = vpop.f32.mrf.mxu0
    %v3859 = vadd.f32 %v3846, %v3858
    %v3860 = vpop.f32.mrf.mxu0
    %3861 = vdwg.mxu0
    %3862 = vmatpush.bf16.msra.mxu0 %v2583
    %3863 = vmatpush.bf16.msra.mxu0 %v2575
    %3864 = vmatpush.bf16.msra.mxu0 %v2567
    %3865 = vmatpush.bf16.msra.mxu0 %v2559
    %3866 = vmatpush.bf16.msra.mxu0 %v2551
    %3867 = vmatpush.bf16.msra.mxu0 %v2543
    %3868 = vmatpush.bf16.msra.mxu0 %v2535
    %3869 = vmatpush.bf16.msra.mxu0 %v2527
    %3870 = vmatmul.bf16.gmra.mxu0 %v196
    %v3871 = vpop.f32.mrf.mxu0
    %v3872 = vadd.f32 %v3859, %v3871
    %v3873 = vpop.f32.mrf.mxu0
    %3874 = vdwg.mxu0
    %3875 = vmatpush.bf16.msra.mxu0 %v2647
    %3876 = vmatpush.bf16.msra.mxu0 %v2639
    %3877 = vmatpush.bf16.msra.mxu0 %v2631
    %3878 = vmatpush.bf16.msra.mxu0 %v2623
    %3879 = vmatpush.bf16.msra.mxu0 %v2615
    %3880 = vmatpush.bf16.msra.mxu0 %v2607
    %3881 = vmatpush.bf16.msra.mxu0 %v2599
    %3882 = vmatpush.bf16.msra.mxu0 %v2591
    %3883 = vmatmul.bf16.gmra.mxu0 %v197
    %v3884 = vpop.f32.mrf.mxu0
    %v3885 = vadd.f32 %v3872, %v3884
    %v3886 = vpop.f32.mrf.mxu0
    %3887 = vdwg.mxu0
    %3888 = vmatpush.bf16.msra.mxu0 %v2711
    %3889 = vmatpush.bf16.msra.mxu0 %v2703
    %3890 = vmatpush.bf16.msra.mxu0 %v2695
    %3891 = vmatpush.bf16.msra.mxu0 %v2687
    %3892 = vmatpush.bf16.msra.mxu0 %v2679
    %3893 = vmatpush.bf16.msra.mxu0 %v2671
    %3894 = vmatpush.bf16.msra.mxu0 %v2663
    %3895 = vmatpush.bf16.msra.mxu0 %v2655
    %3896 = vmatmul.bf16.gmra.mxu0 %v198
    %v3897 = vpop.f32.mrf.mxu0
    %v3898 = vadd.f32 %v3885, %v3897
    %v3899 = vpop.f32.mrf.mxu0
    %3900 = vdwg.mxu0
    %3901 = vmatpush.bf16.msra.mxu0 %v2775
    %3902 = vmatpush.bf16.msra.mxu0 %v2767
    %3903 = vmatpush.bf16.msra.mxu0 %v2759
    %3904 = vmatpush.bf16.msra.mxu0 %v2751
    %3905 = vmatpush.bf16.msra.mxu0 %v2743
    %3906 = vmatpush.bf16.msra.mxu0 %v2735
    %3907 = vmatpush.bf16.msra.mxu0 %v2727
    %3908 = vmatpush.bf16.msra.mxu0 %v2719
    %3909 = vmatmul.bf16.gmra.mxu0 %v199
    %v3910 = vpop.f32.mrf.mxu0
    %v3911 = vadd.f32 %v3898, %v3910
    %v3912 = vpop.f32.mrf.mxu0
    %3913 = vdwg.mxu0
    %3914 = vmatpush.bf16.msra.mxu0 %v2328
    %3915 = vmatpush.bf16.msra.mxu0 %v2320
    %3916 = vmatpush.bf16.msra.mxu0 %v2312
    %3917 = vmatpush.bf16.msra.mxu0 %v2304
    %3918 = vmatpush.bf16.msra.mxu0 %v2296
    %3919 = vmatpush.bf16.msra.mxu0 %v2288
    %3920 = vmatpush.bf16.msra.mxu0 %v2280
    %3921 = vmatpush.bf16.msra.mxu0 %v2272
    %3922 = vmatmul.bf16.gmra.mxu0 %v192
    %v3923 = vpop.f32.mrf.mxu0
    %v3924 = vadd.f32 %v720, %v3923
    %v3925 = vpop.f32.mrf.mxu0
    %3926 = vdwg.mxu0
    %3927 = vmatpush.bf16.msra.mxu0 %v2392
    %3928 = vmatpush.bf16.msra.mxu0 %v2384
    %3929 = vmatpush.bf16.msra.mxu0 %v2376
    %3930 = vmatpush.bf16.msra.mxu0 %v2368
    %3931 = vmatpush.bf16.msra.mxu0 %v2360
    %3932 = vmatpush.bf16.msra.mxu0 %v2352
    %3933 = vmatpush.bf16.msra.mxu0 %v2344
    %3934 = vmatpush.bf16.msra.mxu0 %v2336
    %3935 = vmatmul.bf16.gmra.mxu0 %v193
    %v3936 = vpop.f32.mrf.mxu0
    %v3937 = vadd.f32 %v3924, %v3936
    %v3938 = vpop.f32.mrf.mxu0
    %3939 = vdwg.mxu0
    %3940 = vmatpush.bf16.msra.mxu0 %v2456
    %3941 = vmatpush.bf16.msra.mxu0 %v2448
    %3942 = vmatpush.bf16.msra.mxu0 %v2440
    %3943 = vmatpush.bf16.msra.mxu0 %v2432
    %3944 = vmatpush.bf16.msra.mxu0 %v2424
    %3945 = vmatpush.bf16.msra.mxu0 %v2416
    %3946 = vmatpush.bf16.msra.mxu0 %v2408
    %3947 = vmatpush.bf16.msra.mxu0 %v2400
    %3948 = vmatmul.bf16.gmra.mxu0 %v194
    %v3949 = vpop.f32.mrf.mxu0
    %v3950 = vadd.f32 %v3937, %v3949
    %v3951 = vpop.f32.mrf.mxu0
    %3952 = vdwg.mxu0
    %3953 = vmatpush.bf16.msra.mxu0 %v2520
    %3954 = vmatpush.bf16.msra.mxu0 %v2512
    %3955 = vmatpush.bf16.msra.mxu0 %v2504
    %3956 = vmatpush.bf16.msra.mxu0 %v2496
    %3957 = vmatpush.bf16.msra.mxu0 %v2488
    %3958 = vmatpush.bf16.msra.mxu0 %v2480
    %3959 = vmatpush.bf16.msra.mxu0 %v2472
    %3960 = vmatpush.bf16.msra.mxu0 %v2464
    %3961 = vmatmul.bf16.gmra.mxu0 %v195
    %v3962 = vpop.f32.mrf.mxu0
    %v3963 = vadd.f32 %v3950, %v3962
    %v3964 = vpop.f32.mrf.mxu0
    %3965 = vdwg.mxu0
    %3966 = vmatpush.bf16.msra.mxu0 %v2584
    %3967 = vmatpush.bf16.msra.mxu0 %v2576
    %3968 = vmatpush.bf16.msra.mxu0 %v2568
    %3969 = vmatpush.bf16.msra.mxu0 %v2560
    %3970 = vmatpush.bf16.msra.mxu0 %v2552
    %3971 = vmatpush.bf16.msra.mxu0 %v2544
    %3972 = vmatpush.bf16.msra.mxu0 %v2536
    %3973 = vmatpush.bf16.msra.mxu0 %v2528
    %3974 = vmatmul.bf16.gmra.mxu0 %v196
    %v3975 = vpop.f32.mrf.mxu0
    %v3976 = vadd.f32 %v3963, %v3975
    %v3977 = vpop.f32.mrf.mxu0
    %3978 = vdwg.mxu0
    %3979 = vmatpush.bf16.msra.mxu0 %v2648
    %3980 = vmatpush.bf16.msra.mxu0 %v2640
    %3981 = vmatpush.bf16.msra.mxu0 %v2632
    %3982 = vmatpush.bf16.msra.mxu0 %v2624
    %3983 = vmatpush.bf16.msra.mxu0 %v2616
    %3984 = vmatpush.bf16.msra.mxu0 %v2608
    %3985 = vmatpush.bf16.msra.mxu0 %v2600
    %3986 = vmatpush.bf16.msra.mxu0 %v2592
    %3987 = vmatmul.bf16.gmra.mxu0 %v197
    %v3988 = vpop.f32.mrf.mxu0
    %v3989 = vadd.f32 %v3976, %v3988
    %v3990 = vpop.f32.mrf.mxu0
    %3991 = vdwg.mxu0
    %3992 = vmatpush.bf16.msra.mxu0 %v2712
    %3993 = vmatpush.bf16.msra.mxu0 %v2704
    %3994 = vmatpush.bf16.msra.mxu0 %v2696
    %3995 = vmatpush.bf16.msra.mxu0 %v2688
    %3996 = vmatpush.bf16.msra.mxu0 %v2680
    %3997 = vmatpush.bf16.msra.mxu0 %v2672
    %3998 = vmatpush.bf16.msra.mxu0 %v2664
    %3999 = vmatpush.bf16.msra.mxu0 %v2656
    %4000 = vmatmul.bf16.gmra.mxu0 %v198
    %v4001 = vpop.f32.mrf.mxu0
    %v4002 = vadd.f32 %v3989, %v4001
    %v4003 = vpop.f32.mrf.mxu0
    %4004 = vdwg.mxu0
    %4005 = vmatpush.bf16.msra.mxu0 %v2776
    %4006 = vmatpush.bf16.msra.mxu0 %v2768
    %4007 = vmatpush.bf16.msra.mxu0 %v2760
    %4008 = vmatpush.bf16.msra.mxu0 %v2752
    %4009 = vmatpush.bf16.msra.mxu0 %v2744
    %4010 = vmatpush.bf16.msra.mxu0 %v2736
    %4011 = vmatpush.bf16.msra.mxu0 %v2728
    %4012 = vmatpush.bf16.msra.mxu0 %v2720
    %4013 = vmatmul.bf16.gmra.mxu0 %v199
    %v4014 = vpop.f32.mrf.mxu0
    %v4015 = vadd.f32 %v4002, %v4014
    %v4016 = vpop.f32.mrf.mxu0
    %4017 = vdwg.mxu0
    %4018 = vmatpush.bf16.msra.mxu0 %v2329
    %4019 = vmatpush.bf16.msra.mxu0 %v2321
    %4020 = vmatpush.bf16.msra.mxu0 %v2313
    %4021 = vmatpush.bf16.msra.mxu0 %v2305
    %4022 = vmatpush.bf16.msra.mxu0 %v2297
    %4023 = vmatpush.bf16.msra.mxu0 %v2289
    %4024 = vmatpush.bf16.msra.mxu0 %v2281
    %4025 = vmatpush.bf16.msra.mxu0 %v2273
    %4026 = vmatmul.bf16.gmra.mxu0 %v192
    %v4027 = vpop.f32.mrf.mxu0
    %v4028 = vadd.f32 %v721, %v4027
    %v4029 = vpop.f32.mrf.mxu0
    %4030 = vdwg.mxu0
    %4031 = vmatpush.bf16.msra.mxu0 %v2393
    %4032 = vmatpush.bf16.msra.mxu0 %v2385
    %4033 = vmatpush.bf16.msra.mxu0 %v2377
    %4034 = vmatpush.bf16.msra.mxu0 %v2369
    %4035 = vmatpush.bf16.msra.mxu0 %v2361
    %4036 = vmatpush.bf16.msra.mxu0 %v2353
    %4037 = vmatpush.bf16.msra.mxu0 %v2345
    %4038 = vmatpush.bf16.msra.mxu0 %v2337
    %4039 = vmatmul.bf16.gmra.mxu0 %v193
    %v4040 = vpop.f32.mrf.mxu0
    %v4041 = vadd.f32 %v4028, %v4040
    %v4042 = vpop.f32.mrf.mxu0
    %4043 = vdwg.mxu0
    %4044 = vmatpush.bf16.msra.mxu0 %v2457
    %4045 = vmatpush.bf16.msra.mxu0 %v2449
    %4046 = vmatpush.bf16.msra.mxu0 %v2441
    %4047 = vmatpush.bf16.msra.mxu0 %v2433
    %4048 = vmatpush.bf16.msra.mxu0 %v2425
    %4049 = vmatpush.bf16.msra.mxu0 %v2417
    %4050 = vmatpush.bf16.msra.mxu0 %v2409
    %4051 = vmatpush.bf16.msra.mxu0 %v2401
    %4052 = vmatmul.bf16.gmra.mxu0 %v194
    %v4053 = vpop.f32.mrf.mxu0
    %v4054 = vadd.f32 %v4041, %v4053
    %v4055 = vpop.f32.mrf.mxu0
    %4056 = vdwg.mxu0
    %4057 = vmatpush.bf16.msra.mxu0 %v2521
    %4058 = vmatpush.bf16.msra.mxu0 %v2513
    %4059 = vmatpush.bf16.msra.mxu0 %v2505
    %4060 = vmatpush.bf16.msra.mxu0 %v2497
    %4061 = vmatpush.bf16.msra.mxu0 %v2489
    %4062 = vmatpush.bf16.msra.mxu0 %v2481
    %4063 = vmatpush.bf16.msra.mxu0 %v2473
    %4064 = vmatpush.bf16.msra.mxu0 %v2465
    %4065 = vmatmul.bf16.gmra.mxu0 %v195
    %v4066 = vpop.f32.mrf.mxu0
    %v4067 = vadd.f32 %v4054, %v4066
    %v4068 = vpop.f32.mrf.mxu0
    %4069 = vdwg.mxu0
    %4070 = vmatpush.bf16.msra.mxu0 %v2585
    %4071 = vmatpush.bf16.msra.mxu0 %v2577
    %4072 = vmatpush.bf16.msra.mxu0 %v2569
    %4073 = vmatpush.bf16.msra.mxu0 %v2561
    %4074 = vmatpush.bf16.msra.mxu0 %v2553
    %4075 = vmatpush.bf16.msra.mxu0 %v2545
    %4076 = vmatpush.bf16.msra.mxu0 %v2537
    %4077 = vmatpush.bf16.msra.mxu0 %v2529
    %4078 = vmatmul.bf16.gmra.mxu0 %v196
    %v4079 = vpop.f32.mrf.mxu0
    %v4080 = vadd.f32 %v4067, %v4079
    %v4081 = vpop.f32.mrf.mxu0
    %4082 = vdwg.mxu0
    %4083 = vmatpush.bf16.msra.mxu0 %v2649
    %4084 = vmatpush.bf16.msra.mxu0 %v2641
    %4085 = vmatpush.bf16.msra.mxu0 %v2633
    %4086 = vmatpush.bf16.msra.mxu0 %v2625
    %4087 = vmatpush.bf16.msra.mxu0 %v2617
    %4088 = vmatpush.bf16.msra.mxu0 %v2609
    %4089 = vmatpush.bf16.msra.mxu0 %v2601
    %4090 = vmatpush.bf16.msra.mxu0 %v2593
    %4091 = vmatmul.bf16.gmra.mxu0 %v197
    %v4092 = vpop.f32.mrf.mxu0
    %v4093 = vadd.f32 %v4080, %v4092
    %v4094 = vpop.f32.mrf.mxu0
    %4095 = vdwg.mxu0
    %4096 = vmatpush.bf16.msra.mxu0 %v2713
    %4097 = vmatpush.bf16.msra.mxu0 %v2705
    %4098 = vmatpush.bf16.msra.mxu0 %v2697
    %4099 = vmatpush.bf16.msra.mxu0 %v2689
    %4100 = vmatpush.bf16.msra.mxu0 %v2681
    %4101 = vmatpush.bf16.msra.mxu0 %v2673
    %4102 = vmatpush.bf16.msra.mxu0 %v2665
    %4103 = vmatpush.bf16.msra.mxu0 %v2657
    %4104 = vmatmul.bf16.gmra.mxu0 %v198
    %v4105 = vpop.f32.mrf.mxu0
    %v4106 = vadd.f32 %v4093, %v4105
    %v4107 = vpop.f32.mrf.mxu0
    %4108 = vdwg.mxu0
    %4109 = vmatpush.bf16.msra.mxu0 %v2777
    %4110 = vmatpush.bf16.msra.mxu0 %v2769
    %4111 = vmatpush.bf16.msra.mxu0 %v2761
    %4112 = vmatpush.bf16.msra.mxu0 %v2753
    %4113 = vmatpush.bf16.msra.mxu0 %v2745
    %4114 = vmatpush.bf16.msra.mxu0 %v2737
    %4115 = vmatpush.bf16.msra.mxu0 %v2729
    %4116 = vmatpush.bf16.msra.mxu0 %v2721
    %4117 = vmatmul.bf16.gmra.mxu0 %v199
    %v4118 = vpop.f32.mrf.mxu0
    %v4119 = vadd.f32 %v4106, %v4118
    %v4120 = vpop.f32.mrf.mxu0
    %4121 = vdwg.mxu0
    %v4122 = vmax.f32 %v3391, 0.0
    %v4123 = vmax.f32 %v3495, 0.0
    %v4124 = vmax.f32 %v3599, 0.0
    %v4125 = vmax.f32 %v3703, 0.0
    %v4126 = vmax.f32 %v3807, 0.0
    %v4127 = vmax.f32 %v3911, 0.0
    %v4128 = vmax.f32 %v4015, 0.0
    %v4129 = vmax.f32 %v4119, 0.0
    %v4130 = vpack.c.bf16 %v4122, %v4122
    %v4131 = vpack.c.bf16 %v4123, %v4123
    %v4132 = vpack.c.bf16 %v4124, %v4124
    %v4133 = vpack.c.bf16 %v4125, %v4125
    %v4134 = vpack.c.bf16 %v4126, %v4126
    %v4135 = vpack.c.bf16 %v4127, %v4127
    %v4136 = vpack.c.bf16 %v4128, %v4128
    %v4137 = vpack.c.bf16 %v4129, %v4129
    %v4138 = vld [vmem:[#allocation6] sm:$0xff]
    %v4139 = vld [vmem:[#allocation6 + $0x8] sm:$0xff]
    %v4140 = vld [vmem:[#allocation6 + $0x10] sm:$0xff]
    %v4141 = vld [vmem:[#allocation6 + $0x18] sm:$0xff]
    %v4142 = vld [vmem:[#allocation6 + $0x20] sm:$0xff]
    %v4143 = vld [vmem:[#allocation6 + $0x28] sm:$0xff]
    %v4144 = vld [vmem:[#allocation6 + $0x30] sm:$0xff]
    %v4145 = vld [vmem:[#allocation6 + $0x38] sm:$0xff]
    %v4146 = vld [vmem:[#allocation6 + $0x40] sm:$0xff]
    %v4147 = vld [vmem:[#allocation6 + $0x48] sm:$0xff]
    %v4148 = vld [vmem:[#allocation6 + $0x50] sm:$0xff]
    %v4149 = vld [vmem:[#allocation6 + $0x58] sm:$0xff]
    %v4150 = vld [vmem:[#allocation6 + $0x60] sm:$0xff]
    %v4151 = vld [vmem:[#allocation6 + $0x68] sm:$0xff]
    %v4152 = vld [vmem:[#allocation6 + $0x70] sm:$0xff]
    %v4153 = vld [vmem:[#allocation6 + $0x78] sm:$0xff]
    %v4154 = vld [vmem:[#allocation6 + $0x80] sm:$0xff]
    %v4155 = vld [vmem:[#allocation6 + $0x88] sm:$0xff]
    %v4156 = vld [vmem:[#allocation6 + $0x90] sm:$0xff]
    %v4157 = vld [vmem:[#allocation6 + $0x98] sm:$0xff]
    %v4158 = vld [vmem:[#allocation6 + $0xa0] sm:$0xff]
    %v4159 = vld [vmem:[#allocation6 + $0xa8] sm:$0xff]
    %v4160 = vld [vmem:[#allocation6 + $0xb0] sm:$0xff]
    %v4161 = vld [vmem:[#allocation6 + $0xb8] sm:$0xff]
    %v4162 = vld [vmem:[#allocation6 + $0xc0] sm:$0xff]
    %v4163 = vld [vmem:[#allocation6 + $0xc8] sm:$0xff]
    %v4164 = vld [vmem:[#allocation6 + $0xd0] sm:$0xff]
    %v4165 = vld [vmem:[#allocation6 + $0xd8] sm:$0xff]
    %v4166 = vld [vmem:[#allocation6 + $0xe0] sm:$0xff]
    %v4167 = vld [vmem:[#allocation6 + $0xe8] sm:$0xff]
    %v4168 = vld [vmem:[#allocation6 + $0xf0] sm:$0xff]
    %v4169 = vld [vmem:[#allocation6 + $0xf8] sm:$0xff]
    %v4170 = vld [vmem:[#allocation6 + $0x100] sm:$0xff]
    %v4171 = vld [vmem:[#allocation6 + $0x108] sm:$0xff]
    %v4172 = vld [vmem:[#allocation6 + $0x110] sm:$0xff]
    %v4173 = vld [vmem:[#allocation6 + $0x118] sm:$0xff]
    %v4174 = vld [vmem:[#allocation6 + $0x120] sm:$0xff]
    %v4175 = vld [vmem:[#allocation6 + $0x128] sm:$0xff]
    %v4176 = vld [vmem:[#allocation6 + $0x130] sm:$0xff]
    %v4177 = vld [vmem:[#allocation6 + $0x138] sm:$0xff]
    %v4178 = vld [vmem:[#allocation6 + $0x140] sm:$0xff]
    %v4179 = vld [vmem:[#allocation6 + $0x148] sm:$0xff]
    %v4180 = vld [vmem:[#allocation6 + $0x150] sm:$0xff]
    %v4181 = vld [vmem:[#allocation6 + $0x158] sm:$0xff]
    %v4182 = vld [vmem:[#allocation6 + $0x160] sm:$0xff]
    %v4183 = vld [vmem:[#allocation6 + $0x168] sm:$0xff]
    %v4184 = vld [vmem:[#allocation6 + $0x170] sm:$0xff]
    %v4185 = vld [vmem:[#allocation6 + $0x178] sm:$0xff]
    %v4186 = vld [vmem:[#allocation6 + $0x180] sm:$0xff]
    %v4187 = vld [vmem:[#allocation6 + $0x188] sm:$0xff]
    %v4188 = vld [vmem:[#allocation6 + $0x190] sm:$0xff]
    %v4189 = vld [vmem:[#allocation6 + $0x198] sm:$0xff]
    %v4190 = vld [vmem:[#allocation6 + $0x1a0] sm:$0xff]
    %v4191 = vld [vmem:[#allocation6 + $0x1a8] sm:$0xff]
    %v4192 = vld [vmem:[#allocation6 + $0x1b0] sm:$0xff]
    %v4193 = vld [vmem:[#allocation6 + $0x1b8] sm:$0xff]
    %v4194 = vld [vmem:[#allocation6 + $0x1c0] sm:$0xff]
    %v4195 = vld [vmem:[#allocation6 + $0x1c8] sm:$0xff]
    %v4196 = vld [vmem:[#allocation6 + $0x1d0] sm:$0xff]
    %v4197 = vld [vmem:[#allocation6 + $0x1d8] sm:$0xff]
    %v4198 = vld [vmem:[#allocation6 + $0x1e0] sm:$0xff]
    %v4199 = vld [vmem:[#allocation6 + $0x1e8] sm:$0xff]
    %v4200 = vld [vmem:[#allocation6 + $0x1f0] sm:$0xff]
    %v4201 = vld [vmem:[#allocation6 + $0x1f8] sm:$0xff]
    %v4202 = vld [vmem:[#allocation6 + $0x200] sm:$0xff]
    %v4203 = vld [vmem:[#allocation6 + $0x208] sm:$0xff]
    %v4204 = vld [vmem:[#allocation6 + $0x210] sm:$0xff]
    %v4205 = vld [vmem:[#allocation6 + $0x218] sm:$0xff]
    %v4206 = vld [vmem:[#allocation6 + $0x220] sm:$0xff]
    %v4207 = vld [vmem:[#allocation6 + $0x228] sm:$0xff]
    %v4208 = vld [vmem:[#allocation6 + $0x230] sm:$0xff]
    %v4209 = vld [vmem:[#allocation6 + $0x238] sm:$0xff]
    %v4210 = vld [vmem:[#allocation6 + $0x240] sm:$0xff]
    %v4211 = vld [vmem:[#allocation6 + $0x248] sm:$0xff]
    %v4212 = vld [vmem:[#allocation6 + $0x250] sm:$0xff]
    %v4213 = vld [vmem:[#allocation6 + $0x258] sm:$0xff]
    %v4214 = vld [vmem:[#allocation6 + $0x260] sm:$0xff]
    %v4215 = vld [vmem:[#allocation6 + $0x268] sm:$0xff]
    %v4216 = vld [vmem:[#allocation6 + $0x270] sm:$0xff]
    %v4217 = vld [vmem:[#allocation6 + $0x278] sm:$0xff]
    %v4218 = vld [vmem:[#allocation6 + $0x280] sm:$0xff]
    %v4219 = vld [vmem:[#allocation6 + $0x288] sm:$0xff]
    %v4220 = vld [vmem:[#allocation6 + $0x290] sm:$0xff]
    %v4221 = vld [vmem:[#allocation6 + $0x298] sm:$0xff]
    %v4222 = vld [vmem:[#allocation6 + $0x2a0] sm:$0xff]
    %v4223 = vld [vmem:[#allocation6 + $0x2a8] sm:$0xff]
    %v4224 = vld [vmem:[#allocation6 + $0x2b0] sm:$0xff]
    %v4225 = vld [vmem:[#allocation6 + $0x2b8] sm:$0xff]
    %v4226 = vld [vmem:[#allocation6 + $0x2c0] sm:$0xff]
    %v4227 = vld [vmem:[#allocation6 + $0x2c8] sm:$0xff]
    %v4228 = vld [vmem:[#allocation6 + $0x2d0] sm:$0xff]
    %v4229 = vld [vmem:[#allocation6 + $0x2d8] sm:$0xff]
    %v4230 = vld [vmem:[#allocation6 + $0x2e0] sm:$0xff]
    %v4231 = vld [vmem:[#allocation6 + $0x2e8] sm:$0xff]
    %v4232 = vld [vmem:[#allocation6 + $0x2f0] sm:$0xff]
    %v4233 = vld [vmem:[#allocation6 + $0x2f8] sm:$0xff]
    %v4234 = vld [vmem:[#allocation6 + $0x300] sm:$0xff]
    %v4235 = vld [vmem:[#allocation6 + $0x308] sm:$0xff]
    %v4236 = vld [vmem:[#allocation6 + $0x310] sm:$0xff]
    %v4237 = vld [vmem:[#allocation6 + $0x318] sm:$0xff]
    %v4238 = vld [vmem:[#allocation6 + $0x320] sm:$0xff]
    %v4239 = vld [vmem:[#allocation6 + $0x328] sm:$0xff]
    %v4240 = vld [vmem:[#allocation6 + $0x330] sm:$0xff]
    %v4241 = vld [vmem:[#allocation6 + $0x338] sm:$0xff]
    %v4242 = vld [vmem:[#allocation6 + $0x340] sm:$0xff]
    %v4243 = vld [vmem:[#allocation6 + $0x348] sm:$0xff]
    %v4244 = vld [vmem:[#allocation6 + $0x350] sm:$0xff]
    %v4245 = vld [vmem:[#allocation6 + $0x358] sm:$0xff]
    %v4246 = vld [vmem:[#allocation6 + $0x360] sm:$0xff]
    %v4247 = vld [vmem:[#allocation6 + $0x368] sm:$0xff]
    %v4248 = vld [vmem:[#allocation6 + $0x370] sm:$0xff]
    %v4249 = vld [vmem:[#allocation6 + $0x378] sm:$0xff]
    %v4250 = vld [vmem:[#allocation6 + $0x380] sm:$0xff]
    %v4251 = vld [vmem:[#allocation6 + $0x388] sm:$0xff]
    %v4252 = vld [vmem:[#allocation6 + $0x390] sm:$0xff]
    %v4253 = vld [vmem:[#allocation6 + $0x398] sm:$0xff]
    %v4254 = vld [vmem:[#allocation6 + $0x3a0] sm:$0xff]
    %v4255 = vld [vmem:[#allocation6 + $0x3a8] sm:$0xff]
    %v4256 = vld [vmem:[#allocation6 + $0x3b0] sm:$0xff]
    %v4257 = vld [vmem:[#allocation6 + $0x3b8] sm:$0xff]
    %v4258 = vld [vmem:[#allocation6 + $0x3c0] sm:$0xff]
    %v4259 = vld [vmem:[#allocation6 + $0x3c8] sm:$0xff]
    %v4260 = vld [vmem:[#allocation6 + $0x3d0] sm:$0xff]
    %v4261 = vld [vmem:[#allocation6 + $0x3d8] sm:$0xff]
    %v4262 = vld [vmem:[#allocation6 + $0x3e0] sm:$0xff]
    %v4263 = vld [vmem:[#allocation6 + $0x3e8] sm:$0xff]
    %v4264 = vld [vmem:[#allocation6 + $0x3f0] sm:$0xff]
    %v4265 = vld [vmem:[#allocation6 + $0x3f8] sm:$0xff]
    %v4266 = vld [vmem:[#allocation6 + $0x400] sm:$0xff]
    %v4267 = vld [vmem:[#allocation6 + $0x408] sm:$0xff]
    %v4268 = vld [vmem:[#allocation6 + $0x410] sm:$0xff]
    %v4269 = vld [vmem:[#allocation6 + $0x418] sm:$0xff]
    %v4270 = vld [vmem:[#allocation6 + $0x420] sm:$0xff]
    %v4271 = vld [vmem:[#allocation6 + $0x428] sm:$0xff]
    %v4272 = vld [vmem:[#allocation6 + $0x430] sm:$0xff]
    %v4273 = vld [vmem:[#allocation6 + $0x438] sm:$0xff]
    %v4274 = vld [vmem:[#allocation6 + $0x440] sm:$0xff]
    %v4275 = vld [vmem:[#allocation6 + $0x448] sm:$0xff]
    %v4276 = vld [vmem:[#allocation6 + $0x450] sm:$0xff]
    %v4277 = vld [vmem:[#allocation6 + $0x458] sm:$0xff]
    %v4278 = vld [vmem:[#allocation6 + $0x460] sm:$0xff]
    %v4279 = vld [vmem:[#allocation6 + $0x468] sm:$0xff]
    %v4280 = vld [vmem:[#allocation6 + $0x470] sm:$0xff]
    %v4281 = vld [vmem:[#allocation6 + $0x478] sm:$0xff]
    %v4282 = vld [vmem:[#allocation6 + $0x480] sm:$0xff]
    %v4283 = vld [vmem:[#allocation6 + $0x488] sm:$0xff]
    %v4284 = vld [vmem:[#allocation6 + $0x490] sm:$0xff]
    %v4285 = vld [vmem:[#allocation6 + $0x498] sm:$0xff]
    %v4286 = vld [vmem:[#allocation6 + $0x4a0] sm:$0xff]
    %v4287 = vld [vmem:[#allocation6 + $0x4a8] sm:$0xff]
    %v4288 = vld [vmem:[#allocation6 + $0x4b0] sm:$0xff]
    %v4289 = vld [vmem:[#allocation6 + $0x4b8] sm:$0xff]
    %v4290 = vld [vmem:[#allocation6 + $0x4c0] sm:$0xff]
    %v4291 = vld [vmem:[#allocation6 + $0x4c8] sm:$0xff]
    %v4292 = vld [vmem:[#allocation6 + $0x4d0] sm:$0xff]
    %v4293 = vld [vmem:[#allocation6 + $0x4d8] sm:$0xff]
    %v4294 = vld [vmem:[#allocation6 + $0x4e0] sm:$0xff]
    %v4295 = vld [vmem:[#allocation6 + $0x4e8] sm:$0xff]
    %v4296 = vld [vmem:[#allocation6 + $0x4f0] sm:$0xff]
    %v4297 = vld [vmem:[#allocation6 + $0x4f8] sm:$0xff]
    %v4298 = vld [vmem:[#allocation6 + $0x500] sm:$0xff]
    %v4299 = vld [vmem:[#allocation6 + $0x508] sm:$0xff]
    %v4300 = vld [vmem:[#allocation6 + $0x510] sm:$0xff]
    %v4301 = vld [vmem:[#allocation6 + $0x518] sm:$0xff]
    %v4302 = vld [vmem:[#allocation6 + $0x520] sm:$0xff]
    %v4303 = vld [vmem:[#allocation6 + $0x528] sm:$0xff]
    %v4304 = vld [vmem:[#allocation6 + $0x530] sm:$0xff]
    %v4305 = vld [vmem:[#allocation6 + $0x538] sm:$0xff]
    %v4306 = vld [vmem:[#allocation6 + $0x540] sm:$0xff]
    %v4307 = vld [vmem:[#allocation6 + $0x548] sm:$0xff]
    %v4308 = vld [vmem:[#allocation6 + $0x550] sm:$0xff]
    %v4309 = vld [vmem:[#allocation6 + $0x558] sm:$0xff]
    %v4310 = vld [vmem:[#allocation6 + $0x560] sm:$0xff]
    %v4311 = vld [vmem:[#allocation6 + $0x568] sm:$0xff]
    %v4312 = vld [vmem:[#allocation6 + $0x570] sm:$0xff]
    %v4313 = vld [vmem:[#allocation6 + $0x578] sm:$0xff]
    %v4314 = vld [vmem:[#allocation6 + $0x580] sm:$0xff]
    %v4315 = vld [vmem:[#allocation6 + $0x588] sm:$0xff]
    %v4316 = vld [vmem:[#allocation6 + $0x590] sm:$0xff]
    %v4317 = vld [vmem:[#allocation6 + $0x598] sm:$0xff]
    %v4318 = vld [vmem:[#allocation6 + $0x5a0] sm:$0xff]
    %v4319 = vld [vmem:[#allocation6 + $0x5a8] sm:$0xff]
    %v4320 = vld [vmem:[#allocation6 + $0x5b0] sm:$0xff]
    %v4321 = vld [vmem:[#allocation6 + $0x5b8] sm:$0xff]
    %v4322 = vld [vmem:[#allocation6 + $0x5c0] sm:$0xff]
    %v4323 = vld [vmem:[#allocation6 + $0x5c8] sm:$0xff]
    %v4324 = vld [vmem:[#allocation6 + $0x5d0] sm:$0xff]
    %v4325 = vld [vmem:[#allocation6 + $0x5d8] sm:$0xff]
    %v4326 = vld [vmem:[#allocation6 + $0x5e0] sm:$0xff]
    %v4327 = vld [vmem:[#allocation6 + $0x5e8] sm:$0xff]
    %v4328 = vld [vmem:[#allocation6 + $0x5f0] sm:$0xff]
    %v4329 = vld [vmem:[#allocation6 + $0x5f8] sm:$0xff]
    %v4330 = vld [vmem:[#allocation6 + $0x600] sm:$0xff]
    %v4331 = vld [vmem:[#allocation6 + $0x608] sm:$0xff]
    %v4332 = vld [vmem:[#allocation6 + $0x610] sm:$0xff]
    %v4333 = vld [vmem:[#allocation6 + $0x618] sm:$0xff]
    %v4334 = vld [vmem:[#allocation6 + $0x620] sm:$0xff]
    %v4335 = vld [vmem:[#allocation6 + $0x628] sm:$0xff]
    %v4336 = vld [vmem:[#allocation6 + $0x630] sm:$0xff]
    %v4337 = vld [vmem:[#allocation6 + $0x638] sm:$0xff]
    %v4338 = vld [vmem:[#allocation6 + $0x640] sm:$0xff]
    %v4339 = vld [vmem:[#allocation6 + $0x648] sm:$0xff]
    %v4340 = vld [vmem:[#allocation6 + $0x650] sm:$0xff]
    %v4341 = vld [vmem:[#allocation6 + $0x658] sm:$0xff]
    %v4342 = vld [vmem:[#allocation6 + $0x660] sm:$0xff]
    %v4343 = vld [vmem:[#allocation6 + $0x668] sm:$0xff]
    %v4344 = vld [vmem:[#allocation6 + $0x670] sm:$0xff]
    %v4345 = vld [vmem:[#allocation6 + $0x678] sm:$0xff]
    %v4346 = vld [vmem:[#allocation6 + $0x680] sm:$0xff]
    %v4347 = vld [vmem:[#allocation6 + $0x688] sm:$0xff]
    %v4348 = vld [vmem:[#allocation6 + $0x690] sm:$0xff]
    %v4349 = vld [vmem:[#allocation6 + $0x698] sm:$0xff]
    %v4350 = vld [vmem:[#allocation6 + $0x6a0] sm:$0xff]
    %v4351 = vld [vmem:[#allocation6 + $0x6a8] sm:$0xff]
    %v4352 = vld [vmem:[#allocation6 + $0x6b0] sm:$0xff]
    %v4353 = vld [vmem:[#allocation6 + $0x6b8] sm:$0xff]
    %v4354 = vld [vmem:[#allocation6 + $0x6c0] sm:$0xff]
    %v4355 = vld [vmem:[#allocation6 + $0x6c8] sm:$0xff]
    %v4356 = vld [vmem:[#allocation6 + $0x6d0] sm:$0xff]
    %v4357 = vld [vmem:[#allocation6 + $0x6d8] sm:$0xff]
    %v4358 = vld [vmem:[#allocation6 + $0x6e0] sm:$0xff]
    %v4359 = vld [vmem:[#allocation6 + $0x6e8] sm:$0xff]
    %v4360 = vld [vmem:[#allocation6 + $0x6f0] sm:$0xff]
    %v4361 = vld [vmem:[#allocation6 + $0x6f8] sm:$0xff]
    %v4362 = vld [vmem:[#allocation6 + $0x700] sm:$0xff]
    %v4363 = vld [vmem:[#allocation6 + $0x708] sm:$0xff]
    %v4364 = vld [vmem:[#allocation6 + $0x710] sm:$0xff]
    %v4365 = vld [vmem:[#allocation6 + $0x718] sm:$0xff]
    %v4366 = vld [vmem:[#allocation6 + $0x720] sm:$0xff]
    %v4367 = vld [vmem:[#allocation6 + $0x728] sm:$0xff]
    %v4368 = vld [vmem:[#allocation6 + $0x730] sm:$0xff]
    %v4369 = vld [vmem:[#allocation6 + $0x738] sm:$0xff]
    %v4370 = vld [vmem:[#allocation6 + $0x740] sm:$0xff]
    %v4371 = vld [vmem:[#allocation6 + $0x748] sm:$0xff]
    %v4372 = vld [vmem:[#allocation6 + $0x750] sm:$0xff]
    %v4373 = vld [vmem:[#allocation6 + $0x758] sm:$0xff]
    %v4374 = vld [vmem:[#allocation6 + $0x760] sm:$0xff]
    %v4375 = vld [vmem:[#allocation6 + $0x768] sm:$0xff]
    %v4376 = vld [vmem:[#allocation6 + $0x770] sm:$0xff]
    %v4377 = vld [vmem:[#allocation6 + $0x778] sm:$0xff]
    %v4378 = vld [vmem:[#allocation6 + $0x780] sm:$0xff]
    %v4379 = vld [vmem:[#allocation6 + $0x788] sm:$0xff]
    %v4380 = vld [vmem:[#allocation6 + $0x790] sm:$0xff]
    %v4381 = vld [vmem:[#allocation6 + $0x798] sm:$0xff]
    %v4382 = vld [vmem:[#allocation6 + $0x7a0] sm:$0xff]
    %v4383 = vld [vmem:[#allocation6 + $0x7a8] sm:$0xff]
    %v4384 = vld [vmem:[#allocation6 + $0x7b0] sm:$0xff]
    %v4385 = vld [vmem:[#allocation6 + $0x7b8] sm:$0xff]
    %v4386 = vld [vmem:[#allocation6 + $0x7c0] sm:$0xff]
    %v4387 = vld [vmem:[#allocation6 + $0x7c8] sm:$0xff]
    %v4388 = vld [vmem:[#allocation6 + $0x7d0] sm:$0xff]
    %v4389 = vld [vmem:[#allocation6 + $0x7d8] sm:$0xff]
    %v4390 = vld [vmem:[#allocation6 + $0x7e0] sm:$0xff]
    %v4391 = vld [vmem:[#allocation6 + $0x7e8] sm:$0xff]
    %v4392 = vld [vmem:[#allocation6 + $0x7f0] sm:$0xff]
    %v4393 = vld [vmem:[#allocation6 + $0x7f8] sm:$0xff]
    %v4394 = vld [vmem:[#allocation7] sm:$0xf]
    %v4396 = vperm.slane %v4394, 0
    %v4397 = vperm.slane %v4394, 1
    %v4398 = vperm.slane %v4394, 2
    %v4399 = vperm.slane %v4394, 3
    %v4660 = vunpack.c.l.b16 %v4138
    %v4661 = vunpack.c.h.b16 %v4138
    %v4662 = vunpack.c.l.b16 %v4139
    %v4663 = vunpack.c.h.b16 %v4139
    %v4664 = vunpack.c.l.b16 %v4140
    %v4665 = vunpack.c.h.b16 %v4140
    %v4666 = vunpack.c.l.b16 %v4141
    %v4667 = vunpack.c.h.b16 %v4141
    %v4668 = vunpack.c.l.b16 %v4142
    %v4669 = vunpack.c.h.b16 %v4142
    %v4670 = vunpack.c.l.b16 %v4143
    %v4671 = vunpack.c.h.b16 %v4143
    %v4672 = vunpack.c.l.b16 %v4144
    %v4673 = vunpack.c.h.b16 %v4144
    %v4674 = vunpack.c.l.b16 %v4145
    %v4675 = vunpack.c.h.b16 %v4145
    %v4676 = vunpack.c.l.b16 %v4146
    %v4677 = vunpack.c.h.b16 %v4146
    %v4678 = vunpack.c.l.b16 %v4147
    %v4679 = vunpack.c.h.b16 %v4147
    %v4680 = vunpack.c.l.b16 %v4148
    %v4681 = vunpack.c.h.b16 %v4148
    %v4682 = vunpack.c.l.b16 %v4149
    %v4683 = vunpack.c.h.b16 %v4149
    %v4684 = vunpack.c.l.b16 %v4150
    %v4685 = vunpack.c.h.b16 %v4150
    %v4686 = vunpack.c.l.b16 %v4151
    %v4687 = vunpack.c.h.b16 %v4151
    %v4688 = vunpack.c.l.b16 %v4152
    %v4689 = vunpack.c.h.b16 %v4152
    %v4690 = vunpack.c.l.b16 %v4153
    %v4691 = vunpack.c.h.b16 %v4153
    %v4692 = vunpack.c.l.b16 %v4154
    %v4693 = vunpack.c.h.b16 %v4154
    %v4694 = vunpack.c.l.b16 %v4155
    %v4695 = vunpack.c.h.b16 %v4155
    %v4696 = vunpack.c.l.b16 %v4156
    %v4697 = vunpack.c.h.b16 %v4156
    %v4698 = vunpack.c.l.b16 %v4157
    %v4699 = vunpack.c.h.b16 %v4157
    %v4700 = vunpack.c.l.b16 %v4158
    %v4701 = vunpack.c.h.b16 %v4158
    %v4702 = vunpack.c.l.b16 %v4159
    %v4703 = vunpack.c.h.b16 %v4159
    %v4704 = vunpack.c.l.b16 %v4160
    %v4705 = vunpack.c.h.b16 %v4160
    %v4706 = vunpack.c.l.b16 %v4161
    %v4707 = vunpack.c.h.b16 %v4161
    %v4708 = vunpack.c.l.b16 %v4162
    %v4709 = vunpack.c.h.b16 %v4162
    %v4710 = vunpack.c.l.b16 %v4163
    %v4711 = vunpack.c.h.b16 %v4163
    %v4712 = vunpack.c.l.b16 %v4164
    %v4713 = vunpack.c.h.b16 %v4164
    %v4714 = vunpack.c.l.b16 %v4165
    %v4715 = vunpack.c.h.b16 %v4165
    %v4716 = vunpack.c.l.b16 %v4166
    %v4717 = vunpack.c.h.b16 %v4166
    %v4718 = vunpack.c.l.b16 %v4167
    %v4719 = vunpack.c.h.b16 %v4167
    %v4720 = vunpack.c.l.b16 %v4168
    %v4721 = vunpack.c.h.b16 %v4168
    %v4722 = vunpack.c.l.b16 %v4169
    %v4723 = vunpack.c.h.b16 %v4169
    %v4724 = vunpack.c.l.b16 %v4170
    %v4725 = vunpack.c.h.b16 %v4170
    %v4726 = vunpack.c.l.b16 %v4171
    %v4727 = vunpack.c.h.b16 %v4171
    %v4728 = vunpack.c.l.b16 %v4172
    %v4729 = vunpack.c.h.b16 %v4172
    %v4730 = vunpack.c.l.b16 %v4173
    %v4731 = vunpack.c.h.b16 %v4173
    %v4732 = vunpack.c.l.b16 %v4174
    %v4733 = vunpack.c.h.b16 %v4174
    %v4734 = vunpack.c.l.b16 %v4175
    %v4735 = vunpack.c.h.b16 %v4175
    %v4736 = vunpack.c.l.b16 %v4176
    %v4737 = vunpack.c.h.b16 %v4176
    %v4738 = vunpack.c.l.b16 %v4177
    %v4739 = vunpack.c.h.b16 %v4177
    %v4740 = vunpack.c.l.b16 %v4178
    %v4741 = vunpack.c.h.b16 %v4178
    %v4742 = vunpack.c.l.b16 %v4179
    %v4743 = vunpack.c.h.b16 %v4179
    %v4744 = vunpack.c.l.b16 %v4180
    %v4745 = vunpack.c.h.b16 %v4180
    %v4746 = vunpack.c.l.b16 %v4181
    %v4747 = vunpack.c.h.b16 %v4181
    %v4748 = vunpack.c.l.b16 %v4182
    %v4749 = vunpack.c.h.b16 %v4182
    %v4750 = vunpack.c.l.b16 %v4183
    %v4751 = vunpack.c.h.b16 %v4183
    %v4752 = vunpack.c.l.b16 %v4184
    %v4753 = vunpack.c.h.b16 %v4184
    %v4754 = vunpack.c.l.b16 %v4185
    %v4755 = vunpack.c.h.b16 %v4185
    %v4756 = vunpack.c.l.b16 %v4186
    %v4757 = vunpack.c.h.b16 %v4186
    %v4758 = vunpack.c.l.b16 %v4187
    %v4759 = vunpack.c.h.b16 %v4187
    %v4760 = vunpack.c.l.b16 %v4188
    %v4761 = vunpack.c.h.b16 %v4188
    %v4762 = vunpack.c.l.b16 %v4189
    %v4763 = vunpack.c.h.b16 %v4189
    %v4764 = vunpack.c.l.b16 %v4190
    %v4765 = vunpack.c.h.b16 %v4190
    %v4766 = vunpack.c.l.b16 %v4191
    %v4767 = vunpack.c.h.b16 %v4191
    %v4768 = vunpack.c.l.b16 %v4192
    %v4769 = vunpack.c.h.b16 %v4192
    %v4770 = vunpack.c.l.b16 %v4193
    %v4771 = vunpack.c.h.b16 %v4193
    %v4772 = vunpack.c.l.b16 %v4194
    %v4773 = vunpack.c.h.b16 %v4194
    %v4774 = vunpack.c.l.b16 %v4195
    %v4775 = vunpack.c.h.b16 %v4195
    %v4776 = vunpack.c.l.b16 %v4196
    %v4777 = vunpack.c.h.b16 %v4196
    %v4778 = vunpack.c.l.b16 %v4197
    %v4779 = vunpack.c.h.b16 %v4197
    %v4780 = vunpack.c.l.b16 %v4198
    %v4781 = vunpack.c.h.b16 %v4198
    %v4782 = vunpack.c.l.b16 %v4199
    %v4783 = vunpack.c.h.b16 %v4199
    %v4784 = vunpack.c.l.b16 %v4200
    %v4785 = vunpack.c.h.b16 %v4200
    %v4786 = vunpack.c.l.b16 %v4201
    %v4787 = vunpack.c.h.b16 %v4201
    %v4788 = vunpack.c.l.b16 %v4202
    %v4789 = vunpack.c.h.b16 %v4202
    %v4790 = vunpack.c.l.b16 %v4203
    %v4791 = vunpack.c.h.b16 %v4203
    %v4792 = vunpack.c.l.b16 %v4204
    %v4793 = vunpack.c.h.b16 %v4204
    %v4794 = vunpack.c.l.b16 %v4205
    %v4795 = vunpack.c.h.b16 %v4205
    %v4796 = vunpack.c.l.b16 %v4206
    %v4797 = vunpack.c.h.b16 %v4206
    %v4798 = vunpack.c.l.b16 %v4207
    %v4799 = vunpack.c.h.b16 %v4207
    %v4800 = vunpack.c.l.b16 %v4208
    %v4801 = vunpack.c.h.b16 %v4208
    %v4802 = vunpack.c.l.b16 %v4209
    %v4803 = vunpack.c.h.b16 %v4209
    %v4804 = vunpack.c.l.b16 %v4210
    %v4805 = vunpack.c.h.b16 %v4210
    %v4806 = vunpack.c.l.b16 %v4211
    %v4807 = vunpack.c.h.b16 %v4211
    %v4808 = vunpack.c.l.b16 %v4212
    %v4809 = vunpack.c.h.b16 %v4212
    %v4810 = vunpack.c.l.b16 %v4213
    %v4811 = vunpack.c.h.b16 %v4213
    %v4812 = vunpack.c.l.b16 %v4214
    %v4813 = vunpack.c.h.b16 %v4214
    %v4814 = vunpack.c.l.b16 %v4215
    %v4815 = vunpack.c.h.b16 %v4215
    %v4816 = vunpack.c.l.b16 %v4216
    %v4817 = vunpack.c.h.b16 %v4216
    %v4818 = vunpack.c.l.b16 %v4217
    %v4819 = vunpack.c.h.b16 %v4217
    %v4820 = vunpack.c.l.b16 %v4218
    %v4821 = vunpack.c.h.b16 %v4218
    %v4822 = vunpack.c.l.b16 %v4219
    %v4823 = vunpack.c.h.b16 %v4219
    %v4824 = vunpack.c.l.b16 %v4220
    %v4825 = vunpack.c.h.b16 %v4220
    %v4826 = vunpack.c.l.b16 %v4221
    %v4827 = vunpack.c.h.b16 %v4221
    %v4828 = vunpack.c.l.b16 %v4222
    %v4829 = vunpack.c.h.b16 %v4222
    %v4830 = vunpack.c.l.b16 %v4223
    %v4831 = vunpack.c.h.b16 %v4223
    %v4832 = vunpack.c.l.b16 %v4224
    %v4833 = vunpack.c.h.b16 %v4224
    %v4834 = vunpack.c.l.b16 %v4225
    %v4835 = vunpack.c.h.b16 %v4225
    %v4836 = vunpack.c.l.b16 %v4226
    %v4837 = vunpack.c.h.b16 %v4226
    %v4838 = vunpack.c.l.b16 %v4227
    %v4839 = vunpack.c.h.b16 %v4227
    %v4840 = vunpack.c.l.b16 %v4228
    %v4841 = vunpack.c.h.b16 %v4228
    %v4842 = vunpack.c.l.b16 %v4229
    %v4843 = vunpack.c.h.b16 %v4229
    %v4844 = vunpack.c.l.b16 %v4230
    %v4845 = vunpack.c.h.b16 %v4230
    %v4846 = vunpack.c.l.b16 %v4231
    %v4847 = vunpack.c.h.b16 %v4231
    %v4848 = vunpack.c.l.b16 %v4232
    %v4849 = vunpack.c.h.b16 %v4232
    %v4850 = vunpack.c.l.b16 %v4233
    %v4851 = vunpack.c.h.b16 %v4233
    %v4852 = vunpack.c.l.b16 %v4234
    %v4853 = vunpack.c.h.b16 %v4234
    %v4854 = vunpack.c.l.b16 %v4235
    %v4855 = vunpack.c.h.b16 %v4235
    %v4856 = vunpack.c.l.b16 %v4236
    %v4857 = vunpack.c.h.b16 %v4236
    %v4858 = vunpack.c.l.b16 %v4237
    %v4859 = vunpack.c.h.b16 %v4237
    %v4860 = vunpack.c.l.b16 %v4238
    %v4861 = vunpack.c.h.b16 %v4238
    %v4862 = vunpack.c.l.b16 %v4239
    %v4863 = vunpack.c.h.b16 %v4239
    %v4864 = vunpack.c.l.b16 %v4240
    %v4865 = vunpack.c.h.b16 %v4240
    %v4866 = vunpack.c.l.b16 %v4241
    %v4867 = vunpack.c.h.b16 %v4241
    %v4868 = vunpack.c.l.b16 %v4242
    %v4869 = vunpack.c.h.b16 %v4242
    %v4870 = vunpack.c.l.b16 %v4243
    %v4871 = vunpack.c.h.b16 %v4243
    %v4872 = vunpack.c.l.b16 %v4244
    %v4873 = vunpack.c.h.b16 %v4244
    %v4874 = vunpack.c.l.b16 %v4245
    %v4875 = vunpack.c.h.b16 %v4245
    %v4876 = vunpack.c.l.b16 %v4246
    %v4877 = vunpack.c.h.b16 %v4246
    %v4878 = vunpack.c.l.b16 %v4247
    %v4879 = vunpack.c.h.b16 %v4247
    %v4880 = vunpack.c.l.b16 %v4248
    %v4881 = vunpack.c.h.b16 %v4248
    %v4882 = vunpack.c.l.b16 %v4249
    %v4883 = vunpack.c.h.b16 %v4249
    %v4884 = vunpack.c.l.b16 %v4250
    %v4885 = vunpack.c.h.b16 %v4250
    %v4886 = vunpack.c.l.b16 %v4251
    %v4887 = vunpack.c.h.b16 %v4251
    %v4888 = vunpack.c.l.b16 %v4252
    %v4889 = vunpack.c.h.b16 %v4252
    %v4890 = vunpack.c.l.b16 %v4253
    %v4891 = vunpack.c.h.b16 %v4253
    %v4892 = vunpack.c.l.b16 %v4254
    %v4893 = vunpack.c.h.b16 %v4254
    %v4894 = vunpack.c.l.b16 %v4255
    %v4895 = vunpack.c.h.b16 %v4255
    %v4896 = vunpack.c.l.b16 %v4256
    %v4897 = vunpack.c.h.b16 %v4256
    %v4898 = vunpack.c.l.b16 %v4257
    %v4899 = vunpack.c.h.b16 %v4257
    %v4900 = vunpack.c.l.b16 %v4258
    %v4901 = vunpack.c.h.b16 %v4258
    %v4902 = vunpack.c.l.b16 %v4259
    %v4903 = vunpack.c.h.b16 %v4259
    %v4904 = vunpack.c.l.b16 %v4260
    %v4905 = vunpack.c.h.b16 %v4260
    %v4906 = vunpack.c.l.b16 %v4261
    %v4907 = vunpack.c.h.b16 %v4261
    %v4908 = vunpack.c.l.b16 %v4262
    %v4909 = vunpack.c.h.b16 %v4262
    %v4910 = vunpack.c.l.b16 %v4263
    %v4911 = vunpack.c.h.b16 %v4263
    %v4912 = vunpack.c.l.b16 %v4264
    %v4913 = vunpack.c.h.b16 %v4264
    %v4914 = vunpack.c.l.b16 %v4265
    %v4915 = vunpack.c.h.b16 %v4265
    %v4916 = vunpack.c.l.b16 %v4266
    %v4917 = vunpack.c.h.b16 %v4266
    %v4918 = vunpack.c.l.b16 %v4267
    %v4919 = vunpack.c.h.b16 %v4267
    %v4920 = vunpack.c.l.b16 %v4268
    %v4921 = vunpack.c.h.b16 %v4268
    %v4922 = vunpack.c.l.b16 %v4269
    %v4923 = vunpack.c.h.b16 %v4269
    %v4924 = vunpack.c.l.b16 %v4270
    %v4925 = vunpack.c.h.b16 %v4270
    %v4926 = vunpack.c.l.b16 %v4271
    %v4927 = vunpack.c.h.b16 %v4271
    %v4928 = vunpack.c.l.b16 %v4272
    %v4929 = vunpack.c.h.b16 %v4272
    %v4930 = vunpack.c.l.b16 %v4273
    %v4931 = vunpack.c.h.b16 %v4273
    %v4932 = vunpack.c.l.b16 %v4274
    %v4933 = vunpack.c.h.b16 %v4274
    %v4934 = vunpack.c.l.b16 %v4275
    %v4935 = vunpack.c.h.b16 %v4275
    %v4936 = vunpack.c.l.b16 %v4276
    %v4937 = vunpack.c.h.b16 %v4276
    %v4938 = vunpack.c.l.b16 %v4277
    %v4939 = vunpack.c.h.b16 %v4277
    %v4940 = vunpack.c.l.b16 %v4278
    %v4941 = vunpack.c.h.b16 %v4278
    %v4942 = vunpack.c.l.b16 %v4279
    %v4943 = vunpack.c.h.b16 %v4279
    %v4944 = vunpack.c.l.b16 %v4280
    %v4945 = vunpack.c.h.b16 %v4280
    %v4946 = vunpack.c.l.b16 %v4281
    %v4947 = vunpack.c.h.b16 %v4281
    %v4948 = vunpack.c.l.b16 %v4282
    %v4949 = vunpack.c.h.b16 %v4282
    %v4950 = vunpack.c.l.b16 %v4283
    %v4951 = vunpack.c.h.b16 %v4283
    %v4952 = vunpack.c.l.b16 %v4284
    %v4953 = vunpack.c.h.b16 %v4284
    %v4954 = vunpack.c.l.b16 %v4285
    %v4955 = vunpack.c.h.b16 %v4285
    %v4956 = vunpack.c.l.b16 %v4286
    %v4957 = vunpack.c.h.b16 %v4286
    %v4958 = vunpack.c.l.b16 %v4287
    %v4959 = vunpack.c.h.b16 %v4287
    %v4960 = vunpack.c.l.b16 %v4288
    %v4961 = vunpack.c.h.b16 %v4288
    %v4962 = vunpack.c.l.b16 %v4289
    %v4963 = vunpack.c.h.b16 %v4289
    %v4964 = vunpack.c.l.b16 %v4290
    %v4965 = vunpack.c.h.b16 %v4290
    %v4966 = vunpack.c.l.b16 %v4291
    %v4967 = vunpack.c.h.b16 %v4291
    %v4968 = vunpack.c.l.b16 %v4292
    %v4969 = vunpack.c.h.b16 %v4292
    %v4970 = vunpack.c.l.b16 %v4293
    %v4971 = vunpack.c.h.b16 %v4293
    %v4972 = vunpack.c.l.b16 %v4294
    %v4973 = vunpack.c.h.b16 %v4294
    %v4974 = vunpack.c.l.b16 %v4295
    %v4975 = vunpack.c.h.b16 %v4295
    %v4976 = vunpack.c.l.b16 %v4296
    %v4977 = vunpack.c.h.b16 %v4296
    %v4978 = vunpack.c.l.b16 %v4297
    %v4979 = vunpack.c.h.b16 %v4297
    %v4980 = vunpack.c.l.b16 %v4298
    %v4981 = vunpack.c.h.b16 %v4298
    %v4982 = vunpack.c.l.b16 %v4299
    %v4983 = vunpack.c.h.b16 %v4299
    %v4984 = vunpack.c.l.b16 %v4300
    %v4985 = vunpack.c.h.b16 %v4300
    %v4986 = vunpack.c.l.b16 %v4301
    %v4987 = vunpack.c.h.b16 %v4301
    %v4988 = vunpack.c.l.b16 %v4302
    %v4989 = vunpack.c.h.b16 %v4302
    %v4990 = vunpack.c.l.b16 %v4303
    %v4991 = vunpack.c.h.b16 %v4303
    %v4992 = vunpack.c.l.b16 %v4304
    %v4993 = vunpack.c.h.b16 %v4304
    %v4994 = vunpack.c.l.b16 %v4305
    %v4995 = vunpack.c.h.b16 %v4305
    %v4996 = vunpack.c.l.b16 %v4306
    %v4997 = vunpack.c.h.b16 %v4306
    %v4998 = vunpack.c.l.b16 %v4307
    %v4999 = vunpack.c.h.b16 %v4307
    %v5000 = vunpack.c.l.b16 %v4308
    %v5001 = vunpack.c.h.b16 %v4308
    %v5002 = vunpack.c.l.b16 %v4309
    %v5003 = vunpack.c.h.b16 %v4309
    %v5004 = vunpack.c.l.b16 %v4310
    %v5005 = vunpack.c.h.b16 %v4310
    %v5006 = vunpack.c.l.b16 %v4311
    %v5007 = vunpack.c.h.b16 %v4311
    %v5008 = vunpack.c.l.b16 %v4312
    %v5009 = vunpack.c.h.b16 %v4312
    %v5010 = vunpack.c.l.b16 %v4313
    %v5011 = vunpack.c.h.b16 %v4313
    %v5012 = vunpack.c.l.b16 %v4314
    %v5013 = vunpack.c.h.b16 %v4314
    %v5014 = vunpack.c.l.b16 %v4315
    %v5015 = vunpack.c.h.b16 %v4315
    %v5016 = vunpack.c.l.b16 %v4316
    %v5017 = vunpack.c.h.b16 %v4316
    %v5018 = vunpack.c.l.b16 %v4317
    %v5019 = vunpack.c.h.b16 %v4317
    %v5020 = vunpack.c.l.b16 %v4318
    %v5021 = vunpack.c.h.b16 %v4318
    %v5022 = vunpack.c.l.b16 %v4319
    %v5023 = vunpack.c.h.b16 %v4319
    %v5024 = vunpack.c.l.b16 %v4320
    %v5025 = vunpack.c.h.b16 %v4320
    %v5026 = vunpack.c.l.b16 %v4321
    %v5027 = vunpack.c.h.b16 %v4321
    %v5028 = vunpack.c.l.b16 %v4322
    %v5029 = vunpack.c.h.b16 %v4322
    %v5030 = vunpack.c.l.b16 %v4323
    %v5031 = vunpack.c.h.b16 %v4323
    %v5032 = vunpack.c.l.b16 %v4324
    %v5033 = vunpack.c.h.b16 %v4324
    %v5034 = vunpack.c.l.b16 %v4325
    %v5035 = vunpack.c.h.b16 %v4325
    %v5036 = vunpack.c.l.b16 %v4326
    %v5037 = vunpack.c.h.b16 %v4326
    %v5038 = vunpack.c.l.b16 %v4327
    %v5039 = vunpack.c.h.b16 %v4327
    %v5040 = vunpack.c.l.b16 %v4328
    %v5041 = vunpack.c.h.b16 %v4328
    %v5042 = vunpack.c.l.b16 %v4329
    %v5043 = vunpack.c.h.b16 %v4329
    %v5044 = vunpack.c.l.b16 %v4330
    %v5045 = vunpack.c.h.b16 %v4330
    %v5046 = vunpack.c.l.b16 %v4331
    %v5047 = vunpack.c.h.b16 %v4331
    %v5048 = vunpack.c.l.b16 %v4332
    %v5049 = vunpack.c.h.b16 %v4332
    %v5050 = vunpack.c.l.b16 %v4333
    %v5051 = vunpack.c.h.b16 %v4333
    %v5052 = vunpack.c.l.b16 %v4334
    %v5053 = vunpack.c.h.b16 %v4334
    %v5054 = vunpack.c.l.b16 %v4335
    %v5055 = vunpack.c.h.b16 %v4335
    %v5056 = vunpack.c.l.b16 %v4336
    %v5057 = vunpack.c.h.b16 %v4336
    %v5058 = vunpack.c.l.b16 %v4337
    %v5059 = vunpack.c.h.b16 %v4337
    %v5060 = vunpack.c.l.b16 %v4338
    %v5061 = vunpack.c.h.b16 %v4338
    %v5062 = vunpack.c.l.b16 %v4339
    %v5063 = vunpack.c.h.b16 %v4339
    %v5064 = vunpack.c.l.b16 %v4340
    %v5065 = vunpack.c.h.b16 %v4340
    %v5066 = vunpack.c.l.b16 %v4341
    %v5067 = vunpack.c.h.b16 %v4341
    %v5068 = vunpack.c.l.b16 %v4342
    %v5069 = vunpack.c.h.b16 %v4342
    %v5070 = vunpack.c.l.b16 %v4343
    %v5071 = vunpack.c.h.b16 %v4343
    %v5072 = vunpack.c.l.b16 %v4344
    %v5073 = vunpack.c.h.b16 %v4344
    %v5074 = vunpack.c.l.b16 %v4345
    %v5075 = vunpack.c.h.b16 %v4345
    %v5076 = vunpack.c.l.b16 %v4346
    %v5077 = vunpack.c.h.b16 %v4346
    %v5078 = vunpack.c.l.b16 %v4347
    %v5079 = vunpack.c.h.b16 %v4347
    %v5080 = vunpack.c.l.b16 %v4348
    %v5081 = vunpack.c.h.b16 %v4348
    %v5082 = vunpack.c.l.b16 %v4349
    %v5083 = vunpack.c.h.b16 %v4349
    %v5084 = vunpack.c.l.b16 %v4350
    %v5085 = vunpack.c.h.b16 %v4350
    %v5086 = vunpack.c.l.b16 %v4351
    %v5087 = vunpack.c.h.b16 %v4351
    %v5088 = vunpack.c.l.b16 %v4352
    %v5089 = vunpack.c.h.b16 %v4352
    %v5090 = vunpack.c.l.b16 %v4353
    %v5091 = vunpack.c.h.b16 %v4353
    %v5092 = vunpack.c.l.b16 %v4354
    %v5093 = vunpack.c.h.b16 %v4354
    %v5094 = vunpack.c.l.b16 %v4355
    %v5095 = vunpack.c.h.b16 %v4355
    %v5096 = vunpack.c.l.b16 %v4356
    %v5097 = vunpack.c.h.b16 %v4356
    %v5098 = vunpack.c.l.b16 %v4357
    %v5099 = vunpack.c.h.b16 %v4357
    %v5100 = vunpack.c.l.b16 %v4358
    %v5101 = vunpack.c.h.b16 %v4358
    %v5102 = vunpack.c.l.b16 %v4359
    %v5103 = vunpack.c.h.b16 %v4359
    %v5104 = vunpack.c.l.b16 %v4360
    %v5105 = vunpack.c.h.b16 %v4360
    %v5106 = vunpack.c.l.b16 %v4361
    %v5107 = vunpack.c.h.b16 %v4361
    %v5108 = vunpack.c.l.b16 %v4362
    %v5109 = vunpack.c.h.b16 %v4362
    %v5110 = vunpack.c.l.b16 %v4363
    %v5111 = vunpack.c.h.b16 %v4363
    %v5112 = vunpack.c.l.b16 %v4364
    %v5113 = vunpack.c.h.b16 %v4364
    %v5114 = vunpack.c.l.b16 %v4365
    %v5115 = vunpack.c.h.b16 %v4365
    %v5116 = vunpack.c.l.b16 %v4366
    %v5117 = vunpack.c.h.b16 %v4366
    %v5118 = vunpack.c.l.b16 %v4367
    %v5119 = vunpack.c.h.b16 %v4367
    %v5120 = vunpack.c.l.b16 %v4368
    %v5121 = vunpack.c.h.b16 %v4368
    %v5122 = vunpack.c.l.b16 %v4369
    %v5123 = vunpack.c.h.b16 %v4369
    %v5124 = vunpack.c.l.b16 %v4370
    %v5125 = vunpack.c.h.b16 %v4370
    %v5126 = vunpack.c.l.b16 %v4371
    %v5127 = vunpack.c.h.b16 %v4371
    %v5128 = vunpack.c.l.b16 %v4372
    %v5129 = vunpack.c.h.b16 %v4372
    %v5130 = vunpack.c.l.b16 %v4373
    %v5131 = vunpack.c.h.b16 %v4373
    %v5132 = vunpack.c.l.b16 %v4374
    %v5133 = vunpack.c.h.b16 %v4374
    %v5134 = vunpack.c.l.b16 %v4375
    %v5135 = vunpack.c.h.b16 %v4375
    %v5136 = vunpack.c.l.b16 %v4376
    %v5137 = vunpack.c.h.b16 %v4376
    %v5138 = vunpack.c.l.b16 %v4377
    %v5139 = vunpack.c.h.b16 %v4377
    %v5140 = vunpack.c.l.b16 %v4378
    %v5141 = vunpack.c.h.b16 %v4378
    %v5142 = vunpack.c.l.b16 %v4379
    %v5143 = vunpack.c.h.b16 %v4379
    %v5144 = vunpack.c.l.b16 %v4380
    %v5145 = vunpack.c.h.b16 %v4380
    %v5146 = vunpack.c.l.b16 %v4381
    %v5147 = vunpack.c.h.b16 %v4381
    %v5148 = vunpack.c.l.b16 %v4382
    %v5149 = vunpack.c.h.b16 %v4382
    %v5150 = vunpack.c.l.b16 %v4383
    %v5151 = vunpack.c.h.b16 %v4383
    %v5152 = vunpack.c.l.b16 %v4384
    %v5153 = vunpack.c.h.b16 %v4384
    %v5154 = vunpack.c.l.b16 %v4385
    %v5155 = vunpack.c.h.b16 %v4385
    %v5156 = vunpack.c.l.b16 %v4386
    %v5157 = vunpack.c.h.b16 %v4386
    %v5158 = vunpack.c.l.b16 %v4387
    %v5159 = vunpack.c.h.b16 %v4387
    %v5160 = vunpack.c.l.b16 %v4388
    %v5161 = vunpack.c.h.b16 %v4388
    %v5162 = vunpack.c.l.b16 %v4389
    %v5163 = vunpack.c.h.b16 %v4389
    %v5164 = vunpack.c.l.b16 %v4390
    %v5165 = vunpack.c.h.b16 %v4390
    %v5166 = vunpack.c.l.b16 %v4391
    %v5167 = vunpack.c.h.b16 %v4391
    %v5168 = vunpack.c.l.b16 %v4392
    %v5169 = vunpack.c.h.b16 %v4392
    %v5170 = vunpack.c.l.b16 %v4393
    %v5171 = vunpack.c.h.b16 %v4393
    %v5172 = vpack.c.b16 %v4664, %v4660
    %v5173 = vpack.c.b16 %v4665, %v4661
    %v5174 = vpack.c.b16 %v4666, %v4662
    %v5175 = vpack.c.b16 %v4667, %v4663
    %v5176 = vpack.c.b16 %v4672, %v4668
    %v5177 = vpack.c.b16 %v4673, %v4669
    %v5178 = vpack.c.b16 %v4674, %v4670
    %v5179 = vpack.c.b16 %v4675, %v4671
    %v5180 = vpack.c.b16 %v4680, %v4676
    %v5181 = vpack.c.b16 %v4681, %v4677
    %v5182 = vpack.c.b16 %v4682, %v4678
    %v5183 = vpack.c.b16 %v4683, %v4679
    %v5184 = vpack.c.b16 %v4688, %v4684
    %v5185 = vpack.c.b16 %v4689, %v4685
    %v5186 = vpack.c.b16 %v4690, %v4686
    %v5187 = vpack.c.b16 %v4691, %v4687
    %v5188 = vpack.c.b16 %v4696, %v4692
    %v5189 = vpack.c.b16 %v4697, %v4693
    %v5190 = vpack.c.b16 %v4698, %v4694
    %v5191 = vpack.c.b16 %v4699, %v4695
    %v5192 = vpack.c.b16 %v4704, %v4700
    %v5193 = vpack.c.b16 %v4705, %v4701
    %v5194 = vpack.c.b16 %v4706, %v4702
    %v5195 = vpack.c.b16 %v4707, %v4703
    %v5196 = vpack.c.b16 %v4712, %v4708
    %v5197 = vpack.c.b16 %v4713, %v4709
    %v5198 = vpack.c.b16 %v4714, %v4710
    %v5199 = vpack.c.b16 %v4715, %v4711
    %v5200 = vpack.c.b16 %v4720, %v4716
    %v5201 = vpack.c.b16 %v4721, %v4717
    %v5202 = vpack.c.b16 %v4722, %v4718
    %v5203 = vpack.c.b16 %v4723, %v4719
    %v5204 = vpack.c.b16 %v4728, %v4724
    %v5205 = vpack.c.b16 %v4729, %v4725
    %v5206 = vpack.c.b16 %v4730, %v4726
    %v5207 = vpack.c.b16 %v4731, %v4727
    %v5208 = vpack.c.b16 %v4736, %v4732
    %v5209 = vpack.c.b16 %v4737, %v4733
    %v5210 = vpack.c.b16 %v4738, %v4734
    %v5211 = vpack.c.b16 %v4739, %v4735
    %v5212 = vpack.c.b16 %v4744, %v4740
    %v5213 = vpack.c.b16 %v4745, %v4741
    %v5214 = vpack.c.b16 %v4746, %v4742
    %v5215 = vpack.c.b16 %v4747, %v4743
    %v5216 = vpack.c.b16 %v4752, %v4748
    %v5217 = vpack.c.b16 %v4753, %v4749
    %v5218 = vpack.c.b16 %v4754, %v4750
    %v5219 = vpack.c.b16 %v4755, %v4751
    %v5220 = vpack.c.b16 %v4760, %v4756
    %v5221 = vpack.c.b16 %v4761, %v4757
    %v5222 = vpack.c.b16 %v4762, %v4758
    %v5223 = vpack.c.b16 %v4763, %v4759
    %v5224 = vpack.c.b16 %v4768, %v4764
    %v5225 = vpack.c.b16 %v4769, %v4765
    %v5226 = vpack.c.b16 %v4770, %v4766
    %v5227 = vpack.c.b16 %v4771, %v4767
    %v5228 = vpack.c.b16 %v4776, %v4772
    %v5229 = vpack.c.b16 %v4777, %v4773
    %v5230 = vpack.c.b16 %v4778, %v4774
    %v5231 = vpack.c.b16 %v4779, %v4775
    %v5232 = vpack.c.b16 %v4784, %v4780
    %v5233 = vpack.c.b16 %v4785, %v4781
    %v5234 = vpack.c.b16 %v4786, %v4782
    %v5235 = vpack.c.b16 %v4787, %v4783
    %v5236 = vpack.c.b16 %v4792, %v4788
    %v5237 = vpack.c.b16 %v4793, %v4789
    %v5238 = vpack.c.b16 %v4794, %v4790
    %v5239 = vpack.c.b16 %v4795, %v4791
    %v5240 = vpack.c.b16 %v4800, %v4796
    %v5241 = vpack.c.b16 %v4801, %v4797
    %v5242 = vpack.c.b16 %v4802, %v4798
    %v5243 = vpack.c.b16 %v4803, %v4799
    %v5244 = vpack.c.b16 %v4808, %v4804
    %v5245 = vpack.c.b16 %v4809, %v4805
    %v5246 = vpack.c.b16 %v4810, %v4806
    %v5247 = vpack.c.b16 %v4811, %v4807
    %v5248 = vpack.c.b16 %v4816, %v4812
    %v5249 = vpack.c.b16 %v4817, %v4813
    %v5250 = vpack.c.b16 %v4818, %v4814
    %v5251 = vpack.c.b16 %v4819, %v4815
    %v5252 = vpack.c.b16 %v4824, %v4820
    %v5253 = vpack.c.b16 %v4825, %v4821
    %v5254 = vpack.c.b16 %v4826, %v4822
    %v5255 = vpack.c.b16 %v4827, %v4823
    %v5256 = vpack.c.b16 %v4832, %v4828
    %v5257 = vpack.c.b16 %v4833, %v4829
    %v5258 = vpack.c.b16 %v4834, %v4830
    %v5259 = vpack.c.b16 %v4835, %v4831
    %v5260 = vpack.c.b16 %v4840, %v4836
    %v5261 = vpack.c.b16 %v4841, %v4837
    %v5262 = vpack.c.b16 %v4842, %v4838
    %v5263 = vpack.c.b16 %v4843, %v4839
    %v5264 = vpack.c.b16 %v4848, %v4844
    %v5265 = vpack.c.b16 %v4849, %v4845
    %v5266 = vpack.c.b16 %v4850, %v4846
    %v5267 = vpack.c.b16 %v4851, %v4847
    %v5268 = vpack.c.b16 %v4856, %v4852
    %v5269 = vpack.c.b16 %v4857, %v4853
    %v5270 = vpack.c.b16 %v4858, %v4854
    %v5271 = vpack.c.b16 %v4859, %v4855
    %v5272 = vpack.c.b16 %v4864, %v4860
    %v5273 = vpack.c.b16 %v4865, %v4861
    %v5274 = vpack.c.b16 %v4866, %v4862
    %v5275 = vpack.c.b16 %v4867, %v4863
    %v5276 = vpack.c.b16 %v4872, %v4868
    %v5277 = vpack.c.b16 %v4873, %v4869
    %v5278 = vpack.c.b16 %v4874, %v4870
    %v5279 = vpack.c.b16 %v4875, %v4871
    %v5280 = vpack.c.b16 %v4880, %v4876
    %v5281 = vpack.c.b16 %v4881, %v4877
    %v5282 = vpack.c.b16 %v4882, %v4878
    %v5283 = vpack.c.b16 %v4883, %v4879
    %v5284 = vpack.c.b16 %v4888, %v4884
    %v5285 = vpack.c.b16 %v4889, %v4885
    %v5286 = vpack.c.b16 %v4890, %v4886
    %v5287 = vpack.c.b16 %v4891, %v4887
    %v5288 = vpack.c.b16 %v4896, %v4892
    %v5289 = vpack.c.b16 %v4897, %v4893
    %v5290 = vpack.c.b16 %v4898, %v4894
    %v5291 = vpack.c.b16 %v4899, %v4895
    %v5292 = vpack.c.b16 %v4904, %v4900
    %v5293 = vpack.c.b16 %v4905, %v4901
    %v5294 = vpack.c.b16 %v4906, %v4902
    %v5295 = vpack.c.b16 %v4907, %v4903
    %v5296 = vpack.c.b16 %v4912, %v4908
    %v5297 = vpack.c.b16 %v4913, %v4909
    %v5298 = vpack.c.b16 %v4914, %v4910
    %v5299 = vpack.c.b16 %v4915, %v4911
    %v5300 = vpack.c.b16 %v4920, %v4916
    %v5301 = vpack.c.b16 %v4921, %v4917
    %v5302 = vpack.c.b16 %v4922, %v4918
    %v5303 = vpack.c.b16 %v4923, %v4919
    %v5304 = vpack.c.b16 %v4928, %v4924
    %v5305 = vpack.c.b16 %v4929, %v4925
    %v5306 = vpack.c.b16 %v4930, %v4926
    %v5307 = vpack.c.b16 %v4931, %v4927
    %v5308 = vpack.c.b16 %v4936, %v4932
    %v5309 = vpack.c.b16 %v4937, %v4933
    %v5310 = vpack.c.b16 %v4938, %v4934
    %v5311 = vpack.c.b16 %v4939, %v4935
    %v5312 = vpack.c.b16 %v4944, %v4940
    %v5313 = vpack.c.b16 %v4945, %v4941
    %v5314 = vpack.c.b16 %v4946, %v4942
    %v5315 = vpack.c.b16 %v4947, %v4943
    %v5316 = vpack.c.b16 %v4952, %v4948
    %v5317 = vpack.c.b16 %v4953, %v4949
    %v5318 = vpack.c.b16 %v4954, %v4950
    %v5319 = vpack.c.b16 %v4955, %v4951
    %v5320 = vpack.c.b16 %v4960, %v4956
    %v5321 = vpack.c.b16 %v4961, %v4957
    %v5322 = vpack.c.b16 %v4962, %v4958
    %v5323 = vpack.c.b16 %v4963, %v4959
    %v5324 = vpack.c.b16 %v4968, %v4964
    %v5325 = vpack.c.b16 %v4969, %v4965
    %v5326 = vpack.c.b16 %v4970, %v4966
    %v5327 = vpack.c.b16 %v4971, %v4967
    %v5328 = vpack.c.b16 %v4976, %v4972
    %v5329 = vpack.c.b16 %v4977, %v4973
    %v5330 = vpack.c.b16 %v4978, %v4974
    %v5331 = vpack.c.b16 %v4979, %v4975
    %v5332 = vpack.c.b16 %v4984, %v4980
    %v5333 = vpack.c.b16 %v4985, %v4981
    %v5334 = vpack.c.b16 %v4986, %v4982
    %v5335 = vpack.c.b16 %v4987, %v4983
    %v5336 = vpack.c.b16 %v4992, %v4988
    %v5337 = vpack.c.b16 %v4993, %v4989
    %v5338 = vpack.c.b16 %v4994, %v4990
    %v5339 = vpack.c.b16 %v4995, %v4991
    %v5340 = vpack.c.b16 %v5000, %v4996
    %v5341 = vpack.c.b16 %v5001, %v4997
    %v5342 = vpack.c.b16 %v5002, %v4998
    %v5343 = vpack.c.b16 %v5003, %v4999
    %v5344 = vpack.c.b16 %v5008, %v5004
    %v5345 = vpack.c.b16 %v5009, %v5005
    %v5346 = vpack.c.b16 %v5010, %v5006
    %v5347 = vpack.c.b16 %v5011, %v5007
    %v5348 = vpack.c.b16 %v5016, %v5012
    %v5349 = vpack.c.b16 %v5017, %v5013
    %v5350 = vpack.c.b16 %v5018, %v5014
    %v5351 = vpack.c.b16 %v5019, %v5015
    %v5352 = vpack.c.b16 %v5024, %v5020
    %v5353 = vpack.c.b16 %v5025, %v5021
    %v5354 = vpack.c.b16 %v5026, %v5022
    %v5355 = vpack.c.b16 %v5027, %v5023
    %v5356 = vpack.c.b16 %v5032, %v5028
    %v5357 = vpack.c.b16 %v5033, %v5029
    %v5358 = vpack.c.b16 %v5034, %v5030
    %v5359 = vpack.c.b16 %v5035, %v5031
    %v5360 = vpack.c.b16 %v5040, %v5036
    %v5361 = vpack.c.b16 %v5041, %v5037
    %v5362 = vpack.c.b16 %v5042, %v5038
    %v5363 = vpack.c.b16 %v5043, %v5039
    %v5364 = vpack.c.b16 %v5048, %v5044
    %v5365 = vpack.c.b16 %v5049, %v5045
    %v5366 = vpack.c.b16 %v5050, %v5046
    %v5367 = vpack.c.b16 %v5051, %v5047
    %v5368 = vpack.c.b16 %v5056, %v5052
    %v5369 = vpack.c.b16 %v5057, %v5053
    %v5370 = vpack.c.b16 %v5058, %v5054
    %v5371 = vpack.c.b16 %v5059, %v5055
    %v5372 = vpack.c.b16 %v5064, %v5060
    %v5373 = vpack.c.b16 %v5065, %v5061
    %v5374 = vpack.c.b16 %v5066, %v5062
    %v5375 = vpack.c.b16 %v5067, %v5063
    %v5376 = vpack.c.b16 %v5072, %v5068
    %v5377 = vpack.c.b16 %v5073, %v5069
    %v5378 = vpack.c.b16 %v5074, %v5070
    %v5379 = vpack.c.b16 %v5075, %v5071
    %v5380 = vpack.c.b16 %v5080, %v5076
    %v5381 = vpack.c.b16 %v5081, %v5077
    %v5382 = vpack.c.b16 %v5082, %v5078
    %v5383 = vpack.c.b16 %v5083, %v5079
    %v5384 = vpack.c.b16 %v5088, %v5084
    %v5385 = vpack.c.b16 %v5089, %v5085
    %v5386 = vpack.c.b16 %v5090, %v5086
    %v5387 = vpack.c.b16 %v5091, %v5087
    %v5388 = vpack.c.b16 %v5096, %v5092
    %v5389 = vpack.c.b16 %v5097, %v5093
    %v5390 = vpack.c.b16 %v5098, %v5094
    %v5391 = vpack.c.b16 %v5099, %v5095
    %v5392 = vpack.c.b16 %v5104, %v5100
    %v5393 = vpack.c.b16 %v5105, %v5101
    %v5394 = vpack.c.b16 %v5106, %v5102
    %v5395 = vpack.c.b16 %v5107, %v5103
    %v5396 = vpack.c.b16 %v5112, %v5108
    %v5397 = vpack.c.b16 %v5113, %v5109
    %v5398 = vpack.c.b16 %v5114, %v5110
    %v5399 = vpack.c.b16 %v5115, %v5111
    %v5400 = vpack.c.b16 %v5120, %v5116
    %v5401 = vpack.c.b16 %v5121, %v5117
    %v5402 = vpack.c.b16 %v5122, %v5118
    %v5403 = vpack.c.b16 %v5123, %v5119
    %v5404 = vpack.c.b16 %v5128, %v5124
    %v5405 = vpack.c.b16 %v5129, %v5125
    %v5406 = vpack.c.b16 %v5130, %v5126
    %v5407 = vpack.c.b16 %v5131, %v5127
    %v5408 = vpack.c.b16 %v5136, %v5132
    %v5409 = vpack.c.b16 %v5137, %v5133
    %v5410 = vpack.c.b16 %v5138, %v5134
    %v5411 = vpack.c.b16 %v5139, %v5135
    %v5412 = vpack.c.b16 %v5144, %v5140
    %v5413 = vpack.c.b16 %v5145, %v5141
    %v5414 = vpack.c.b16 %v5146, %v5142
    %v5415 = vpack.c.b16 %v5147, %v5143
    %v5416 = vpack.c.b16 %v5152, %v5148
    %v5417 = vpack.c.b16 %v5153, %v5149
    %v5418 = vpack.c.b16 %v5154, %v5150
    %v5419 = vpack.c.b16 %v5155, %v5151
    %v5420 = vpack.c.b16 %v5160, %v5156
    %v5421 = vpack.c.b16 %v5161, %v5157
    %v5422 = vpack.c.b16 %v5162, %v5158
    %v5423 = vpack.c.b16 %v5163, %v5159
    %v5424 = vpack.c.b16 %v5168, %v5164
    %v5425 = vpack.c.b16 %v5169, %v5165
    %v5426 = vpack.c.b16 %v5170, %v5166
    %v5427 = vpack.c.b16 %v5171, %v5167
    %5684 = vmatpush.bf16.msra.mxu0 %v5200
    %5685 = vmatpush.bf16.msra.mxu0 %v5196
    %5686 = vmatpush.bf16.msra.mxu0 %v5192
    %5687 = vmatpush.bf16.msra.mxu0 %v5188
    %5688 = vmatpush.bf16.msra.mxu0 %v5184
    %5689 = vmatpush.bf16.msra.mxu0 %v5180
    %5690 = vmatpush.bf16.msra.mxu0 %v5176
    %5691 = vmatpush.bf16.msra.mxu0 %v5172
    %5692 = vmatmul.bf16.gmra.mxu0 %v4130
    %v5693 = vpop.f32.mrf.mxu0
    %v5694 = vadd.f32 %v4396, %v5693
    %v5695 = vpop.f32.mrf.mxu0
    %5696 = vdwg.mxu0
    %5697 = vmatpush.bf16.msra.mxu0 %v5232
    %5698 = vmatpush.bf16.msra.mxu0 %v5228
    %5699 = vmatpush.bf16.msra.mxu0 %v5224
    %5700 = vmatpush.bf16.msra.mxu0 %v5220
    %5701 = vmatpush.bf16.msra.mxu0 %v5216
    %5702 = vmatpush.bf16.msra.mxu0 %v5212
    %5703 = vmatpush.bf16.msra.mxu0 %v5208
    %5704 = vmatpush.bf16.msra.mxu0 %v5204
    %5705 = vmatmul.bf16.gmra.mxu0 %v4131
    %v5706 = vpop.f32.mrf.mxu0
    %v5707 = vadd.f32 %v5694, %v5706
    %v5708 = vpop.f32.mrf.mxu0
    %5709 = vdwg.mxu0
    %5710 = vmatpush.bf16.msra.mxu0 %v5264
    %5711 = vmatpush.bf16.msra.mxu0 %v5260
    %5712 = vmatpush.bf16.msra.mxu0 %v5256
    %5713 = vmatpush.bf16.msra.mxu0 %v5252
    %5714 = vmatpush.bf16.msra.mxu0 %v5248
    %5715 = vmatpush.bf16.msra.mxu0 %v5244
    %5716 = vmatpush.bf16.msra.mxu0 %v5240
    %5717 = vmatpush.bf16.msra.mxu0 %v5236
    %5718 = vmatmul.bf16.gmra.mxu0 %v4132
    %v5719 = vpop.f32.mrf.mxu0
    %v5720 = vadd.f32 %v5707, %v5719
    %v5721 = vpop.f32.mrf.mxu0
    %5722 = vdwg.mxu0
    %5723 = vmatpush.bf16.msra.mxu0 %v5296
    %5724 = vmatpush.bf16.msra.mxu0 %v5292
    %5725 = vmatpush.bf16.msra.mxu0 %v5288
    %5726 = vmatpush.bf16.msra.mxu0 %v5284
    %5727 = vmatpush.bf16.msra.mxu0 %v5280
    %5728 = vmatpush.bf16.msra.mxu0 %v5276
    %5729 = vmatpush.bf16.msra.mxu0 %v5272
    %5730 = vmatpush.bf16.msra.mxu0 %v5268
    %5731 = vmatmul.bf16.gmra.mxu0 %v4133
    %v5732 = vpop.f32.mrf.mxu0
    %v5733 = vadd.f32 %v5720, %v5732
    %v5734 = vpop.f32.mrf.mxu0
    %5735 = vdwg.mxu0
    %5736 = vmatpush.bf16.msra.mxu0 %v5328
    %5737 = vmatpush.bf16.msra.mxu0 %v5324
    %5738 = vmatpush.bf16.msra.mxu0 %v5320
    %5739 = vmatpush.bf16.msra.mxu0 %v5316
    %5740 = vmatpush.bf16.msra.mxu0 %v5312
    %5741 = vmatpush.bf16.msra.mxu0 %v5308
    %5742 = vmatpush.bf16.msra.mxu0 %v5304
    %5743 = vmatpush.bf16.msra.mxu0 %v5300
    %5744 = vmatmul.bf16.gmra.mxu0 %v4134
    %v5745 = vpop.f32.mrf.mxu0
    %v5746 = vadd.f32 %v5733, %v5745
    %v5747 = vpop.f32.mrf.mxu0
    %5748 = vdwg.mxu0
    %5749 = vmatpush.bf16.msra.mxu0 %v5360
    %5750 = vmatpush.bf16.msra.mxu0 %v5356
    %5751 = vmatpush.bf16.msra.mxu0 %v5352
    %5752 = vmatpush.bf16.msra.mxu0 %v5348
    %5753 = vmatpush.bf16.msra.mxu0 %v5344
    %5754 = vmatpush.bf16.msra.mxu0 %v5340
    %5755 = vmatpush.bf16.msra.mxu0 %v5336
    %5756 = vmatpush.bf16.msra.mxu0 %v5332
    %5757 = vmatmul.bf16.gmra.mxu0 %v4135
    %v5758 = vpop.f32.mrf.mxu0
    %v5759 = vadd.f32 %v5746, %v5758
    %v5760 = vpop.f32.mrf.mxu0
    %5761 = vdwg.mxu0
    %5762 = vmatpush.bf16.msra.mxu0 %v5392
    %5763 = vmatpush.bf16.msra.mxu0 %v5388
    %5764 = vmatpush.bf16.msra.mxu0 %v5384
    %5765 = vmatpush.bf16.msra.mxu0 %v5380
    %5766 = vmatpush.bf16.msra.mxu0 %v5376
    %5767 = vmatpush.bf16.msra.mxu0 %v5372
    %5768 = vmatpush.bf16.msra.mxu0 %v5368
    %5769 = vmatpush.bf16.msra.mxu0 %v5364
    %5770 = vmatmul.bf16.gmra.mxu0 %v4136
    %v5771 = vpop.f32.mrf.mxu0
    %v5772 = vadd.f32 %v5759, %v5771
    %v5773 = vpop.f32.mrf.mxu0
    %5774 = vdwg.mxu0
    %5775 = vmatpush.bf16.msra.mxu0 %v5424
    %5776 = vmatpush.bf16.msra.mxu0 %v5420
    %5777 = vmatpush.bf16.msra.mxu0 %v5416
    %5778 = vmatpush.bf16.msra.mxu0 %v5412
    %5779 = vmatpush.bf16.msra.mxu0 %v5408
    %5780 = vmatpush.bf16.msra.mxu0 %v5404
    %5781 = vmatpush.bf16.msra.mxu0 %v5400
    %5782 = vmatpush.bf16.msra.mxu0 %v5396
    %5783 = vmatmul.bf16.gmra.mxu0 %v4137
    %v5784 = vpop.f32.mrf.mxu0
    %v5785 = vadd.f32 %v5772, %v5784
    %v5786 = vpop.f32.mrf.mxu0
    %5787 = vdwg.mxu0
    %5788 = vmatpush.bf16.msra.mxu0 %v5201
    %5789 = vmatpush.bf16.msra.mxu0 %v5197
    %5790 = vmatpush.bf16.msra.mxu0 %v5193
    %5791 = vmatpush.bf16.msra.mxu0 %v5189
    %5792 = vmatpush.bf16.msra.mxu0 %v5185
    %5793 = vmatpush.bf16.msra.mxu0 %v5181
    %5794 = vmatpush.bf16.msra.mxu0 %v5177
    %5795 = vmatpush.bf16.msra.mxu0 %v5173
    %5796 = vmatmul.bf16.gmra.mxu0 %v4130
    %v5797 = vpop.f32.mrf.mxu0
    %v5798 = vadd.f32 %v4397, %v5797
    %v5799 = vpop.f32.mrf.mxu0
    %5800 = vdwg.mxu0
    %5801 = vmatpush.bf16.msra.mxu0 %v5233
    %5802 = vmatpush.bf16.msra.mxu0 %v5229
    %5803 = vmatpush.bf16.msra.mxu0 %v5225
    %5804 = vmatpush.bf16.msra.mxu0 %v5221
    %5805 = vmatpush.bf16.msra.mxu0 %v5217
    %5806 = vmatpush.bf16.msra.mxu0 %v5213
    %5807 = vmatpush.bf16.msra.mxu0 %v5209
    %5808 = vmatpush.bf16.msra.mxu0 %v5205
    %5809 = vmatmul.bf16.gmra.mxu0 %v4131
    %v5810 = vpop.f32.mrf.mxu0
    %v5811 = vadd.f32 %v5798, %v5810
    %v5812 = vpop.f32.mrf.mxu0
    %5813 = vdwg.mxu0
    %5814 = vmatpush.bf16.msra.mxu0 %v5265
    %5815 = vmatpush.bf16.msra.mxu0 %v5261
    %5816 = vmatpush.bf16.msra.mxu0 %v5257
    %5817 = vmatpush.bf16.msra.mxu0 %v5253
    %5818 = vmatpush.bf16.msra.mxu0 %v5249
    %5819 = vmatpush.bf16.msra.mxu0 %v5245
    %5820 = vmatpush.bf16.msra.mxu0 %v5241
    %5821 = vmatpush.bf16.msra.mxu0 %v5237
    %5822 = vmatmul.bf16.gmra.mxu0 %v4132
    %v5823 = vpop.f32.mrf.mxu0
    %v5824 = vadd.f32 %v5811, %v5823
    %v5825 = vpop.f32.mrf.mxu0
    %5826 = vdwg.mxu0
    %5827 = vmatpush.bf16.msra.mxu0 %v5297
    %5828 = vmatpush.bf16.msra.mxu0 %v5293
    %5829 = vmatpush.bf16.msra.mxu0 %v5289
    %5830 = vmatpush.bf16.msra.mxu0 %v5285
    %5831 = vmatpush.bf16.msra.mxu0 %v5281
    %5832 = vmatpush.bf16.msra.mxu0 %v5277
    %5833 = vmatpush.bf16.msra.mxu0 %v5273
    %5834 = vmatpush.bf16.msra.mxu0 %v5269
    %5835 = vmatmul.bf16.gmra.mxu0 %v4133
    %v5836 = vpop.f32.mrf.mxu0
    %v5837 = vadd.f32 %v5824, %v5836
    %v5838 = vpop.f32.mrf.mxu0
    %5839 = vdwg.mxu0
    %5840 = vmatpush.bf16.msra.mxu0 %v5329
    %5841 = vmatpush.bf16.msra.mxu0 %v5325
    %5842 = vmatpush.bf16.msra.mxu0 %v5321
    %5843 = vmatpush.bf16.msra.mxu0 %v5317
    %5844 = vmatpush.bf16.msra.mxu0 %v5313
    %5845 = vmatpush.bf16.msra.mxu0 %v5309
    %5846 = vmatpush.bf16.msra.mxu0 %v5305
    %5847 = vmatpush.bf16.msra.mxu0 %v5301
    %5848 = vmatmul.bf16.gmra.mxu0 %v4134
    %v5849 = vpop.f32.mrf.mxu0
    %v5850 = vadd.f32 %v5837, %v5849
    %v5851 = vpop.f32.mrf.mxu0
    %5852 = vdwg.mxu0
    %5853 = vmatpush.bf16.msra.mxu0 %v5361
    %5854 = vmatpush.bf16.msra.mxu0 %v5357
    %5855 = vmatpush.bf16.msra.mxu0 %v5353
    %5856 = vmatpush.bf16.msra.mxu0 %v5349
    %5857 = vmatpush.bf16.msra.mxu0 %v5345
    %5858 = vmatpush.bf16.msra.mxu0 %v5341
    %5859 = vmatpush.bf16.msra.mxu0 %v5337
    %5860 = vmatpush.bf16.msra.mxu0 %v5333
    %5861 = vmatmul.bf16.gmra.mxu0 %v4135
    %v5862 = vpop.f32.mrf.mxu0
    %v5863 = vadd.f32 %v5850, %v5862
    %v5864 = vpop.f32.mrf.mxu0
    %5865 = vdwg.mxu0
    %5866 = vmatpush.bf16.msra.mxu0 %v5393
    %5867 = vmatpush.bf16.msra.mxu0 %v5389
    %5868 = vmatpush.bf16.msra.mxu0 %v5385
    %5869 = vmatpush.bf16.msra.mxu0 %v5381
    %5870 = vmatpush.bf16.msra.mxu0 %v5377
    %5871 = vmatpush.bf16.msra.mxu0 %v5373
    %5872 = vmatpush.bf16.msra.mxu0 %v5369
    %5873 = vmatpush.bf16.msra.mxu0 %v5365
    %5874 = vmatmul.bf16.gmra.mxu0 %v4136
    %v5875 = vpop.f32.mrf.mxu0
    %v5876 = vadd.f32 %v5863, %v5875
    %v5877 = vpop.f32.mrf.mxu0
    %5878 = vdwg.mxu0
    %5879 = vmatpush.bf16.msra.mxu0 %v5425
    %5880 = vmatpush.bf16.msra.mxu0 %v5421
    %5881 = vmatpush.bf16.msra.mxu0 %v5417
    %5882 = vmatpush.bf16.msra.mxu0 %v5413
    %5883 = vmatpush.bf16.msra.mxu0 %v5409
    %5884 = vmatpush.bf16.msra.mxu0 %v5405
    %5885 = vmatpush.bf16.msra.mxu0 %v5401
    %5886 = vmatpush.bf16.msra.mxu0 %v5397
    %5887 = vmatmul.bf16.gmra.mxu0 %v4137
    %v5888 = vpop.f32.mrf.mxu0
    %v5889 = vadd.f32 %v5876, %v5888
    %v5890 = vpop.f32.mrf.mxu0
    %5891 = vdwg.mxu0
    %5892 = vmatpush.bf16.msra.mxu0 %v5202
    %5893 = vmatpush.bf16.msra.mxu0 %v5198
    %5894 = vmatpush.bf16.msra.mxu0 %v5194
    %5895 = vmatpush.bf16.msra.mxu0 %v5190
    %5896 = vmatpush.bf16.msra.mxu0 %v5186
    %5897 = vmatpush.bf16.msra.mxu0 %v5182
    %5898 = vmatpush.bf16.msra.mxu0 %v5178
    %5899 = vmatpush.bf16.msra.mxu0 %v5174
    %5900 = vmatmul.bf16.gmra.mxu0 %v4130
    %v5901 = vpop.f32.mrf.mxu0
    %v5902 = vadd.f32 %v4398, %v5901
    %v5903 = vpop.f32.mrf.mxu0
    %5904 = vdwg.mxu0
    %5905 = vmatpush.bf16.msra.mxu0 %v5234
    %5906 = vmatpush.bf16.msra.mxu0 %v5230
    %5907 = vmatpush.bf16.msra.mxu0 %v5226
    %5908 = vmatpush.bf16.msra.mxu0 %v5222
    %5909 = vmatpush.bf16.msra.mxu0 %v5218
    %5910 = vmatpush.bf16.msra.mxu0 %v5214
    %5911 = vmatpush.bf16.msra.mxu0 %v5210
    %5912 = vmatpush.bf16.msra.mxu0 %v5206
    %5913 = vmatmul.bf16.gmra.mxu0 %v4131
    %v5914 = vpop.f32.mrf.mxu0
    %v5915 = vadd.f32 %v5902, %v5914
    %v5916 = vpop.f32.mrf.mxu0
    %5917 = vdwg.mxu0
    %5918 = vmatpush.bf16.msra.mxu0 %v5266
    %5919 = vmatpush.bf16.msra.mxu0 %v5262
    %5920 = vmatpush.bf16.msra.mxu0 %v5258
    %5921 = vmatpush.bf16.msra.mxu0 %v5254
    %5922 = vmatpush.bf16.msra.mxu0 %v5250
    %5923 = vmatpush.bf16.msra.mxu0 %v5246
    %5924 = vmatpush.bf16.msra.mxu0 %v5242
    %5925 = vmatpush.bf16.msra.mxu0 %v5238
    %5926 = vmatmul.bf16.gmra.mxu0 %v4132
    %v5927 = vpop.f32.mrf.mxu0
    %v5928 = vadd.f32 %v5915, %v5927
    %v5929 = vpop.f32.mrf.mxu0
    %5930 = vdwg.mxu0
    %5931 = vmatpush.bf16.msra.mxu0 %v5298
    %5932 = vmatpush.bf16.msra.mxu0 %v5294
    %5933 = vmatpush.bf16.msra.mxu0 %v5290
    %5934 = vmatpush.bf16.msra.mxu0 %v5286
    %5935 = vmatpush.bf16.msra.mxu0 %v5282
    %5936 = vmatpush.bf16.msra.mxu0 %v5278
    %5937 = vmatpush.bf16.msra.mxu0 %v5274
    %5938 = vmatpush.bf16.msra.mxu0 %v5270
    %5939 = vmatmul.bf16.gmra.mxu0 %v4133
    %v5940 = vpop.f32.mrf.mxu0
    %v5941 = vadd.f32 %v5928, %v5940
    %v5942 = vpop.f32.mrf.mxu0
    %5943 = vdwg.mxu0
    %5944 = vmatpush.bf16.msra.mxu0 %v5330
    %5945 = vmatpush.bf16.msra.mxu0 %v5326
    %5946 = vmatpush.bf16.msra.mxu0 %v5322
    %5947 = vmatpush.bf16.msra.mxu0 %v5318
    %5948 = vmatpush.bf16.msra.mxu0 %v5314
    %5949 = vmatpush.bf16.msra.mxu0 %v5310
    %5950 = vmatpush.bf16.msra.mxu0 %v5306
    %5951 = vmatpush.bf16.msra.mxu0 %v5302
    %5952 = vmatmul.bf16.gmra.mxu0 %v4134
    %v5953 = vpop.f32.mrf.mxu0
    %v5954 = vadd.f32 %v5941, %v5953
    %v5955 = vpop.f32.mrf.mxu0
    %5956 = vdwg.mxu0
    %5957 = vmatpush.bf16.msra.mxu0 %v5362
    %5958 = vmatpush.bf16.msra.mxu0 %v5358
    %5959 = vmatpush.bf16.msra.mxu0 %v5354
    %5960 = vmatpush.bf16.msra.mxu0 %v5350
    %5961 = vmatpush.bf16.msra.mxu0 %v5346
    %5962 = vmatpush.bf16.msra.mxu0 %v5342
    %5963 = vmatpush.bf16.msra.mxu0 %v5338
    %5964 = vmatpush.bf16.msra.mxu0 %v5334
    %5965 = vmatmul.bf16.gmra.mxu0 %v4135
    %v5966 = vpop.f32.mrf.mxu0
    %v5967 = vadd.f32 %v5954, %v5966
    %v5968 = vpop.f32.mrf.mxu0
    %5969 = vdwg.mxu0
    %5970 = vmatpush.bf16.msra.mxu0 %v5394
    %5971 = vmatpush.bf16.msra.mxu0 %v5390
    %5972 = vmatpush.bf16.msra.mxu0 %v5386
    %5973 = vmatpush.bf16.msra.mxu0 %v5382
    %5974 = vmatpush.bf16.msra.mxu0 %v5378
    %5975 = vmatpush.bf16.msra.mxu0 %v5374
    %5976 = vmatpush.bf16.msra.mxu0 %v5370
    %5977 = vmatpush.bf16.msra.mxu0 %v5366
    %5978 = vmatmul.bf16.gmra.mxu0 %v4136
    %v5979 = vpop.f32.mrf.mxu0
    %v5980 = vadd.f32 %v5967, %v5979
    %v5981 = vpop.f32.mrf.mxu0
    %5982 = vdwg.mxu0
    %5983 = vmatpush.bf16.msra.mxu0 %v5426
    %5984 = vmatpush.bf16.msra.mxu0 %v5422
    %5985 = vmatpush.bf16.msra.mxu0 %v5418
    %5986 = vmatpush.bf16.msra.mxu0 %v5414
    %5987 = vmatpush.bf16.msra.mxu0 %v5410
    %5988 = vmatpush.bf16.msra.mxu0 %v5406
    %5989 = vmatpush.bf16.msra.mxu0 %v5402
    %5990 = vmatpush.bf16.msra.mxu0 %v5398
    %5991 = vmatmul.bf16.gmra.mxu0 %v4137
    %v5992 = vpop.f32.mrf.mxu0
    %v5993 = vadd.f32 %v5980, %v5992
    %v5994 = vpop.f32.mrf.mxu0
    %5995 = vdwg.mxu0
    %5996 = vmatpush.bf16.msra.mxu0 %v5203
    %5997 = vmatpush.bf16.msra.mxu0 %v5199
    %5998 = vmatpush.bf16.msra.mxu0 %v5195
    %5999 = vmatpush.bf16.msra.mxu0 %v5191
    %6000 = vmatpush.bf16.msra.mxu0 %v5187
    %6001 = vmatpush.bf16.msra.mxu0 %v5183
    %6002 = vmatpush.bf16.msra.mxu0 %v5179
    %6003 = vmatpush.bf16.msra.mxu0 %v5175
    %6004 = vmatmul.bf16.gmra.mxu0 %v4130
    %v6005 = vpop.f32.mrf.mxu0
    %v6006 = vadd.f32 %v4399, %v6005
    %v6007 = vpop.f32.mrf.mxu0
    %6008 = vdwg.mxu0
    %6009 = vmatpush.bf16.msra.mxu0 %v5235
    %6010 = vmatpush.bf16.msra.mxu0 %v5231
    %6011 = vmatpush.bf16.msra.mxu0 %v5227
    %6012 = vmatpush.bf16.msra.mxu0 %v5223
    %6013 = vmatpush.bf16.msra.mxu0 %v5219
    %6014 = vmatpush.bf16.msra.mxu0 %v5215
    %6015 = vmatpush.bf16.msra.mxu0 %v5211
    %6016 = vmatpush.bf16.msra.mxu0 %v5207
    %6017 = vmatmul.bf16.gmra.mxu0 %v4131
    %v6018 = vpop.f32.mrf.mxu0
    %v6019 = vadd.f32 %v6006, %v6018
    %v6020 = vpop.f32.mrf.mxu0
    %6021 = vdwg.mxu0
    %6022 = vmatpush.bf16.msra.mxu0 %v5267
    %6023 = vmatpush.bf16.msra.mxu0 %v5263
    %6024 = vmatpush.bf16.msra.mxu0 %v5259
    %6025 = vmatpush.bf16.msra.mxu0 %v5255
    %6026 = vmatpush.bf16.msra.mxu0 %v5251
    %6027 = vmatpush.bf16.msra.mxu0 %v5247
    %6028 = vmatpush.bf16.msra.mxu0 %v5243
    %6029 = vmatpush.bf16.msra.mxu0 %v5239
    %6030 = vmatmul.bf16.gmra.mxu0 %v4132
    %v6031 = vpop.f32.mrf.mxu0
    %v6032 = vadd.f32 %v6019, %v6031
    %v6033 = vpop.f32.mrf.mxu0
    %6034 = vdwg.mxu0
    %6035 = vmatpush.bf16.msra.mxu0 %v5299
    %6036 = vmatpush.bf16.msra.mxu0 %v5295
    %6037 = vmatpush.bf16.msra.mxu0 %v5291
    %6038 = vmatpush.bf16.msra.mxu0 %v5287
    %6039 = vmatpush.bf16.msra.mxu0 %v5283
    %6040 = vmatpush.bf16.msra.mxu0 %v5279
    %6041 = vmatpush.bf16.msra.mxu0 %v5275
    %6042 = vmatpush.bf16.msra.mxu0 %v5271
    %6043 = vmatmul.bf16.gmra.mxu0 %v4133
    %v6044 = vpop.f32.mrf.mxu0
    %v6045 = vadd.f32 %v6032, %v6044
    %v6046 = vpop.f32.mrf.mxu0
    %6047 = vdwg.mxu0
    %6048 = vmatpush.bf16.msra.mxu0 %v5331
    %6049 = vmatpush.bf16.msra.mxu0 %v5327
    %6050 = vmatpush.bf16.msra.mxu0 %v5323
    %6051 = vmatpush.bf16.msra.mxu0 %v5319
    %6052 = vmatpush.bf16.msra.mxu0 %v5315
    %6053 = vmatpush.bf16.msra.mxu0 %v5311
    %6054 = vmatpush.bf16.msra.mxu0 %v5307
    %6055 = vmatpush.bf16.msra.mxu0 %v5303
    %6056 = vmatmul.bf16.gmra.mxu0 %v4134
    %v6057 = vpop.f32.mrf.mxu0
    %v6058 = vadd.f32 %v6045, %v6057
    %v6059 = vpop.f32.mrf.mxu0
    %6060 = vdwg.mxu0
    %6061 = vmatpush.bf16.msra.mxu0 %v5363
    %6062 = vmatpush.bf16.msra.mxu0 %v5359
    %6063 = vmatpush.bf16.msra.mxu0 %v5355
    %6064 = vmatpush.bf16.msra.mxu0 %v5351
    %6065 = vmatpush.bf16.msra.mxu0 %v5347
    %6066 = vmatpush.bf16.msra.mxu0 %v5343
    %6067 = vmatpush.bf16.msra.mxu0 %v5339
    %6068 = vmatpush.bf16.msra.mxu0 %v5335
    %6069 = vmatmul.bf16.gmra.mxu0 %v4135
    %v6070 = vpop.f32.mrf.mxu0
    %v6071 = vadd.f32 %v6058, %v6070
    %v6072 = vpop.f32.mrf.mxu0
    %6073 = vdwg.mxu0
    %6074 = vmatpush.bf16.msra.mxu0 %v5395
    %6075 = vmatpush.bf16.msra.mxu0 %v5391
    %6076 = vmatpush.bf16.msra.mxu0 %v5387
    %6077 = vmatpush.bf16.msra.mxu0 %v5383
    %6078 = vmatpush.bf16.msra.mxu0 %v5379
    %6079 = vmatpush.bf16.msra.mxu0 %v5375
    %6080 = vmatpush.bf16.msra.mxu0 %v5371
    %6081 = vmatpush.bf16.msra.mxu0 %v5367
    %6082 = vmatmul.bf16.gmra.mxu0 %v4136
    %v6083 = vpop.f32.mrf.mxu0
    %v6084 = vadd.f32 %v6071, %v6083
    %v6085 = vpop.f32.mrf.mxu0
    %6086 = vdwg.mxu0
    %6087 = vmatpush.bf16.msra.mxu0 %v5427
    %6088 = vmatpush.bf16.msra.mxu0 %v5423
    %6089 = vmatpush.bf16.msra.mxu0 %v5419
    %6090 = vmatpush.bf16.msra.mxu0 %v5415
    %6091 = vmatpush.bf16.msra.mxu0 %v5411
    %6092 = vmatpush.bf16.msra.mxu0 %v5407
    %6093 = vmatpush.bf16.msra.mxu0 %v5403
    %6094 = vmatpush.bf16.msra.mxu0 %v5399
    %6095 = vmatmul.bf16.gmra.mxu0 %v4137
    %v6096 = vpop.f32.mrf.mxu0
    %v6097 = vadd.f32 %v6084, %v6096
    %v6098 = vpop.f32.mrf.mxu0
    %6099 = vdwg.mxu0
    %v6100 = vmax.f32 %v5785, 0.0
    %v6101 = vmax.f32 %v5889, 0.0
    %v6102 = vmax.f32 %v5993, 0.0
    %v6103 = vmax.f32 %v6097, 0.0
    %v6104 = vpack.c.bf16 %v6100, %v6100
    %v6105 = vpack.c.bf16 %v6101, %v6101
    %v6106 = vpack.c.bf16 %v6102, %v6102
    %v6107 = vpack.c.bf16 %v6103, %v6103
    %v6108 = vld [vmem:[#allocation9] sm:$0xff]
    %v6109 = vld [vmem:[#allocation9 + $0x8] sm:$0xff]
    %v6110 = vld [vmem:[#allocation9 + $0x10] sm:$0xff]
    %v6111 = vld [vmem:[#allocation9 + $0x18] sm:$0xff]
    %v6112 = vld [vmem:[#allocation9 + $0x20] sm:$0xff]
    %v6113 = vld [vmem:[#allocation9 + $0x28] sm:$0xff]
    %v6114 = vld [vmem:[#allocation9 + $0x30] sm:$0xff]
    %v6115 = vld [vmem:[#allocation9 + $0x38] sm:$0xff]
    %v6116 = vld [vmem:[#allocation9 + $0x40] sm:$0xff]
    %v6117 = vld [vmem:[#allocation9 + $0x48] sm:$0xff]
    %v6118 = vld [vmem:[#allocation9 + $0x50] sm:$0xff]
    %v6119 = vld [vmem:[#allocation9 + $0x58] sm:$0xff]
    %v6120 = vld [vmem:[#allocation9 + $0x60] sm:$0xff]
    %v6121 = vld [vmem:[#allocation9 + $0x68] sm:$0xff]
    %v6122 = vld [vmem:[#allocation9 + $0x70] sm:$0xff]
    %v6123 = vld [vmem:[#allocation9 + $0x78] sm:$0xff]
    %v6124 = vld [vmem:[#allocation9 + $0x80] sm:$0xff]
    %v6125 = vld [vmem:[#allocation9 + $0x88] sm:$0xff]
    %v6126 = vld [vmem:[#allocation9 + $0x90] sm:$0xff]
    %v6127 = vld [vmem:[#allocation9 + $0x98] sm:$0xff]
    %v6128 = vld [vmem:[#allocation9 + $0xa0] sm:$0xff]
    %v6129 = vld [vmem:[#allocation9 + $0xa8] sm:$0xff]
    %v6130 = vld [vmem:[#allocation9 + $0xb0] sm:$0xff]
    %v6131 = vld [vmem:[#allocation9 + $0xb8] sm:$0xff]
    %v6132 = vld [vmem:[#allocation9 + $0xc0] sm:$0xff]
    %v6133 = vld [vmem:[#allocation9 + $0xc8] sm:$0xff]
    %v6134 = vld [vmem:[#allocation9 + $0xd0] sm:$0xff]
    %v6135 = vld [vmem:[#allocation9 + $0xd8] sm:$0xff]
    %v6136 = vld [vmem:[#allocation9 + $0xe0] sm:$0xff]
    %v6137 = vld [vmem:[#allocation9 + $0xe8] sm:$0xff]
    %v6138 = vld [vmem:[#allocation9 + $0xf0] sm:$0xff]
    %v6139 = vld [vmem:[#allocation9 + $0xf8] sm:$0xff]
    %v6140 = vld [vmem:[#allocation9 + $0x100] sm:$0xff]
    %v6141 = vld [vmem:[#allocation9 + $0x108] sm:$0xff]
    %v6142 = vld [vmem:[#allocation9 + $0x110] sm:$0xff]
    %v6143 = vld [vmem:[#allocation9 + $0x118] sm:$0xff]
    %v6144 = vld [vmem:[#allocation9 + $0x120] sm:$0xff]
    %v6145 = vld [vmem:[#allocation9 + $0x128] sm:$0xff]
    %v6146 = vld [vmem:[#allocation9 + $0x130] sm:$0xff]
    %v6147 = vld [vmem:[#allocation9 + $0x138] sm:$0xff]
    %v6148 = vld [vmem:[#allocation9 + $0x140] sm:$0xff]
    %v6149 = vld [vmem:[#allocation9 + $0x148] sm:$0xff]
    %v6150 = vld [vmem:[#allocation9 + $0x150] sm:$0xff]
    %v6151 = vld [vmem:[#allocation9 + $0x158] sm:$0xff]
    %v6152 = vld [vmem:[#allocation9 + $0x160] sm:$0xff]
    %v6153 = vld [vmem:[#allocation9 + $0x168] sm:$0xff]
    %v6154 = vld [vmem:[#allocation9 + $0x170] sm:$0xff]
    %v6155 = vld [vmem:[#allocation9 + $0x178] sm:$0xff]
    %v6156 = vld [vmem:[#allocation9 + $0x180] sm:$0xff]
    %v6157 = vld [vmem:[#allocation9 + $0x188] sm:$0xff]
    %v6158 = vld [vmem:[#allocation9 + $0x190] sm:$0xff]
    %v6159 = vld [vmem:[#allocation9 + $0x198] sm:$0xff]
    %v6160 = vld [vmem:[#allocation9 + $0x1a0] sm:$0xff]
    %v6161 = vld [vmem:[#allocation9 + $0x1a8] sm:$0xff]
    %v6162 = vld [vmem:[#allocation9 + $0x1b0] sm:$0xff]
    %v6163 = vld [vmem:[#allocation9 + $0x1b8] sm:$0xff]
    %v6164 = vld [vmem:[#allocation9 + $0x1c0] sm:$0xff]
    %v6165 = vld [vmem:[#allocation9 + $0x1c8] sm:$0xff]
    %v6166 = vld [vmem:[#allocation9 + $0x1d0] sm:$0xff]
    %v6167 = vld [vmem:[#allocation9 + $0x1d8] sm:$0xff]
    %v6168 = vld [vmem:[#allocation9 + $0x1e0] sm:$0xff]
    %v6169 = vld [vmem:[#allocation9 + $0x1e8] sm:$0xff]
    %v6170 = vld [vmem:[#allocation9 + $0x1f0] sm:$0xff]
    %v6171 = vld [vmem:[#allocation9 + $0x1f8] sm:$0xff]
    %v6172 = vld [vmem:[#allocation10] sm:$0x3]
    %v6174 = vperm.slane %v6172, 0
    %v6175 = vperm.slane %v6172, 1
    %v6242 = vunpack.c.l.b16 %v6108
    %v6243 = vunpack.c.h.b16 %v6108
    %v6244 = vunpack.c.l.b16 %v6109
    %v6245 = vunpack.c.h.b16 %v6109
    %v6246 = vunpack.c.l.b16 %v6110
    %v6247 = vunpack.c.h.b16 %v6110
    %v6248 = vunpack.c.l.b16 %v6111
    %v6249 = vunpack.c.h.b16 %v6111
    %v6250 = vunpack.c.l.b16 %v6112
    %v6251 = vunpack.c.h.b16 %v6112
    %v6252 = vunpack.c.l.b16 %v6113
    %v6253 = vunpack.c.h.b16 %v6113
    %v6254 = vunpack.c.l.b16 %v6114
    %v6255 = vunpack.c.h.b16 %v6114
    %v6256 = vunpack.c.l.b16 %v6115
    %v6257 = vunpack.c.h.b16 %v6115
    %v6258 = vunpack.c.l.b16 %v6116
    %v6259 = vunpack.c.h.b16 %v6116
    %v6260 = vunpack.c.l.b16 %v6117
    %v6261 = vunpack.c.h.b16 %v6117
    %v6262 = vunpack.c.l.b16 %v6118
    %v6263 = vunpack.c.h.b16 %v6118
    %v6264 = vunpack.c.l.b16 %v6119
    %v6265 = vunpack.c.h.b16 %v6119
    %v6266 = vunpack.c.l.b16 %v6120
    %v6267 = vunpack.c.h.b16 %v6120
    %v6268 = vunpack.c.l.b16 %v6121
    %v6269 = vunpack.c.h.b16 %v6121
    %v6270 = vunpack.c.l.b16 %v6122
    %v6271 = vunpack.c.h.b16 %v6122
    %v6272 = vunpack.c.l.b16 %v6123
    %v6273 = vunpack.c.h.b16 %v6123
    %v6274 = vunpack.c.l.b16 %v6124
    %v6275 = vunpack.c.h.b16 %v6124
    %v6276 = vunpack.c.l.b16 %v6125
    %v6277 = vunpack.c.h.b16 %v6125
    %v6278 = vunpack.c.l.b16 %v6126
    %v6279 = vunpack.c.h.b16 %v6126
    %v6280 = vunpack.c.l.b16 %v6127
    %v6281 = vunpack.c.h.b16 %v6127
    %v6282 = vunpack.c.l.b16 %v6128
    %v6283 = vunpack.c.h.b16 %v6128
    %v6284 = vunpack.c.l.b16 %v6129
    %v6285 = vunpack.c.h.b16 %v6129
    %v6286 = vunpack.c.l.b16 %v6130
    %v6287 = vunpack.c.h.b16 %v6130
    %v6288 = vunpack.c.l.b16 %v6131
    %v6289 = vunpack.c.h.b16 %v6131
    %v6290 = vunpack.c.l.b16 %v6132
    %v6291 = vunpack.c.h.b16 %v6132
    %v6292 = vunpack.c.l.b16 %v6133
    %v6293 = vunpack.c.h.b16 %v6133
    %v6294 = vunpack.c.l.b16 %v6134
    %v6295 = vunpack.c.h.b16 %v6134
    %v6296 = vunpack.c.l.b16 %v6135
    %v6297 = vunpack.c.h.b16 %v6135
    %v6298 = vunpack.c.l.b16 %v6136
    %v6299 = vunpack.c.h.b16 %v6136
    %v6300 = vunpack.c.l.b16 %v6137
    %v6301 = vunpack.c.h.b16 %v6137
    %v6302 = vunpack.c.l.b16 %v6138
    %v6303 = vunpack.c.h.b16 %v6138
    %v6304 = vunpack.c.l.b16 %v6139
    %v6305 = vunpack.c.h.b16 %v6139
    %v6306 = vunpack.c.l.b16 %v6140
    %v6307 = vunpack.c.h.b16 %v6140
    %v6308 = vunpack.c.l.b16 %v6141
    %v6309 = vunpack.c.h.b16 %v6141
    %v6310 = vunpack.c.l.b16 %v6142
    %v6311 = vunpack.c.h.b16 %v6142
    %v6312 = vunpack.c.l.b16 %v6143
    %v6313 = vunpack.c.h.b16 %v6143
    %v6314 = vunpack.c.l.b16 %v6144
    %v6315 = vunpack.c.h.b16 %v6144
    %v6316 = vunpack.c.l.b16 %v6145
    %v6317 = vunpack.c.h.b16 %v6145
    %v6318 = vunpack.c.l.b16 %v6146
    %v6319 = vunpack.c.h.b16 %v6146
    %v6320 = vunpack.c.l.b16 %v6147
    %v6321 = vunpack.c.h.b16 %v6147
    %v6322 = vunpack.c.l.b16 %v6148
    %v6323 = vunpack.c.h.b16 %v6148
    %v6324 = vunpack.c.l.b16 %v6149
    %v6325 = vunpack.c.h.b16 %v6149
    %v6326 = vunpack.c.l.b16 %v6150
    %v6327 = vunpack.c.h.b16 %v6150
    %v6328 = vunpack.c.l.b16 %v6151
    %v6329 = vunpack.c.h.b16 %v6151
    %v6330 = vunpack.c.l.b16 %v6152
    %v6331 = vunpack.c.h.b16 %v6152
    %v6332 = vunpack.c.l.b16 %v6153
    %v6333 = vunpack.c.h.b16 %v6153
    %v6334 = vunpack.c.l.b16 %v6154
    %v6335 = vunpack.c.h.b16 %v6154
    %v6336 = vunpack.c.l.b16 %v6155
    %v6337 = vunpack.c.h.b16 %v6155
    %v6338 = vunpack.c.l.b16 %v6156
    %v6339 = vunpack.c.h.b16 %v6156
    %v6340 = vunpack.c.l.b16 %v6157
    %v6341 = vunpack.c.h.b16 %v6157
    %v6342 = vunpack.c.l.b16 %v6158
    %v6343 = vunpack.c.h.b16 %v6158
    %v6344 = vunpack.c.l.b16 %v6159
    %v6345 = vunpack.c.h.b16 %v6159
    %v6346 = vunpack.c.l.b16 %v6160
    %v6347 = vunpack.c.h.b16 %v6160
    %v6348 = vunpack.c.l.b16 %v6161
    %v6349 = vunpack.c.h.b16 %v6161
    %v6350 = vunpack.c.l.b16 %v6162
    %v6351 = vunpack.c.h.b16 %v6162
    %v6352 = vunpack.c.l.b16 %v6163
    %v6353 = vunpack.c.h.b16 %v6163
    %v6354 = vunpack.c.l.b16 %v6164
    %v6355 = vunpack.c.h.b16 %v6164
    %v6356 = vunpack.c.l.b16 %v6165
    %v6357 = vunpack.c.h.b16 %v6165
    %v6358 = vunpack.c.l.b16 %v6166
    %v6359 = vunpack.c.h.b16 %v6166
    %v6360 = vunpack.c.l.b16 %v6167
    %v6361 = vunpack.c.h.b16 %v6167
    %v6362 = vunpack.c.l.b16 %v6168
    %v6363 = vunpack.c.h.b16 %v6168
    %v6364 = vunpack.c.l.b16 %v6169
    %v6365 = vunpack.c.h.b16 %v6169
    %v6366 = vunpack.c.l.b16 %v6170
    %v6367 = vunpack.c.h.b16 %v6170
    %v6368 = vunpack.c.l.b16 %v6171
    %v6369 = vunpack.c.h.b16 %v6171
    %v6370 = vpack.c.b16 %v6244, %v6242
    %v6371 = vpack.c.b16 %v6245, %v6243
    %v6372 = vpack.c.b16 %v6248, %v6246
    %v6373 = vpack.c.b16 %v6249, %v6247
    %v6374 = vpack.c.b16 %v6252, %v6250
    %v6375 = vpack.c.b16 %v6253, %v6251
    %v6376 = vpack.c.b16 %v6256, %v6254
    %v6377 = vpack.c.b16 %v6257, %v6255
    %v6378 = vpack.c.b16 %v6260, %v6258
    %v6379 = vpack.c.b16 %v6261, %v6259
    %v6380 = vpack.c.b16 %v6264, %v6262
    %v6381 = vpack.c.b16 %v6265, %v6263
    %v6382 = vpack.c.b16 %v6268, %v6266
    %v6383 = vpack.c.b16 %v6269, %v6267
    %v6384 = vpack.c.b16 %v6272, %v6270
    %v6385 = vpack.c.b16 %v6273, %v6271
    %v6386 = vpack.c.b16 %v6276, %v6274
    %v6387 = vpack.c.b16 %v6277, %v6275
    %v6388 = vpack.c.b16 %v6280, %v6278
    %v6389 = vpack.c.b16 %v6281, %v6279
    %v6390 = vpack.c.b16 %v6284, %v6282
    %v6391 = vpack.c.b16 %v6285, %v6283
    %v6392 = vpack.c.b16 %v6288, %v6286
    %v6393 = vpack.c.b16 %v6289, %v6287
    %v6394 = vpack.c.b16 %v6292, %v6290
    %v6395 = vpack.c.b16 %v6293, %v6291
    %v6396 = vpack.c.b16 %v6296, %v6294
    %v6397 = vpack.c.b16 %v6297, %v6295
    %v6398 = vpack.c.b16 %v6300, %v6298
    %v6399 = vpack.c.b16 %v6301, %v6299
    %v6400 = vpack.c.b16 %v6304, %v6302
    %v6401 = vpack.c.b16 %v6305, %v6303
    %v6402 = vpack.c.b16 %v6308, %v6306
    %v6403 = vpack.c.b16 %v6309, %v6307
    %v6404 = vpack.c.b16 %v6312, %v6310
    %v6405 = vpack.c.b16 %v6313, %v6311
    %v6406 = vpack.c.b16 %v6316, %v6314
    %v6407 = vpack.c.b16 %v6317, %v6315
    %v6408 = vpack.c.b16 %v6320, %v6318
    %v6409 = vpack.c.b16 %v6321, %v6319
    %v6410 = vpack.c.b16 %v6324, %v6322
    %v6411 = vpack.c.b16 %v6325, %v6323
    %v6412 = vpack.c.b16 %v6328, %v6326
    %v6413 = vpack.c.b16 %v6329, %v6327
    %v6414 = vpack.c.b16 %v6332, %v6330
    %v6415 = vpack.c.b16 %v6333, %v6331
    %v6416 = vpack.c.b16 %v6336, %v6334
    %v6417 = vpack.c.b16 %v6337, %v6335
    %v6418 = vpack.c.b16 %v6340, %v6338
    %v6419 = vpack.c.b16 %v6341, %v6339
    %v6420 = vpack.c.b16 %v6344, %v6342
    %v6421 = vpack.c.b16 %v6345, %v6343
    %v6422 = vpack.c.b16 %v6348, %v6346
    %v6423 = vpack.c.b16 %v6349, %v6347
    %v6424 = vpack.c.b16 %v6352, %v6350
    %v6425 = vpack.c.b16 %v6353, %v6351
    %v6426 = vpack.c.b16 %v6356, %v6354
    %v6427 = vpack.c.b16 %v6357, %v6355
    %v6428 = vpack.c.b16 %v6360, %v6358
    %v6429 = vpack.c.b16 %v6361, %v6359
    %v6430 = vpack.c.b16 %v6364, %v6362
    %v6431 = vpack.c.b16 %v6365, %v6363
    %v6432 = vpack.c.b16 %v6368, %v6366
    %v6433 = vpack.c.b16 %v6369, %v6367
    %6498 = vmatpush.bf16.msra.mxu0 %v6384
    %6499 = vmatpush.bf16.msra.mxu0 %v6382
    %6500 = vmatpush.bf16.msra.mxu0 %v6380
    %6501 = vmatpush.bf16.msra.mxu0 %v6378
    %6502 = vmatpush.bf16.msra.mxu0 %v6376
    %6503 = vmatpush.bf16.msra.mxu0 %v6374
    %6504 = vmatpush.bf16.msra.mxu0 %v6372
    %6505 = vmatpush.bf16.msra.mxu0 %v6370
    %6506 = vmatmul.bf16.gmra.mxu0 %v6104
    %v6507 = vpop.f32.mrf.mxu0
    %v6508 = vadd.f32 %v6174, %v6507
    %v6509 = vpop.f32.mrf.mxu0
    %6510 = vdwg.mxu0
    %6511 = vmatpush.bf16.msra.mxu0 %v6400
    %6512 = vmatpush.bf16.msra.mxu0 %v6398
    %6513 = vmatpush.bf16.msra.mxu0 %v6396
    %6514 = vmatpush.bf16.msra.mxu0 %v6394
    %6515 = vmatpush.bf16.msra.mxu0 %v6392
    %6516 = vmatpush.bf16.msra.mxu0 %v6390
    %6517 = vmatpush.bf16.msra.mxu0 %v6388
    %6518 = vmatpush.bf16.msra.mxu0 %v6386
    %6519 = vmatmul.bf16.gmra.mxu0 %v6105
    %v6520 = vpop.f32.mrf.mxu0
    %v6521 = vadd.f32 %v6508, %v6520
    %v6522 = vpop.f32.mrf.mxu0
    %6523 = vdwg.mxu0
    %6524 = vmatpush.bf16.msra.mxu0 %v6416
    %6525 = vmatpush.bf16.msra.mxu0 %v6414
    %6526 = vmatpush.bf16.msra.mxu0 %v6412
    %6527 = vmatpush.bf16.msra.mxu0 %v6410
    %6528 = vmatpush.bf16.msra.mxu0 %v6408
    %6529 = vmatpush.bf16.msra.mxu0 %v6406
    %6530 = vmatpush.bf16.msra.mxu0 %v6404
    %6531 = vmatpush.bf16.msra.mxu0 %v6402
    %6532 = vmatmul.bf16.gmra.mxu0 %v6106
    %v6533 = vpop.f32.mrf.mxu0
    %v6534 = vadd.f32 %v6521, %v6533
    %v6535 = vpop.f32.mrf.mxu0
    %6536 = vdwg.mxu0
    %6537 = vmatpush.bf16.msra.mxu0 %v6432
    %6538 = vmatpush.bf16.msra.mxu0 %v6430
    %6539 = vmatpush.bf16.msra.mxu0 %v6428
    %6540 = vmatpush.bf16.msra.mxu0 %v6426
    %6541 = vmatpush.bf16.msra.mxu0 %v6424
    %6542 = vmatpush.bf16.msra.mxu0 %v6422
    %6543 = vmatpush.bf16.msra.mxu0 %v6420
    %6544 = vmatpush.bf16.msra.mxu0 %v6418
    %6545 = vmatmul.bf16.gmra.mxu0 %v6107
    %v6546 = vpop.f32.mrf.mxu0
    %v6547 = vadd.f32 %v6534, %v6546
    %v6548 = vpop.f32.mrf.mxu0
    %6549 = vdwg.mxu0
    %6550 = vmatpush.bf16.msra.mxu0 %v6385
    %6551 = vmatpush.bf16.msra.mxu0 %v6383
    %6552 = vmatpush.bf16.msra.mxu0 %v6381
    %6553 = vmatpush.bf16.msra.mxu0 %v6379
    %6554 = vmatpush.bf16.msra.mxu0 %v6377
    %6555 = vmatpush.bf16.msra.mxu0 %v6375
    %6556 = vmatpush.bf16.msra.mxu0 %v6373
    %6557 = vmatpush.bf16.msra.mxu0 %v6371
    %6558 = vmatmul.bf16.gmra.mxu0 %v6104
    %v6559 = vpop.f32.mrf.mxu0
    %v6560 = vadd.f32 %v6175, %v6559
    %v6561 = vpop.f32.mrf.mxu0
    %6562 = vdwg.mxu0
    %6563 = vmatpush.bf16.msra.mxu0 %v6401
    %6564 = vmatpush.bf16.msra.mxu0 %v6399
    %6565 = vmatpush.bf16.msra.mxu0 %v6397
    %6566 = vmatpush.bf16.msra.mxu0 %v6395
    %6567 = vmatpush.bf16.msra.mxu0 %v6393
    %6568 = vmatpush.bf16.msra.mxu0 %v6391
    %6569 = vmatpush.bf16.msra.mxu0 %v6389
    %6570 = vmatpush.bf16.msra.mxu0 %v6387
    %6571 = vmatmul.bf16.gmra.mxu0 %v6105
    %v6572 = vpop.f32.mrf.mxu0
    %v6573 = vadd.f32 %v6560, %v6572
    %v6574 = vpop.f32.mrf.mxu0
    %6575 = vdwg.mxu0
    %6576 = vmatpush.bf16.msra.mxu0 %v6417
    %6577 = vmatpush.bf16.msra.mxu0 %v6415
    %6578 = vmatpush.bf16.msra.mxu0 %v6413
    %6579 = vmatpush.bf16.msra.mxu0 %v6411
    %6580 = vmatpush.bf16.msra.mxu0 %v6409
    %6581 = vmatpush.bf16.msra.mxu0 %v6407
    %6582 = vmatpush.bf16.msra.mxu0 %v6405
    %6583 = vmatpush.bf16.msra.mxu0 %v6403
    %6584 = vmatmul.bf16.gmra.mxu0 %v6106
    %v6585 = vpop.f32.mrf.mxu0
    %v6586 = vadd.f32 %v6573, %v6585
    %v6587 = vpop.f32.mrf.mxu0
    %6588 = vdwg.mxu0
    %6589 = vmatpush.bf16.msra.mxu0 %v6433
    %6590 = vmatpush.bf16.msra.mxu0 %v6431
    %6591 = vmatpush.bf16.msra.mxu0 %v6429
    %6592 = vmatpush.bf16.msra.mxu0 %v6427
    %6593 = vmatpush.bf16.msra.mxu0 %v6425
    %6594 = vmatpush.bf16.msra.mxu0 %v6423
    %6595 = vmatpush.bf16.msra.mxu0 %v6421
    %6596 = vmatpush.bf16.msra.mxu0 %v6419
    %6597 = vmatmul.bf16.gmra.mxu0 %v6107
    %v6598 = vpop.f32.mrf.mxu0
    %v6599 = vadd.f32 %v6586, %v6598
    %v6600 = vpop.f32.mrf.mxu0
    %6601 = vdwg.mxu0
    %v6602 = vmax.f32 %v6547, 0.0
    %v6603 = vmax.f32 %v6599, 0.0
    %v6604 = vpack.c.bf16 %v6602, %v6602
    %v6605 = vpack.c.bf16 %v6603, %v6603
    %v6606 = vld [vmem:[%s7] sm:$0xff]
    %v6607 = vld [vmem:[%s7 + $0x8] sm:$0xff]
    %v6608 = vld [vmem:[%s7 + $0x10] sm:$0xff]
    %v6609 = vld [vmem:[%s7 + $0x18] sm:$0xff]
    %v6610 = vld [vmem:[%s7 + $0x20] sm:$0xff]
    %v6611 = vld [vmem:[%s7 + $0x28] sm:$0xff]
    %v6612 = vld [vmem:[%s7 + $0x30] sm:$0xff]
    %v6613 = vld [vmem:[%s7 + $0x38] sm:$0xff]
    %v6614 = vld [vmem:[%s7 + $0x40] sm:$0xff]
    %v6615 = vld [vmem:[%s7 + $0x48] sm:$0xff]
    %v6616 = vld [vmem:[%s7 + $0x50] sm:$0xff]
    %v6617 = vld [vmem:[%s7 + $0x58] sm:$0xff]
    %v6618 = vld [vmem:[%s7 + $0x60] sm:$0xff]
    %v6619 = vld [vmem:[%s7 + $0x68] sm:$0xff]
    %v6620 = vld [vmem:[%s7 + $0x70] sm:$0xff]
    %v6621 = vld [vmem:[%s7 + $0x78] sm:$0xff]
    %v6622 = vld [vmem:[%s7 + $0x80] sm:$0xff]
    %v6623 = vld [vmem:[%s7 + $0x88] sm:$0xff]
    %v6624 = vld [vmem:[%s7 + $0x90] sm:$0xff]
    %v6625 = vld [vmem:[%s7 + $0x98] sm:$0xff]
    %v6626 = vld [vmem:[%s7 + $0xa0] sm:$0xff]
    %v6627 = vld [vmem:[%s7 + $0xa8] sm:$0xff]
    %v6628 = vld [vmem:[%s7 + $0xb0] sm:$0xff]
    %v6629 = vld [vmem:[%s7 + $0xb8] sm:$0xff]
    %v6630 = vld [vmem:[%s7 + $0xc0] sm:$0xff]
    %v6631 = vld [vmem:[%s7 + $0xc8] sm:$0xff]
    %v6632 = vld [vmem:[%s7 + $0xd0] sm:$0xff]
    %v6633 = vld [vmem:[%s7 + $0xd8] sm:$0xff]
    %v6634 = vld [vmem:[%s7 + $0xe0] sm:$0xff]
    %v6635 = vld [vmem:[%s7 + $0xe8] sm:$0xff]
    %v6636 = vld [vmem:[%s7 + $0xf0] sm:$0xff]
    %v6637 = vld [vmem:[%s7 + $0xf8] sm:$0xff]
    %v6638 = vld [vmem:[#allocation12] sm:$0x3]
    %v6640 = vperm.slane %v6638, 0
    %v6641 = vperm.slane %v6638, 1
    %v6676 = vunpack.c.l.b16 %v6606
    %v6677 = vunpack.c.h.b16 %v6606
    %v6678 = vunpack.c.l.b16 %v6607
    %v6679 = vunpack.c.h.b16 %v6607
    %v6680 = vunpack.c.l.b16 %v6608
    %v6681 = vunpack.c.h.b16 %v6608
    %v6682 = vunpack.c.l.b16 %v6609
    %v6683 = vunpack.c.h.b16 %v6609
    %v6684 = vunpack.c.l.b16 %v6610
    %v6685 = vunpack.c.h.b16 %v6610
    %v6686 = vunpack.c.l.b16 %v6611
    %v6687 = vunpack.c.h.b16 %v6611
    %v6688 = vunpack.c.l.b16 %v6612
    %v6689 = vunpack.c.h.b16 %v6612
    %v6690 = vunpack.c.l.b16 %v6613
    %v6691 = vunpack.c.h.b16 %v6613
    %v6692 = vunpack.c.l.b16 %v6614
    %v6693 = vunpack.c.h.b16 %v6614
    %v6694 = vunpack.c.l.b16 %v6615
    %v6695 = vunpack.c.h.b16 %v6615
    %v6696 = vunpack.c.l.b16 %v6616
    %v6697 = vunpack.c.h.b16 %v6616
    %v6698 = vunpack.c.l.b16 %v6617
    %v6699 = vunpack.c.h.b16 %v6617
    %v6700 = vunpack.c.l.b16 %v6618
    %v6701 = vunpack.c.h.b16 %v6618
    %v6702 = vunpack.c.l.b16 %v6619
    %v6703 = vunpack.c.h.b16 %v6619
    %v6704 = vunpack.c.l.b16 %v6620
    %v6705 = vunpack.c.h.b16 %v6620
    %v6706 = vunpack.c.l.b16 %v6621
    %v6707 = vunpack.c.h.b16 %v6621
    %v6708 = vunpack.c.l.b16 %v6622
    %v6709 = vunpack.c.h.b16 %v6622
    %v6710 = vunpack.c.l.b16 %v6623
    %v6711 = vunpack.c.h.b16 %v6623
    %v6712 = vunpack.c.l.b16 %v6624
    %v6713 = vunpack.c.h.b16 %v6624
    %v6714 = vunpack.c.l.b16 %v6625
    %v6715 = vunpack.c.h.b16 %v6625
    %v6716 = vunpack.c.l.b16 %v6626
    %v6717 = vunpack.c.h.b16 %v6626
    %v6718 = vunpack.c.l.b16 %v6627
    %v6719 = vunpack.c.h.b16 %v6627
    %v6720 = vunpack.c.l.b16 %v6628
    %v6721 = vunpack.c.h.b16 %v6628
    %v6722 = vunpack.c.l.b16 %v6629
    %v6723 = vunpack.c.h.b16 %v6629
    %v6724 = vunpack.c.l.b16 %v6630
    %v6725 = vunpack.c.h.b16 %v6630
    %v6726 = vunpack.c.l.b16 %v6631
    %v6727 = vunpack.c.h.b16 %v6631
    %v6728 = vunpack.c.l.b16 %v6632
    %v6729 = vunpack.c.h.b16 %v6632
    %v6730 = vunpack.c.l.b16 %v6633
    %v6731 = vunpack.c.h.b16 %v6633
    %v6732 = vunpack.c.l.b16 %v6634
    %v6733 = vunpack.c.h.b16 %v6634
    %v6734 = vunpack.c.l.b16 %v6635
    %v6735 = vunpack.c.h.b16 %v6635
    %v6736 = vunpack.c.l.b16 %v6636
    %v6737 = vunpack.c.h.b16 %v6636
    %v6738 = vunpack.c.l.b16 %v6637
    %v6739 = vunpack.c.h.b16 %v6637
    %v6740 = vpack.c.b16 %v6678, %v6676
    %v6741 = vpack.c.b16 %v6679, %v6677
    %v6742 = vpack.c.b16 %v6682, %v6680
    %v6743 = vpack.c.b16 %v6683, %v6681
    %v6744 = vpack.c.b16 %v6686, %v6684
    %v6745 = vpack.c.b16 %v6687, %v6685
    %v6746 = vpack.c.b16 %v6690, %v6688
    %v6747 = vpack.c.b16 %v6691, %v6689
    %v6748 = vpack.c.b16 %v6694, %v6692
    %v6749 = vpack.c.b16 %v6695, %v6693
    %v6750 = vpack.c.b16 %v6698, %v6696
    %v6751 = vpack.c.b16 %v6699, %v6697
    %v6752 = vpack.c.b16 %v6702, %v6700
    %v6753 = vpack.c.b16 %v6703, %v6701
    %v6754 = vpack.c.b16 %v6706, %v6704
    %v6755 = vpack.c.b16 %v6707, %v6705
    %v6756 = vpack.c.b16 %v6710, %v6708
    %v6757 = vpack.c.b16 %v6711, %v6709
    %v6758 = vpack.c.b16 %v6714, %v6712
    %v6759 = vpack.c.b16 %v6715, %v6713
    %v6760 = vpack.c.b16 %v6718, %v6716
    %v6761 = vpack.c.b16 %v6719, %v6717
    %v6762 = vpack.c.b16 %v6722, %v6720
    %v6763 = vpack.c.b16 %v6723, %v6721
    %v6764 = vpack.c.b16 %v6726, %v6724
    %v6765 = vpack.c.b16 %v6727, %v6725
    %v6766 = vpack.c.b16 %v6730, %v6728
    %v6767 = vpack.c.b16 %v6731, %v6729
    %v6768 = vpack.c.b16 %v6734, %v6732
    %v6769 = vpack.c.b16 %v6735, %v6733
    %v6770 = vpack.c.b16 %v6738, %v6736
    %v6771 = vpack.c.b16 %v6739, %v6737
    %6804 = vmatpush.bf16.msra.mxu0 %v6754
    %6805 = vmatpush.bf16.msra.mxu0 %v6752
    %6806 = vmatpush.bf16.msra.mxu0 %v6750
    %6807 = vmatpush.bf16.msra.mxu0 %v6748
    %6808 = vmatpush.bf16.msra.mxu0 %v6746
    %6809 = vmatpush.bf16.msra.mxu0 %v6744
    %6810 = vmatpush.bf16.msra.mxu0 %v6742
    %6811 = vmatpush.bf16.msra.mxu0 %v6740
    %6812 = vmatmul.bf16.gmra.mxu0 %v6604
    %v6813 = vpop.f32.mrf.mxu0
    %v6814 = vadd.f32 %v6640, %v6813
    %v6815 = vpop.f32.mrf.mxu0
    %6816 = vdwg.mxu0
    %6817 = vmatpush.bf16.msra.mxu0 %v6770
    %6818 = vmatpush.bf16.msra.mxu0 %v6768
    %6819 = vmatpush.bf16.msra.mxu0 %v6766
    %6820 = vmatpush.bf16.msra.mxu0 %v6764
    %6821 = vmatpush.bf16.msra.mxu0 %v6762
    %6822 = vmatpush.bf16.msra.mxu0 %v6760
    %6823 = vmatpush.bf16.msra.mxu0 %v6758
    %6824 = vmatpush.bf16.msra.mxu0 %v6756
    %6825 = vmatmul.bf16.gmra.mxu0 %v6605
    %v6826 = vpop.f32.mrf.mxu0
    %v6827 = vadd.f32 %v6814, %v6826
    %v6828 = vpop.f32.mrf.mxu0
    %6829 = vdwg.mxu0
    %6830 = vmatpush.bf16.msra.mxu0 %v6755
    %6831 = vmatpush.bf16.msra.mxu0 %v6753
    %6832 = vmatpush.bf16.msra.mxu0 %v6751
    %6833 = vmatpush.bf16.msra.mxu0 %v6749
    %6834 = vmatpush.bf16.msra.mxu0 %v6747
    %6835 = vmatpush.bf16.msra.mxu0 %v6745
    %6836 = vmatpush.bf16.msra.mxu0 %v6743
    %6837 = vmatpush.bf16.msra.mxu0 %v6741
    %6838 = vmatmul.bf16.gmra.mxu0 %v6604
    %v6839 = vpop.f32.mrf.mxu0
    %v6840 = vadd.f32 %v6641, %v6839
    %v6841 = vpop.f32.mrf.mxu0
    %6842 = vdwg.mxu0
    %6843 = vmatpush.bf16.msra.mxu0 %v6771
    %6844 = vmatpush.bf16.msra.mxu0 %v6769
    %6845 = vmatpush.bf16.msra.mxu0 %v6767
    %6846 = vmatpush.bf16.msra.mxu0 %v6765
    %6847 = vmatpush.bf16.msra.mxu0 %v6763
    %6848 = vmatpush.bf16.msra.mxu0 %v6761
    %6849 = vmatpush.bf16.msra.mxu0 %v6759
    %6850 = vmatpush.bf16.msra.mxu0 %v6757
    %6851 = vmatmul.bf16.gmra.mxu0 %v6605
    %v6852 = vpop.f32.mrf.mxu0
    %v6853 = vadd.f32 %v6840, %v6852
    %v6854 = vpop.f32.mrf.mxu0
    %6855 = vdwg.mxu0
    %v6856 = vmax.f32 %v6827, 0.0
    %v6857 = vmax.f32 %v6853, 0.0
    %v6858 = vpack.c.bf16 %v6856, %v6856
    %v6859 = vpack.c.bf16 %v6857, %v6857
    %v6860 = vld [vmem:[#allocation13] sm:$0xf]
    %v6861 = vld [vmem:[#allocation13 + $0x4] sm:$0xf]
    %v6862 = vld [vmem:[#allocation13 + $0x8] sm:$0xf]
    %v6863 = vld [vmem:[#allocation13 + $0xc] sm:$0xf]
    %v6864 = vld [vmem:[#allocation13 + $0x10] sm:$0xf]
    %v6865 = vld [vmem:[#allocation13 + $0x14] sm:$0xf]
    %v6866 = vld [vmem:[#allocation13 + $0x18] sm:$0xf]
    %v6867 = vld [vmem:[#allocation13 + $0x1c] sm:$0xf]
    %v6868 = vld [vmem:[#allocation13 + $0x20] sm:$0xf]
    %v6869 = vld [vmem:[#allocation13 + $0x24] sm:$0xf]
    %v6870 = vld [vmem:[#allocation13 + $0x28] sm:$0xf]
    %v6871 = vld [vmem:[#allocation13 + $0x2c] sm:$0xf]
    %v6872 = vld [vmem:[#allocation13 + $0x30] sm:$0xf]
    %v6873 = vld [vmem:[#allocation13 + $0x34] sm:$0xf]
    %v6874 = vld [vmem:[#allocation13 + $0x38] sm:$0xf]
    %v6875 = vld [vmem:[#allocation13 + $0x3c] sm:$0xf]
    %v6876 = vld [vmem:[#allocation13 + $0x40] sm:$0xf]
    %v6877 = vld [vmem:[#allocation13 + $0x44] sm:$0xf]
    %v6878 = vld [vmem:[#allocation13 + $0x48] sm:$0xf]
    %v6879 = vld [vmem:[#allocation13 + $0x4c] sm:$0xf]
    %v6880 = vld [vmem:[#allocation13 + $0x50] sm:$0xf]
    %v6881 = vld [vmem:[#allocation13 + $0x54] sm:$0xf]
    %v6882 = vld [vmem:[#allocation13 + $0x58] sm:$0xf]
    %v6883 = vld [vmem:[#allocation13 + $0x5c] sm:$0xf]
    %v6884 = vld [vmem:[#allocation15] sm:$0x1]
    %v6886 = vperm.slane %v6884, 0
    %v6912 = vunpack.c.l.b16 %v6860
    %v6913 = vunpack.c.l.b16 %v6861
    %v6914 = vunpack.c.l.b16 %v6862
    %v6915 = vunpack.c.l.b16 %v6863
    %v6916 = vunpack.c.l.b16 %v6864
    %v6917 = vunpack.c.l.b16 %v6865
    %v6918 = vunpack.c.l.b16 %v6866
    %v6919 = vunpack.c.l.b16 %v6867
    %v6920 = vunpack.c.l.b16 %v6868
    %v6921 = vunpack.c.l.b16 %v6869
    %v6922 = vunpack.c.l.b16 %v6870
    %v6923 = vunpack.c.l.b16 %v6871
    %v6924 = vunpack.c.l.b16 %v6872
    %v6925 = vunpack.c.l.b16 %v6873
    %v6926 = vunpack.c.l.b16 %v6874
    %v6927 = vunpack.c.l.b16 %v6875
    %v6928 = vunpack.c.l.b16 %v6876
    %v6929 = vunpack.c.l.b16 %v6877
    %v6930 = vunpack.c.l.b16 %v6878
    %v6931 = vunpack.c.l.b16 %v6879
    %v6932 = vunpack.c.l.b16 %v6880
    %v6933 = vunpack.c.l.b16 %v6881
    %v6934 = vunpack.c.l.b16 %v6882
    %v6935 = vunpack.c.l.b16 %v6883
    %v6936 = vpack.c.b16 %v6913, %v6912
    %v6937 = vpack.c.b16 %v6915, %v6914
    %v6938 = vpack.c.b16 %v6917, %v6916
    %v6939 = vpack.c.b16 %v6919, %v6918
    %v6940 = vpack.c.b16 %v6921, %v6920
    %v6941 = vpack.c.b16 %v6923, %v6922
    %v6942 = vpack.c.b16 %v6925, %v6924
    %v6943 = vpack.c.b16 %v6927, %v6926
    %v6944 = vpack.c.b16 %v6929, %v6928
    %v6945 = vpack.c.b16 %v6931, %v6930
    %v6946 = vpack.c.b16 %v6933, %v6932
    %v6947 = vpack.c.b16 %v6935, %v6934
    %vm6960 = vcmask 523264
    %v6962 = vsel %vm6960, %v6859, 0
    %6964 = vmatpush.bf16.msra.mxu0 %v6943
    %6965 = vmatpush.bf16.msra.mxu0 %v6942
    %6966 = vmatpush.bf16.msra.mxu0 %v6941
    %6967 = vmatpush.bf16.msra.mxu0 %v6940
    %6968 = vmatpush.bf16.msra.mxu0 %v6939
    %6969 = vmatpush.bf16.msra.mxu0 %v6938
    %6970 = vmatpush.bf16.msra.mxu0 %v6937
    %6971 = vmatpush.bf16.msra.mxu0 %v6936
    %6972 = vmatmul.bf16.gmra.mxu0 %v6858
    %v6973 = vpop.f32.mrf.mxu0
    %v6974 = vadd.f32 %v6886, %v6973
    %v6975 = vpop.f32.mrf.mxu0
    %6976 = vdwg.mxu0
    %6977 = vmatpush.bf16.msra.mxu0 0
    %6978 = vmatpush.bf16.msra.mxu0 0
    %6979 = vmatpush.bf16.msra.mxu0 0
    %6980 = vmatpush.bf16.msra.mxu0 0
    %6981 = vmatpush.bf16.msra.mxu0 %v6947
    %6982 = vmatpush.bf16.msra.mxu0 %v6946
    %6983 = vmatpush.bf16.msra.mxu0 %v6945
    %6984 = vmatpush.bf16.msra.mxu0 %v6944
    %6985 = vmatmul.bf16.gmra.mxu0 %v6962
    %v6986 = vpop.f32.mrf.mxu0
    %v6987 = vadd.f32 %v6974, %v6986
    %v6988 = vpop.f32.mrf.mxu0
    %6989 = vdwg.mxu0
    %v6990 = vlaneseq
    %v6991 = vand.u32 %v6990, 127
    %vm6992 = vcmp.eq.s32.totalorder %v6991, 6
    %v6993 = vxor.u32 %v6987, 2147483648
    %v6994 = vmul.f32 %v6993, 1.442695
    %v6995 = vpow.pop %v6994
    %v6996 = vadd.f32 %v6995, 1.0
    %v6997 = vrcp.pop %v6996
    %v6998 = vmul.f32 %v6996, %v6997
    %v6999 = vsub.f32 1.0, %v6998
    %v7000 = vmul.f32 %v6997, %v6999
    %v7001 = vadd.f32 %v6997, %v7000
    %vm7002 = vweird.f32 %v6996
    %vm7003 = vweird.f32 %v6997
    %vm7004 = vmor %vm7002, %vm7003
    %v7005 = vsel %vm7004, %v6997, %v7001
    %v7006 = vand.u32 2147483647, %v6996
    %vm7007 = vcmp.eq.f32.partialorder %v7006, 8.507059e+37
    %v7008 = vand.u32 %v6996, 2147483648
    %v7009 = vor.u32 1.1754944e-38, %v7008
    %v7010 = vsel %vm7007, %v7009, %v7005
    %v7011 = vmul.f32 1.0, %v7010
    %v7012 = vsel %vm6992, %v7011, %v6987
    %7013 = vst [vmem:[%s11] sm:$0x3] %v7012
    // Predicated region
    $region82: #{fwd.1} parent=1 // pred_check
      _
    $region83: #{fwd.1} parent=1 // pred_check_branch
      %7015 = sbr.rel (0) target = $region85
    $region84: #{fwd.1} parent=1 // pred_region
      _
    $region85: #{fwd.1} parent=1 // pred_fallthru
      _
    // Predicated region
    $region86: #{fwd.1} parent=1 // pred_check
      _
    $region87: #{fwd.1} parent=1 // pred_check_branch
      %7017 = sbr.rel (0) target = $region89
    $region88: #{fwd.1} parent=1 // pred_region
      _
    $region89: #{fwd.1} parent=1 // pred_fallthru
      _
    %7018 = vsyncpa [#allocation3], 1
    %7019 = vsyncpa [#allocation5], 1
    %7020 = vsyncpa [#allocation8], 1
    %7021 = vsyncpa [#allocation11], 1
    %7022 = vsyncpa [#allocation14], 1

</llo_original>
